<compile_context>
chip_gen: v6e
topology: v6e:2x2x1
jax: 0.10.0
libtpu: 0.0.40
codegen_flags: <defaults>
</compile_context>

<pallas_src>
import functools

import jax
import jax.numpy as jnp
import numpy as np
from jax import lax
from jax.experimental import pallas as pl
from jax.experimental.pallas import tpu as pltpu


def _round_up(n, m):
    return ((n + m - 1) // m) * m


def _gru_recurrence_kernel(
    gi0_ref,      # (T, B, 3*Hp) f32   precomputed layer-0 input-side gate preacts
    h0_ref,       # (2, B, Hp)   f32   initial hidden state (lane-padded)
    whh0_ref,     # (Hp, 3*Hp)   bf16  layer-0 recurrent weights, fused [r|z|n]
    bhh0n_ref,    # (1, Hp)      f32   layer-0 hidden-side n-gate bias
    wih1_ref,     # (Hp, 3*Hp)   bf16  layer-1 input weights, fused [r|z|n]
    b1_ref,       # (1, 3*Hp)    f32   layer-1 gate biases (r/z: ih+hh folded; n: ih)
    whh1_ref,     # (Hp, 3*Hp)   bf16  layer-1 recurrent weights, fused [r|z|n]
    bhh1n_ref,    # (1, Hp)      f32   layer-1 hidden-side n-gate bias
    wlin_ref,     # (Hp, Vp)     f32   output projection, (h @ W) layout
    blin_ref,     # (1, Vp)      f32
    logits_ref,   # (B, Vp)      f32   out
    hout_ref,     # (2, B, Hp)   f32   out
):
    T, B, _ = gi0_ref.shape
    Hp = hout_ref.shape[-1]
    f32 = jnp.float32
    cdt = whh0_ref.dtype  # bf16 compute dtype for MXU operands

    # Hoist weight loads and bias broadcasts out of the serial time loop
    # (JAX does not CSE broadcast_in_dim; re-broadcasting every unrolled step
    # would put 5*T extra VPU ops on the critical path).
    whh0 = whh0_ref[...]
    wih1 = wih1_ref[...]
    whh1 = whh1_ref[...]
    b1_b = jnp.broadcast_to(b1_ref[...], (B, 3 * Hp))
    bhh0n_b = jnp.broadcast_to(bhh0n_ref[...], (B, Hp))
    bhh1n_b = jnp.broadcast_to(bhh1n_ref[...], (B, Hp))

    def gru_gates(gi, gh, bhh_n, h_prev):
        # gi/gh: (B, 3*Hp) fused [r|z|n]; slices land on 128-aligned lanes.
        r = jax.nn.sigmoid(gi[:, :Hp] + gh[:, :Hp])
        z = jax.nn.sigmoid(gi[:, Hp:2 * Hp] + gh[:, Hp:2 * Hp])
        n = jnp.tanh(gi[:, 2 * Hp:] + r * (gh[:, 2 * Hp:] + bhh_n))
        return (1.0 - z) * n + z * h_prev

    def layer0(t, h_prev):
        gi = gi0_ref[t]                                   # one lane-dense load / step
        gh = jnp.dot(h_prev.astype(cdt), whh0, preferred_element_type=f32)
        return gru_gates(gi, gh, bhh0n_b, h_prev)

    def layer1(x, h_prev):
        gi = jnp.dot(x.astype(cdt), wih1, preferred_element_type=f32) + b1_b
        gh = jnp.dot(h_prev.astype(cdt), whh1, preferred_element_type=f32)
        return gru_gates(gi, gh, bhh1n_b, h_prev)

    h1_prev = h0_ref[1].astype(f32)

    # Software-pipeline the two GRU layers: layer 0 runs one timestep ahead of
    # layer 1, so the two matmul groups inside an iteration are independent.
    h0_cur = layer0(0, h0_ref[0].astype(f32))             # prologue: h0 after step 0

    def step(t, carry):
        h0_t, h1_tm1 = carry                              # h0[t], h1[t-1]
        h1_t = layer1(h0_t, h1_tm1)                       # layer 1 consumes step t
        h0_tp1 = layer0(t + 1, h0_t)                      # layer 0 works on step t+1
        return h0_tp1, h1_t

    unroll = True if T <= 16 else 8                       # cap unroll for long seqs
    h0_last, h1_pen = lax.fori_loop(0, T - 1, step, (h0_cur, h1_prev),
                                    unroll=unroll)
    h1_last = layer1(h0_last, h1_pen)                     # epilogue: last step, layer 1

    hout_ref[0] = h0_last.astype(hout_ref.dtype)
    hout_ref[1] = h1_last.astype(hout_ref.dtype)
    logits_ref[...] = (jnp.dot(h1_last, wlin_ref[...], preferred_element_type=f32)
                       + blin_ref[...]).astype(logits_ref.dtype)


def prepare_params(params, compute_dtype=jnp.bfloat16):
    """One-time, input-independent parameter repacking (pad/fuse/fold/cast).

    Keeping this out of the per-call path removes ~a dozen XLA pad/transpose
    ops from steady-state latency.
    """
    f32 = jnp.float32
    H = params["whh_l0"].shape[1]
    D = params["wih_l0"].shape[1]
    V = params["w_lin"].shape[0]
    Hp = _round_up(H, 128)
    Vp = _round_up(V, 128)

    def fuse_gates(w, pad_in):
        # torch (3H, in) -> (pad_in, 3*Hp) in (x @ W) layout, gates on lanes.
        w3 = jnp.transpose(w.astype(f32).reshape(3, H, -1), (2, 0, 1))  # (in, 3, H)
        n_in = w3.shape[0]
        w3 = jnp.pad(w3, ((0, pad_in - n_in), (0, 0), (0, Hp - H)))
        return w3.reshape(pad_in, 3 * Hp)

    def fold_bias(bih, bhh):
        # r/z: ih + hh folded; n: ih only (its hh bias stays inside r * (...)).
        b = bih.astype(f32) + jnp.concatenate(
            [bhh.astype(f32)[:2 * H], jnp.zeros((H,), f32)])
        return jnp.pad(b.reshape(3, H), ((0, 0), (0, Hp - H))).reshape(3 * Hp)

    prepped = {
        "embedding": params["embedding"].astype(f32),
        # layer-0 input projection runs in the wrapper (off the serial path),
        # keep it f32 there; recurrent / layer-1 weights go bf16 for the MXU.
        "wih0": fuse_gates(params["wih_l0"], D),
        "b0": fold_bias(params["bih_l0"], params["bhh_l0"]),
        "whh0": fuse_gates(params["whh_l0"], Hp).astype(compute_dtype),
        "bhh0_n": jnp.pad(params["bhh_l0"].astype(f32)[2 * H:],
                          (0, Hp - H)).reshape(1, Hp),
        "wih1": fuse_gates(params["wih_l1"], Hp).astype(compute_dtype),
        "b1": fold_bias(params["bih_l1"], params["bhh_l1"]).reshape(1, 3 * Hp),
        "whh1": fuse_gates(params["whh_l1"], Hp).astype(compute_dtype),
        "bhh1_n": jnp.pad(params["bhh_l1"].astype(f32)[2 * H:],
                          (0, Hp - H)).reshape(1, Hp),
        "w_lin": jnp.pad(params["w_lin"].astype(f32).T,
                         ((0, Hp - H), (0, Vp - V))),
        "b_lin": jnp.pad(params["b_lin"].astype(f32), (0, Vp - V)).reshape(1, Vp),
    }
    return prepped


def gru_melodies_forward(x_ids, input_features, prepped, h=None, *,
                         hidden_size, vocab_size):
    """x_ids: (B, T) int32, input_features: (B, T, F) f32.

    Returns (logits (B, V), h (2, B, H)) matching GRUMelodies.forward
    (dropout = identity, eval semantics).
    """
    f32 = jnp.float32
    H, V = hidden_size, vocab_size
    B, T = x_ids.shape
    Hp = prepped["whh0"].shape[0]
    Vp = prepped["w_lin"].shape[1]

    # Plain-JAX glue: embedding gather + feature concat (tiny, not worth a kernel).
    x_emb = jnp.take(prepped["embedding"], x_ids, axis=0)                    # (B, T, E)
    x_cat = jnp.concatenate([x_emb, input_features.astype(f32)], axis=-1)    # (B, T, D)

    # Non-recurrent layer-0 input projection hoisted off the serial path:
    # one batched matmul over all timesteps, gates fused on the lane axis.
    gi0 = jnp.einsum("btd,dg->btg", x_cat, prepped["wih0"]) + prepped["b0"]  # (B,T,3Hp)
    gi0 = gi0.transpose(1, 0, 2)                                             # (T,B,3Hp)

    if h is None:
        h0 = jnp.zeros((2, B, Hp), f32)
    else:
        h0 = jnp.pad(h.astype(f32), ((0, 0), (0, 0), (0, Hp - H)))

    args = (gi0, h0, prepped["whh0"], prepped["bhh0_n"], prepped["wih1"],
            prepped["b1"], prepped["whh1"], prepped["bhh1_n"],
            prepped["w_lin"], prepped["b_lin"])
    out_shapes = (jax.ShapeDtypeStruct((B, Vp), f32),
                  jax.ShapeDtypeStruct((2, B, Hp), f32))

    # Gridless design: all buffers live whole in VMEM.  Size the scoped limit
    # from the real buffer total so larger H/T configs don't silently trip the
    # 32 MiB default (re-derive tiling for v7x's 64 MiB physical VMEM at
    # production shapes).
    buf_bytes = sum(int(np.prod(a.shape)) * a.dtype.itemsize for a in args)
    buf_bytes += sum(int(np.prod(s.shape)) * np.dtype(s.dtype).itemsize
                     for s in out_shapes)
    vmem_limit = int(min(100 * 1024 * 1024, max(32 * 1024 * 1024, 4 * buf_bytes)))

    logits_p, h_p = pl.pallas_call(
        _gru_recurrence_kernel,
        out_shape=out_shapes,
        compiler_params=pltpu.CompilerParams(vmem_limit_bytes=vmem_limit),
    )(*args)

    return logits_p[:, :V], h_p[:, :, :H]


def _reference_forward(x_ids, input_features, params, h=None):
    """Pure-JAX reference mirroring torch.nn.GRU semantics."""
    emb = params["embedding"]
    x = jnp.take(emb, x_ids, axis=0).astype(jnp.float32)
    x = jnp.concatenate([x, input_features.astype(jnp.float32)], axis=-1)
    B, T, _ = x.shape
    H = params["whh_l0"].shape[1]
    if h is None:
        h = jnp.zeros((2, B, H), jnp.float32)

    def cell(x_t, h_prev, wih, whh, bih, bhh):
        gi = x_t @ wih.T + bih
        gh = h_prev @ whh.T + bhh
        r = jax.nn.sigmoid(gi[:, :H] + gh[:, :H])
        z = jax.nn.sigmoid(gi[:, H:2 * H] + gh[:, H:2 * H])
        n = jnp.tanh(gi[:, 2 * H:] + r * gh[:, 2 * H:])
        return (1.0 - z) * n + z * h_prev

    h0, h1 = h[0], h[1]
    for t in range(T):
        h0 = cell(x[:, t], h0, params["wih_l0"], params["whh_l0"],
                  params["bih_l0"], params["bhh_l0"])
        h1 = cell(h0, h1, params["wih_l1"], params["whh_l1"],
                  params["bih_l1"], params["bhh_l1"])
    logits = h1 @ params["w_lin"].T + params["b_lin"]
    return logits, jnp.stack([h0, h1])


if __name__ == "__main__":
    # Small, deterministic config.
    B, T = 2, 8            # batch, sequence length
    E, F = 12, 4           # embedding dim, melody-feature dim
    D = E + F              # GRU input_size
    H = 32                 # hidden size
    V = 64                 # vocab size

    key = jax.random.PRNGKey(0)
    ks = jax.random.split(key, 16)

    params = {
        "embedding": jax.random.normal(ks[0], (V, E), jnp.float32) * 0.1,
        "wih_l0": jax.random.normal(ks[1], (3 * H, D), jnp.float32) * 0.1,
        "whh_l0": jax.random.normal(ks[2], (3 * H, H), jnp.float32) * 0.1,
        "bih_l0": jax.random.normal(ks[3], (3 * H,), jnp.float32) * 0.1,
        "bhh_l0": jax.random.normal(ks[4], (3 * H,), jnp.float32) * 0.1,
        "wih_l1": jax.random.normal(ks[5], (3 * H, H), jnp.float32) * 0.1,
        "whh_l1": jax.random.normal(ks[6], (3 * H, H), jnp.float32) * 0.1,
        "bih_l1": jax.random.normal(ks[7], (3 * H,), jnp.float32) * 0.1,
        "bhh_l1": jax.random.normal(ks[8], (3 * H,), jnp.float32) * 0.1,
        "w_lin": jax.random.normal(ks[9], (V, H), jnp.float32) * 0.1,
        "b_lin": jax.random.normal(ks[10], (V,), jnp.float32) * 0.1,
    }

    x_ids = jax.random.randint(ks[11], (B, T), 0, V, jnp.int32)
    feats = jax.random.normal(ks[12], (B, T, F), jnp.float32)

    # One-time parameter prep (padded / fused / bf16) — not on the per-call path.
    prepped = jax.tree_util.tree_map(jax.block_until_ready, prepare_params(params))

    fwd = jax.jit(functools.partial(gru_melodies_forward,
                                    hidden_size=H, vocab_size=V))
    logits, h_out = fwd(x_ids, feats, prepped)
    logits = jax.block_until_ready(logits)
    h_out = jax.block_until_ready(h_out)

    ref_logits, ref_h = _reference_forward(x_ids, feats, params)
    # Tolerance reflects bf16 storage of the recurrent / layer-1 weight matrices
    # (f32 accumulation, f32 hidden carries).
    np.testing.assert_allclose(np.asarray(logits), np.asarray(ref_logits),
                               rtol=2e-2, atol=5e-3)
    np.testing.assert_allclose(np.asarray(h_out), np.asarray(ref_h),
                               rtol=2e-2, atol=5e-3)

    assert logits.shape == (B, V) and h_out.shape == (2, B, H)
    print("KERNEL_OK")
</pallas_src>

<mosaic_0001>
module attributes {stable_mosaic.version = 11 : i64} {
  func.func @_gru_recurrence_kernel(%arg0: memref<8x2x384xf32, #tpu.memory_space<vmem>>, %arg1: memref<2x2x128xf32, #tpu.memory_space<vmem>>, %arg2: memref<128x384xbf16, #tpu.memory_space<vmem>>, %arg3: memref<1x128xf32, #tpu.memory_space<vmem>>, %arg4: memref<128x384xbf16, #tpu.memory_space<vmem>>, %arg5: memref<1x384xf32, #tpu.memory_space<vmem>>, %arg6: memref<128x384xbf16, #tpu.memory_space<vmem>>, %arg7: memref<1x128xf32, #tpu.memory_space<vmem>>, %arg8: memref<128x128xf32, #tpu.memory_space<vmem>>, %arg9: memref<1x128xf32, #tpu.memory_space<vmem>>, %arg10: memref<2x128xf32, #tpu.memory_space<vmem>>, %arg11: memref<2x2x128xf32, #tpu.memory_space<vmem>>) attributes {dimension_semantics = [], scalar_prefetch = 0 : i64, scratch_operands = 0 : i64, tpu.core_type = #tpu.core_type<tc>} {
    %c0 = arith.constant 0 : index
    %c0_0 = arith.constant 0 : index
    %0 = vector.load %arg2[%c0, %c0_0] : memref<128x384xbf16, #tpu.memory_space<vmem>>, vector<128x384xbf16>
    %c0_1 = arith.constant 0 : index
    %c0_2 = arith.constant 0 : index
    %1 = vector.load %arg4[%c0_1, %c0_2] : memref<128x384xbf16, #tpu.memory_space<vmem>>, vector<128x384xbf16>
    %c0_3 = arith.constant 0 : index
    %c0_4 = arith.constant 0 : index
    %2 = vector.load %arg6[%c0_3, %c0_4] : memref<128x384xbf16, #tpu.memory_space<vmem>>, vector<128x384xbf16>
    %c0_5 = arith.constant 0 : index
    %c0_6 = arith.constant 0 : index
    %3 = vector.load %arg5[%c0_5, %c0_6] : memref<1x384xf32, #tpu.memory_space<vmem>>, vector<1x384xf32>
    %4 = vector.shape_cast %3 : vector<1x384xf32> to vector<1x384xf32>
    %5 = vector.broadcast %4 : vector<1x384xf32> to vector<2x384xf32>
    %c0_7 = arith.constant 0 : index
    %c0_8 = arith.constant 0 : index
    %6 = vector.load %arg3[%c0_7, %c0_8] : memref<1x128xf32, #tpu.memory_space<vmem>>, vector<1x128xf32>
    %7 = vector.shape_cast %6 : vector<1x128xf32> to vector<1x128xf32>
    %8 = vector.broadcast %7 : vector<1x128xf32> to vector<2x128xf32>
    %c0_9 = arith.constant 0 : index
    %c0_10 = arith.constant 0 : index
    %9 = vector.load %arg7[%c0_9, %c0_10] : memref<1x128xf32, #tpu.memory_space<vmem>>, vector<1x128xf32>
    %10 = vector.shape_cast %9 : vector<1x128xf32> to vector<1x128xf32>
    %11 = vector.broadcast %10 : vector<1x128xf32> to vector<2x128xf32>
    %c1 = arith.constant 1 : index
    %c0_11 = arith.constant 0 : index
    %c0_12 = arith.constant 0 : index
    %12 = vector.load %arg1[%c1, %c0_11, %c0_12] : memref<2x2x128xf32, #tpu.memory_space<vmem>>, vector<1x2x128xf32>
    %13 = vector.shape_cast %12 : vector<1x2x128xf32> to vector<2x128xf32>
    %c0_13 = arith.constant 0 : index
    %c0_14 = arith.constant 0 : index
    %c0_15 = arith.constant 0 : index
    %14 = vector.load %arg1[%c0_13, %c0_14, %c0_15] : memref<2x2x128xf32, #tpu.memory_space<vmem>>, vector<1x2x128xf32>
    %15 = vector.shape_cast %14 : vector<1x2x128xf32> to vector<2x128xf32>
    %c0_16 = arith.constant 0 : index
    %c0_17 = arith.constant 0 : index
    %c0_18 = arith.constant 0 : index
    %16 = vector.load %arg0[%c0_16, %c0_17, %c0_18] : memref<8x2x384xf32, #tpu.memory_space<vmem>>, vector<1x2x384xf32>
    %17 = vector.shape_cast %16 : vector<1x2x384xf32> to vector<2x384xf32>
    %18 = arith.truncf %15 : vector<2x128xf32> to vector<2x128xbf16>
    %cst = arith.constant dense<0.000000e+00> : vector<2x384xf32>
    %19 = tpu.matmul %18, %0, %cst {dimension_numbers = #tpu.dot_dimension_numbers<[1], [0], [0], [1], [0, 0, 1, 1], [], []>} : vector<2x128xbf16>, vector<128x384xbf16>, vector<2x384xf32> -> vector<2x384xf32>
    %20 = vector.extract_strided_slice %17 {offsets = [0, 0], sizes = [2, 128], strides = [1, 1]} : vector<2x384xf32> to vector<2x128xf32>
    %21 = vector.extract_strided_slice %19 {offsets = [0, 0], sizes = [2, 128], strides = [1, 1]} : vector<2x384xf32> to vector<2x128xf32>
    %22 = arith.addf %20, %21 : vector<2x128xf32>
    %23 = arith.negf %22 : vector<2x128xf32>
    %24 = math.exp %23 : vector<2x128xf32>
    %cst_19 = arith.constant 1.000000e+00 : f32
    %25 = vector.broadcast %cst_19 : f32 to vector<2x128xf32>
    %26 = arith.addf %25, %24 : vector<2x128xf32>
    %27 = arith.divf %25, %26 : vector<2x128xf32>
    %28 = vector.extract_strided_slice %17 {offsets = [0, 128], sizes = [2, 128], strides = [1, 1]} : vector<2x384xf32> to vector<2x128xf32>
    %29 = vector.extract_strided_slice %19 {offsets = [0, 128], sizes = [2, 128], strides = [1, 1]} : vector<2x384xf32> to vector<2x128xf32>
    %30 = arith.addf %28, %29 : vector<2x128xf32>
    %31 = arith.negf %30 : vector<2x128xf32>
    %32 = math.exp %31 : vector<2x128xf32>
    %cst_20 = arith.constant 1.000000e+00 : f32
    %33 = vector.broadcast %cst_20 : f32 to vector<2x128xf32>
    %34 = arith.addf %33, %32 : vector<2x128xf32>
    %35 = arith.divf %33, %34 : vector<2x128xf32>
    %36 = vector.extract_strided_slice %17 {offsets = [0, 256], sizes = [2, 128], strides = [1, 1]} : vector<2x384xf32> to vector<2x128xf32>
    %37 = vector.extract_strided_slice %19 {offsets = [0, 256], sizes = [2, 128], strides = [1, 1]} : vector<2x384xf32> to vector<2x128xf32>
    %38 = arith.addf %37, %8 : vector<2x128xf32>
    %39 = arith.mulf %27, %38 : vector<2x128xf32>
    %40 = arith.addf %36, %39 : vector<2x128xf32>
    %41 = math.tanh %40 : vector<2x128xf32>
    %cst_21 = arith.constant 1.000000e+00 : f32
    %42 = vector.broadcast %cst_21 : f32 to vector<2x128xf32>
    %43 = arith.subf %42, %35 : vector<2x128xf32>
    %44 = arith.mulf %43, %41 : vector<2x128xf32>
    %45 = arith.mulf %35, %15 : vector<2x128xf32>
    %46 = arith.addf %44, %45 : vector<2x128xf32>
    %c0_i32 = arith.constant 0 : i32
    %47 = arith.truncf %46 : vector<2x128xf32> to vector<2x128xbf16>
    %cst_22 = arith.constant dense<0.000000e+00> : vector<2x384xf32>
    %48 = tpu.matmul %47, %1, %cst_22 {dimension_numbers = #tpu.dot_dimension_numbers<[1], [0], [0], [1], [0, 0, 1, 1], [], []>} : vector<2x128xbf16>, vector<128x384xbf16>, vector<2x384xf32> -> vector<2x384xf32>
    %49 = arith.addf %48, %5 : vector<2x384xf32>
    %50 = arith.truncf %13 : vector<2x128xf32> to vector<2x128xbf16>
    %cst_23 = arith.constant dense<0.000000e+00> : vector<2x384xf32>
    %51 = tpu.matmul %50, %2, %cst_23 {dimension_numbers = #tpu.dot_dimension_numbers<[1], [0], [0], [1], [0, 0, 1, 1], [], []>} : vector<2x128xbf16>, vector<128x384xbf16>, vector<2x384xf32> -> vector<2x384xf32>
    %52 = vector.extract_strided_slice %49 {offsets = [0, 0], sizes = [2, 128], strides = [1, 1]} : vector<2x384xf32> to vector<2x128xf32>
    %53 = vector.extract_strided_slice %51 {offsets = [0, 0], sizes = [2, 128], strides = [1, 1]} : vector<2x384xf32> to vector<2x128xf32>
    %54 = arith.addf %52, %53 : vector<2x128xf32>
    %55 = arith.negf %54 : vector<2x128xf32>
    %56 = math.exp %55 : vector<2x128xf32>
    %cst_24 = arith.constant 1.000000e+00 : f32
    %57 = vector.broadcast %cst_24 : f32 to vector<2x128xf32>
    %58 = arith.addf %57, %56 : vector<2x128xf32>
    %59 = arith.divf %57, %58 : vector<2x128xf32>
    %60 = vector.extract_strided_slice %49 {offsets = [0, 128], sizes = [2, 128], strides = [1, 1]} : vector<2x384xf32> to vector<2x128xf32>
    %61 = vector.extract_strided_slice %51 {offsets = [0, 128], sizes = [2, 128], strides = [1, 1]} : vector<2x384xf32> to vector<2x128xf32>
    %62 = arith.addf %60, %61 : vector<2x128xf32>
    %63 = arith.negf %62 : vector<2x128xf32>
    %64 = math.exp %63 : vector<2x128xf32>
    %cst_25 = arith.constant 1.000000e+00 : f32
    %65 = vector.broadcast %cst_25 : f32 to vector<2x128xf32>
    %66 = arith.addf %65, %64 : vector<2x128xf32>
    %67 = arith.divf %65, %66 : vector<2x128xf32>
    %68 = vector.extract_strided_slice %49 {offsets = [0, 256], sizes = [2, 128], strides = [1, 1]} : vector<2x384xf32> to vector<2x128xf32>
    %69 = vector.extract_strided_slice %51 {offsets = [0, 256], sizes = [2, 128], strides = [1, 1]} : vector<2x384xf32> to vector<2x128xf32>
    %70 = arith.addf %69, %11 : vector<2x128xf32>
    %71 = arith.mulf %59, %70 : vector<2x128xf32>
    %72 = arith.addf %68, %71 : vector<2x128xf32>
    %73 = math.tanh %72 : vector<2x128xf32>
    %cst_26 = arith.constant 1.000000e+00 : f32
    %74 = vector.broadcast %cst_26 : f32 to vector<2x128xf32>
    %75 = arith.subf %74, %67 : vector<2x128xf32>
    %76 = arith.mulf %75, %73 : vector<2x128xf32>
    %77 = arith.mulf %67, %13 : vector<2x128xf32>
    %78 = arith.addf %76, %77 : vector<2x128xf32>
    %c1_i32 = arith.constant 1 : i32
    %79 = arith.addi %c0_i32, %c1_i32 : i32
    %80 = arith.index_cast %79 : i32 to index
    %c0_27 = arith.constant 0 : index
    %c0_28 = arith.constant 0 : index
    %81 = vector.load %arg0[%80, %c0_27, %c0_28] : memref<8x2x384xf32, #tpu.memory_space<vmem>>, vector<1x2x384xf32>
    %82 = vector.shape_cast %81 : vector<1x2x384xf32> to vector<2x384xf32>
    %83 = arith.truncf %46 : vector<2x128xf32> to vector<2x128xbf16>
    %cst_29 = arith.constant dense<0.000000e+00> : vector<2x384xf32>
    %84 = tpu.matmul %83, %0, %cst_29 {dimension_numbers = #tpu.dot_dimension_numbers<[1], [0], [0], [1], [0, 0, 1, 1], [], []>} : vector<2x128xbf16>, vector<128x384xbf16>, vector<2x384xf32> -> vector<2x384xf32>
    %85 = vector.extract_strided_slice %82 {offsets = [0, 0], sizes = [2, 128], strides = [1, 1]} : vector<2x384xf32> to vector<2x128xf32>
    %86 = vector.extract_strided_slice %84 {offsets = [0, 0], sizes = [2, 128], strides = [1, 1]} : vector<2x384xf32> to vector<2x128xf32>
    %87 = arith.addf %85, %86 : vector<2x128xf32>
    %88 = arith.negf %87 : vector<2x128xf32>
    %89 = math.exp %88 : vector<2x128xf32>
    %cst_30 = arith.constant 1.000000e+00 : f32
    %90 = vector.broadcast %cst_30 : f32 to vector<2x128xf32>
    %91 = arith.addf %90, %89 : vector<2x128xf32>
    %92 = arith.divf %90, %91 : vector<2x128xf32>
    %93 = vector.extract_strided_slice %82 {offsets = [0, 128], sizes = [2, 128], strides = [1, 1]} : vector<2x384xf32> to vector<2x128xf32>
    %94 = vector.extract_strided_slice %84 {offsets = [0, 128], sizes = [2, 128], strides = [1, 1]} : vector<2x384xf32> to vector<2x128xf32>
    %95 = arith.addf %93, %94 : vector<2x128xf32>
    %96 = arith.negf %95 : vector<2x128xf32>
    %97 = math.exp %96 : vector<2x128xf32>
    %cst_31 = arith.constant 1.000000e+00 : f32
    %98 = vector.broadcast %cst_31 : f32 to vector<2x128xf32>
    %99 = arith.addf %98, %97 : vector<2x128xf32>
    %100 = arith.divf %98, %99 : vector<2x128xf32>
    %101 = vector.extract_strided_slice %82 {offsets = [0, 256], sizes = [2, 128], strides = [1, 1]} : vector<2x384xf32> to vector<2x128xf32>
    %102 = vector.extract_strided_slice %84 {offsets = [0, 256], sizes = [2, 128], strides = [1, 1]} : vector<2x384xf32> to vector<2x128xf32>
    %103 = arith.addf %102, %8 : vector<2x128xf32>
    %104 = arith.mulf %92, %103 : vector<2x128xf32>
    %105 = arith.addf %101, %104 : vector<2x128xf32>
    %106 = math.tanh %105 : vector<2x128xf32>
    %cst_32 = arith.constant 1.000000e+00 : f32
    %107 = vector.broadcast %cst_32 : f32 to vector<2x128xf32>
    %108 = arith.subf %107, %100 : vector<2x128xf32>
    %109 = arith.mulf %108, %106 : vector<2x128xf32>
    %110 = arith.mulf %100, %46 : vector<2x128xf32>
    %111 = arith.addf %109, %110 : vector<2x128xf32>
    %c1_i32_33 = arith.constant 1 : i32
    %112 = arith.truncf %111 : vector<2x128xf32> to vector<2x128xbf16>
    %cst_34 = arith.constant dense<0.000000e+00> : vector<2x384xf32>
    %113 = tpu.matmul %112, %1, %cst_34 {dimension_numbers = #tpu.dot_dimension_numbers<[1], [0], [0], [1], [0, 0, 1, 1], [], []>} : vector<2x128xbf16>, vector<128x384xbf16>, vector<2x384xf32> -> vector<2x384xf32>
    %114 = arith.addf %113, %5 : vector<2x384xf32>
    %115 = arith.truncf %78 : vector<2x128xf32> to vector<2x128xbf16>
    %cst_35 = arith.constant dense<0.000000e+00> : vector<2x384xf32>
    %116 = tpu.matmul %115, %2, %cst_35 {dimension_numbers = #tpu.dot_dimension_numbers<[1], [0], [0], [1], [0, 0, 1, 1], [], []>} : vector<2x128xbf16>, vector<128x384xbf16>, vector<2x384xf32> -> vector<2x384xf32>
    %117 = vector.extract_strided_slice %114 {offsets = [0, 0], sizes = [2, 128], strides = [1, 1]} : vector<2x384xf32> to vector<2x128xf32>
    %118 = vector.extract_strided_slice %116 {offsets = [0, 0], sizes = [2, 128], strides = [1, 1]} : vector<2x384xf32> to vector<2x128xf32>
    %119 = arith.addf %117, %118 : vector<2x128xf32>
    %120 = arith.negf %119 : vector<2x128xf32>
    %121 = math.exp %120 : vector<2x128xf32>
    %cst_36 = arith.constant 1.000000e+00 : f32
    %122 = vector.broadcast %cst_36 : f32 to vector<2x128xf32>
    %123 = arith.addf %122, %121 : vector<2x128xf32>
    %124 = arith.divf %122, %123 : vector<2x128xf32>
    %125 = vector.extract_strided_slice %114 {offsets = [0, 128], sizes = [2, 128], strides = [1, 1]} : vector<2x384xf32> to vector<2x128xf32>
    %126 = vector.extract_strided_slice %116 {offsets = [0, 128], sizes = [2, 128], strides = [1, 1]} : vector<2x384xf32> to vector<2x128xf32>
    %127 = arith.addf %125, %126 : vector<2x128xf32>
    %128 = arith.negf %127 : vector<2x128xf32>
    %129 = math.exp %128 : vector<2x128xf32>
    %cst_37 = arith.constant 1.000000e+00 : f32
    %130 = vector.broadcast %cst_37 : f32 to vector<2x128xf32>
    %131 = arith.addf %130, %129 : vector<2x128xf32>
    %132 = arith.divf %130, %131 : vector<2x128xf32>
    %133 = vector.extract_strided_slice %114 {offsets = [0, 256], sizes = [2, 128], strides = [1, 1]} : vector<2x384xf32> to vector<2x128xf32>
    %134 = vector.extract_strided_slice %116 {offsets = [0, 256], sizes = [2, 128], strides = [1, 1]} : vector<2x384xf32> to vector<2x128xf32>
    %135 = arith.addf %134, %11 : vector<2x128xf32>
    %136 = arith.mulf %124, %135 : vector<2x128xf32>
    %137 = arith.addf %133, %136 : vector<2x128xf32>
    %138 = math.tanh %137 : vector<2x128xf32>
    %cst_38 = arith.constant 1.000000e+00 : f32
    %139 = vector.broadcast %cst_38 : f32 to vector<2x128xf32>
    %140 = arith.subf %139, %132 : vector<2x128xf32>
    %141 = arith.mulf %140, %138 : vector<2x128xf32>
    %142 = arith.mulf %132, %78 : vector<2x128xf32>
    %143 = arith.addf %141, %142 : vector<2x128xf32>
    %c1_i32_39 = arith.constant 1 : i32
    %144 = arith.addi %c1_i32_33, %c1_i32_39 : i32
    %145 = arith.index_cast %144 : i32 to index
    %c0_40 = arith.constant 0 : index
    %c0_41 = arith.constant 0 : index
    %146 = vector.load %arg0[%145, %c0_40, %c0_41] : memref<8x2x384xf32, #tpu.memory_space<vmem>>, vector<1x2x384xf32>
    %147 = vector.shape_cast %146 : vector<1x2x384xf32> to vector<2x384xf32>
    %148 = arith.truncf %111 : vector<2x128xf32> to vector<2x128xbf16>
    %cst_42 = arith.constant dense<0.000000e+00> : vector<2x384xf32>
    %149 = tpu.matmul %148, %0, %cst_42 {dimension_numbers = #tpu.dot_dimension_numbers<[1], [0], [0], [1], [0, 0, 1, 1], [], []>} : vector<2x128xbf16>, vector<128x384xbf16>, vector<2x384xf32> -> vector<2x384xf32>
    %150 = vector.extract_strided_slice %147 {offsets = [0, 0], sizes = [2, 128], strides = [1, 1]} : vector<2x384xf32> to vector<2x128xf32>
    %151 = vector.extract_strided_slice %149 {offsets = [0, 0], sizes = [2, 128], strides = [1, 1]} : vector<2x384xf32> to vector<2x128xf32>
    %152 = arith.addf %150, %151 : vector<2x128xf32>
    %153 = arith.negf %152 : vector<2x128xf32>
    %154 = math.exp %153 : vector<2x128xf32>
    %cst_43 = arith.constant 1.000000e+00 : f32
    %155 = vector.broadcast %cst_43 : f32 to vector<2x128xf32>
    %156 = arith.addf %155, %154 : vector<2x128xf32>
    %157 = arith.divf %155, %156 : vector<2x128xf32>
    %158 = vector.extract_strided_slice %147 {offsets = [0, 128], sizes = [2, 128], strides = [1, 1]} : vector<2x384xf32> to vector<2x128xf32>
    %159 = vector.extract_strided_slice %149 {offsets = [0, 128], sizes = [2, 128], strides = [1, 1]} : vector<2x384xf32> to vector<2x128xf32>
    %160 = arith.addf %158, %159 : vector<2x128xf32>
    %161 = arith.negf %160 : vector<2x128xf32>
    %162 = math.exp %161 : vector<2x128xf32>
    %cst_44 = arith.constant 1.000000e+00 : f32
    %163 = vector.broadcast %cst_44 : f32 to vector<2x128xf32>
    %164 = arith.addf %163, %162 : vector<2x128xf32>
    %165 = arith.divf %163, %164 : vector<2x128xf32>
    %166 = vector.extract_strided_slice %147 {offsets = [0, 256], sizes = [2, 128], strides = [1, 1]} : vector<2x384xf32> to vector<2x128xf32>
    %167 = vector.extract_strided_slice %149 {offsets = [0, 256], sizes = [2, 128], strides = [1, 1]} : vector<2x384xf32> to vector<2x128xf32>
    %168 = arith.addf %167, %8 : vector<2x128xf32>
    %169 = arith.mulf %157, %168 : vector<2x128xf32>
    %170 = arith.addf %166, %169 : vector<2x128xf32>
    %171 = math.tanh %170 : vector<2x128xf32>
    %cst_45 = arith.constant 1.000000e+00 : f32
    %172 = vector.broadcast %cst_45 : f32 to vector<2x128xf32>
    %173 = arith.subf %172, %165 : vector<2x128xf32>
    %174 = arith.mulf %173, %171 : vector<2x128xf32>
    %175 = arith.mulf %165, %111 : vector<2x128xf32>
    %176 = arith.addf %174, %175 : vector<2x128xf32>
    %c2_i32 = arith.constant 2 : i32
    %177 = arith.truncf %176 : vector<2x128xf32> to vector<2x128xbf16>
    %cst_46 = arith.constant dense<0.000000e+00> : vector<2x384xf32>
    %178 = tpu.matmul %177, %1, %cst_46 {dimension_numbers = #tpu.dot_dimension_numbers<[1], [0], [0], [1], [0, 0, 1, 1], [], []>} : vector<2x128xbf16>, vector<128x384xbf16>, vector<2x384xf32> -> vector<2x384xf32>
    %179 = arith.addf %178, %5 : vector<2x384xf32>
    %180 = arith.truncf %143 : vector<2x128xf32> to vector<2x128xbf16>
    %cst_47 = arith.constant dense<0.000000e+00> : vector<2x384xf32>
    %181 = tpu.matmul %180, %2, %cst_47 {dimension_numbers = #tpu.dot_dimension_numbers<[1], [0], [0], [1], [0, 0, 1, 1], [], []>} : vector<2x128xbf16>, vector<128x384xbf16>, vector<2x384xf32> -> vector<2x384xf32>
    %182 = vector.extract_strided_slice %179 {offsets = [0, 0], sizes = [2, 128], strides = [1, 1]} : vector<2x384xf32> to vector<2x128xf32>
    %183 = vector.extract_strided_slice %181 {offsets = [0, 0], sizes = [2, 128], strides = [1, 1]} : vector<2x384xf32> to vector<2x128xf32>
    %184 = arith.addf %182, %183 : vector<2x128xf32>
    %185 = arith.negf %184 : vector<2x128xf32>
    %186 = math.exp %185 : vector<2x128xf32>
    %cst_48 = arith.constant 1.000000e+00 : f32
    %187 = vector.broadcast %cst_48 : f32 to vector<2x128xf32>
    %188 = arith.addf %187, %186 : vector<2x128xf32>
    %189 = arith.divf %187, %188 : vector<2x128xf32>
    %190 = vector.extract_strided_slice %179 {offsets = [0, 128], sizes = [2, 128], strides = [1, 1]} : vector<2x384xf32> to vector<2x128xf32>
    %191 = vector.extract_strided_slice %181 {offsets = [0, 128], sizes = [2, 128], strides = [1, 1]} : vector<2x384xf32> to vector<2x128xf32>
    %192 = arith.addf %190, %191 : vector<2x128xf32>
    %193 = arith.negf %192 : vector<2x128xf32>
    %194 = math.exp %193 : vector<2x128xf32>
    %cst_49 = arith.constant 1.000000e+00 : f32
    %195 = vector.broadcast %cst_49 : f32 to vector<2x128xf32>
    %196 = arith.addf %195, %194 : vector<2x128xf32>
    %197 = arith.divf %195, %196 : vector<2x128xf32>
    %198 = vector.extract_strided_slice %179 {offsets = [0, 256], sizes = [2, 128], strides = [1, 1]} : vector<2x384xf32> to vector<2x128xf32>
    %199 = vector.extract_strided_slice %181 {offsets = [0, 256], sizes = [2, 128], strides = [1, 1]} : vector<2x384xf32> to vector<2x128xf32>
    %200 = arith.addf %199, %11 : vector<2x128xf32>
    %201 = arith.mulf %189, %200 : vector<2x128xf32>
    %202 = arith.addf %198, %201 : vector<2x128xf32>
    %203 = math.tanh %202 : vector<2x128xf32>
    %cst_50 = arith.constant 1.000000e+00 : f32
    %204 = vector.broadcast %cst_50 : f32 to vector<2x128xf32>
    %205 = arith.subf %204, %197 : vector<2x128xf32>
    %206 = arith.mulf %205, %203 : vector<2x128xf32>
    %207 = arith.mulf %197, %143 : vector<2x128xf32>
    %208 = arith.addf %206, %207 : vector<2x128xf32>
    %c1_i32_51 = arith.constant 1 : i32
    %209 = arith.addi %c2_i32, %c1_i32_51 : i32
    %210 = arith.index_cast %209 : i32 to index
    %c0_52 = arith.constant 0 : index
    %c0_53 = arith.constant 0 : index
    %211 = vector.load %arg0[%210, %c0_52, %c0_53] : memref<8x2x384xf32, #tpu.memory_space<vmem>>, vector<1x2x384xf32>
    %212 = vector.shape_cast %211 : vector<1x2x384xf32> to vector<2x384xf32>
    %213 = arith.truncf %176 : vector<2x128xf32> to vector<2x128xbf16>
    %cst_54 = arith.constant dense<0.000000e+00> : vector<2x384xf32>
    %214 = tpu.matmul %213, %0, %cst_54 {dimension_numbers = #tpu.dot_dimension_numbers<[1], [0], [0], [1], [0, 0, 1, 1], [], []>} : vector<2x128xbf16>, vector<128x384xbf16>, vector<2x384xf32> -> vector<2x384xf32>
    %215 = vector.extract_strided_slice %212 {offsets = [0, 0], sizes = [2, 128], strides = [1, 1]} : vector<2x384xf32> to vector<2x128xf32>
    %216 = vector.extract_strided_slice %214 {offsets = [0, 0], sizes = [2, 128], strides = [1, 1]} : vector<2x384xf32> to vector<2x128xf32>
    %217 = arith.addf %215, %216 : vector<2x128xf32>
    %218 = arith.negf %217 : vector<2x128xf32>
    %219 = math.exp %218 : vector<2x128xf32>
    %cst_55 = arith.constant 1.000000e+00 : f32
    %220 = vector.broadcast %cst_55 : f32 to vector<2x128xf32>
    %221 = arith.addf %220, %219 : vector<2x128xf32>
    %222 = arith.divf %220, %221 : vector<2x128xf32>
    %223 = vector.extract_strided_slice %212 {offsets = [0, 128], sizes = [2, 128], strides = [1, 1]} : vector<2x384xf32> to vector<2x128xf32>
    %224 = vector.extract_strided_slice %214 {offsets = [0, 128], sizes = [2, 128], strides = [1, 1]} : vector<2x384xf32> to vector<2x128xf32>
    %225 = arith.addf %223, %224 : vector<2x128xf32>
    %226 = arith.negf %225 : vector<2x128xf32>
    %227 = math.exp %226 : vector<2x128xf32>
    %cst_56 = arith.constant 1.000000e+00 : f32
    %228 = vector.broadcast %cst_56 : f32 to vector<2x128xf32>
    %229 = arith.addf %228, %227 : vector<2x128xf32>
    %230 = arith.divf %228, %229 : vector<2x128xf32>
    %231 = vector.extract_strided_slice %212 {offsets = [0, 256], sizes = [2, 128], strides = [1, 1]} : vector<2x384xf32> to vector<2x128xf32>
    %232 = vector.extract_strided_slice %214 {offsets = [0, 256], sizes = [2, 128], strides = [1, 1]} : vector<2x384xf32> to vector<2x128xf32>
    %233 = arith.addf %232, %8 : vector<2x128xf32>
    %234 = arith.mulf %222, %233 : vector<2x128xf32>
    %235 = arith.addf %231, %234 : vector<2x128xf32>
    %236 = math.tanh %235 : vector<2x128xf32>
    %cst_57 = arith.constant 1.000000e+00 : f32
    %237 = vector.broadcast %cst_57 : f32 to vector<2x128xf32>
    %238 = arith.subf %237, %230 : vector<2x128xf32>
    %239 = arith.mulf %238, %236 : vector<2x128xf32>
    %240 = arith.mulf %230, %176 : vector<2x128xf32>
    %241 = arith.addf %239, %240 : vector<2x128xf32>
    %c3_i32 = arith.constant 3 : i32
    %242 = arith.truncf %241 : vector<2x128xf32> to vector<2x128xbf16>
    %cst_58 = arith.constant dense<0.000000e+00> : vector<2x384xf32>
    %243 = tpu.matmul %242, %1, %cst_58 {dimension_numbers = #tpu.dot_dimension_numbers<[1], [0], [0], [1], [0, 0, 1, 1], [], []>} : vector<2x128xbf16>, vector<128x384xbf16>, vector<2x384xf32> -> vector<2x384xf32>
    %244 = arith.addf %243, %5 : vector<2x384xf32>
    %245 = arith.truncf %208 : vector<2x128xf32> to vector<2x128xbf16>
    %cst_59 = arith.constant dense<0.000000e+00> : vector<2x384xf32>
    %246 = tpu.matmul %245, %2, %cst_59 {dimension_numbers = #tpu.dot_dimension_numbers<[1], [0], [0], [1], [0, 0, 1, 1], [], []>} : vector<2x128xbf16>, vector<128x384xbf16>, vector<2x384xf32> -> vector<2x384xf32>
    %247 = vector.extract_strided_slice %244 {offsets = [0, 0], sizes = [2, 128], strides = [1, 1]} : vector<2x384xf32> to vector<2x128xf32>
    %248 = vector.extract_strided_slice %246 {offsets = [0, 0], sizes = [2, 128], strides = [1, 1]} : vector<2x384xf32> to vector<2x128xf32>
    %249 = arith.addf %247, %248 : vector<2x128xf32>
    %250 = arith.negf %249 : vector<2x128xf32>
    %251 = math.exp %250 : vector<2x128xf32>
    %cst_60 = arith.constant 1.000000e+00 : f32
    %252 = vector.broadcast %cst_60 : f32 to vector<2x128xf32>
    %253 = arith.addf %252, %251 : vector<2x128xf32>
    %254 = arith.divf %252, %253 : vector<2x128xf32>
    %255 = vector.extract_strided_slice %244 {offsets = [0, 128], sizes = [2, 128], strides = [1, 1]} : vector<2x384xf32> to vector<2x128xf32>
    %256 = vector.extract_strided_slice %246 {offsets = [0, 128], sizes = [2, 128], strides = [1, 1]} : vector<2x384xf32> to vector<2x128xf32>
    %257 = arith.addf %255, %256 : vector<2x128xf32>
    %258 = arith.negf %257 : vector<2x128xf32>
    %259 = math.exp %258 : vector<2x128xf32>
    %cst_61 = arith.constant 1.000000e+00 : f32
    %260 = vector.broadcast %cst_61 : f32 to vector<2x128xf32>
    %261 = arith.addf %260, %259 : vector<2x128xf32>
    %262 = arith.divf %260, %261 : vector<2x128xf32>
    %263 = vector.extract_strided_slice %244 {offsets = [0, 256], sizes = [2, 128], strides = [1, 1]} : vector<2x384xf32> to vector<2x128xf32>
    %264 = vector.extract_strided_slice %246 {offsets = [0, 256], sizes = [2, 128], strides = [1, 1]} : vector<2x384xf32> to vector<2x128xf32>
    %265 = arith.addf %264, %11 : vector<2x128xf32>
    %266 = arith.mulf %254, %265 : vector<2x128xf32>
    %267 = arith.addf %263, %266 : vector<2x128xf32>
    %268 = math.tanh %267 : vector<2x128xf32>
    %cst_62 = arith.constant 1.000000e+00 : f32
    %269 = vector.broadcast %cst_62 : f32 to vector<2x128xf32>
    %270 = arith.subf %269, %262 : vector<2x128xf32>
    %271 = arith.mulf %270, %268 : vector<2x128xf32>
    %272 = arith.mulf %262, %208 : vector<2x128xf32>
    %273 = arith.addf %271, %272 : vector<2x128xf32>
    %c1_i32_63 = arith.constant 1 : i32
    %274 = arith.addi %c3_i32, %c1_i32_63 : i32
    %275 = arith.index_cast %274 : i32 to index
    %c0_64 = arith.constant 0 : index
    %c0_65 = arith.constant 0 : index
    %276 = vector.load %arg0[%275, %c0_64, %c0_65] : memref<8x2x384xf32, #tpu.memory_space<vmem>>, vector<1x2x384xf32>
    %277 = vector.shape_cast %276 : vector<1x2x384xf32> to vector<2x384xf32>
    %278 = arith.truncf %241 : vector<2x128xf32> to vector<2x128xbf16>
    %cst_66 = arith.constant dense<0.000000e+00> : vector<2x384xf32>
    %279 = tpu.matmul %278, %0, %cst_66 {dimension_numbers = #tpu.dot_dimension_numbers<[1], [0], [0], [1], [0, 0, 1, 1], [], []>} : vector<2x128xbf16>, vector<128x384xbf16>, vector<2x384xf32> -> vector<2x384xf32>
    %280 = vector.extract_strided_slice %277 {offsets = [0, 0], sizes = [2, 128], strides = [1, 1]} : vector<2x384xf32> to vector<2x128xf32>
    %281 = vector.extract_strided_slice %279 {offsets = [0, 0], sizes = [2, 128], strides = [1, 1]} : vector<2x384xf32> to vector<2x128xf32>
    %282 = arith.addf %280, %281 : vector<2x128xf32>
    %283 = arith.negf %282 : vector<2x128xf32>
    %284 = math.exp %283 : vector<2x128xf32>
    %cst_67 = arith.constant 1.000000e+00 : f32
    %285 = vector.broadcast %cst_67 : f32 to vector<2x128xf32>
    %286 = arith.addf %285, %284 : vector<2x128xf32>
    %287 = arith.divf %285, %286 : vector<2x128xf32>
    %288 = vector.extract_strided_slice %277 {offsets = [0, 128], sizes = [2, 128], strides = [1, 1]} : vector<2x384xf32> to vector<2x128xf32>
    %289 = vector.extract_strided_slice %279 {offsets = [0, 128], sizes = [2, 128], strides = [1, 1]} : vector<2x384xf32> to vector<2x128xf32>
    %290 = arith.addf %288, %289 : vector<2x128xf32>
    %291 = arith.negf %290 : vector<2x128xf32>
    %292 = math.exp %291 : vector<2x128xf32>
    %cst_68 = arith.constant 1.000000e+00 : f32
    %293 = vector.broadcast %cst_68 : f32 to vector<2x128xf32>
    %294 = arith.addf %293, %292 : vector<2x128xf32>
    %295 = arith.divf %293, %294 : vector<2x128xf32>
    %296 = vector.extract_strided_slice %277 {offsets = [0, 256], sizes = [2, 128], strides = [1, 1]} : vector<2x384xf32> to vector<2x128xf32>
    %297 = vector.extract_strided_slice %279 {offsets = [0, 256], sizes = [2, 128], strides = [1, 1]} : vector<2x384xf32> to vector<2x128xf32>
    %298 = arith.addf %297, %8 : vector<2x128xf32>
    %299 = arith.mulf %287, %298 : vector<2x128xf32>
    %300 = arith.addf %296, %299 : vector<2x128xf32>
    %301 = math.tanh %300 : vector<2x128xf32>
    %cst_69 = arith.constant 1.000000e+00 : f32
    %302 = vector.broadcast %cst_69 : f32 to vector<2x128xf32>
    %303 = arith.subf %302, %295 : vector<2x128xf32>
    %304 = arith.mulf %303, %301 : vector<2x128xf32>
    %305 = arith.mulf %295, %241 : vector<2x128xf32>
    %306 = arith.addf %304, %305 : vector<2x128xf32>
    %c4_i32 = arith.constant 4 : i32
    %307 = arith.truncf %306 : vector<2x128xf32> to vector<2x128xbf16>
    %cst_70 = arith.constant dense<0.000000e+00> : vector<2x384xf32>
    %308 = tpu.matmul %307, %1, %cst_70 {dimension_numbers = #tpu.dot_dimension_numbers<[1], [0], [0], [1], [0, 0, 1, 1], [], []>} : vector<2x128xbf16>, vector<128x384xbf16>, vector<2x384xf32> -> vector<2x384xf32>
    %309 = arith.addf %308, %5 : vector<2x384xf32>
    %310 = arith.truncf %273 : vector<2x128xf32> to vector<2x128xbf16>
    %cst_71 = arith.constant dense<0.000000e+00> : vector<2x384xf32>
    %311 = tpu.matmul %310, %2, %cst_71 {dimension_numbers = #tpu.dot_dimension_numbers<[1], [0], [0], [1], [0, 0, 1, 1], [], []>} : vector<2x128xbf16>, vector<128x384xbf16>, vector<2x384xf32> -> vector<2x384xf32>
    %312 = vector.extract_strided_slice %309 {offsets = [0, 0], sizes = [2, 128], strides = [1, 1]} : vector<2x384xf32> to vector<2x128xf32>
    %313 = vector.extract_strided_slice %311 {offsets = [0, 0], sizes = [2, 128], strides = [1, 1]} : vector<2x384xf32> to vector<2x128xf32>
    %314 = arith.addf %312, %313 : vector<2x128xf32>
    %315 = arith.negf %314 : vector<2x128xf32>
    %316 = math.exp %315 : vector<2x128xf32>
    %cst_72 = arith.constant 1.000000e+00 : f32
    %317 = vector.broadcast %cst_72 : f32 to vector<2x128xf32>
    %318 = arith.addf %317, %316 : vector<2x128xf32>
    %319 = arith.divf %317, %318 : vector<2x128xf32>
    %320 = vector.extract_strided_slice %309 {offsets = [0, 128], sizes = [2, 128], strides = [1, 1]} : vector<2x384xf32> to vector<2x128xf32>
    %321 = vector.extract_strided_slice %311 {offsets = [0, 128], sizes = [2, 128], strides = [1, 1]} : vector<2x384xf32> to vector<2x128xf32>
    %322 = arith.addf %320, %321 : vector<2x128xf32>
    %323 = arith.negf %322 : vector<2x128xf32>
    %324 = math.exp %323 : vector<2x128xf32>
    %cst_73 = arith.constant 1.000000e+00 : f32
    %325 = vector.broadcast %cst_73 : f32 to vector<2x128xf32>
    %326 = arith.addf %325, %324 : vector<2x128xf32>
    %327 = arith.divf %325, %326 : vector<2x128xf32>
    %328 = vector.extract_strided_slice %309 {offsets = [0, 256], sizes = [2, 128], strides = [1, 1]} : vector<2x384xf32> to vector<2x128xf32>
    %329 = vector.extract_strided_slice %311 {offsets = [0, 256], sizes = [2, 128], strides = [1, 1]} : vector<2x384xf32> to vector<2x128xf32>
    %330 = arith.addf %329, %11 : vector<2x128xf32>
    %331 = arith.mulf %319, %330 : vector<2x128xf32>
    %332 = arith.addf %328, %331 : vector<2x128xf32>
    %333 = math.tanh %332 : vector<2x128xf32>
    %cst_74 = arith.constant 1.000000e+00 : f32
    %334 = vector.broadcast %cst_74 : f32 to vector<2x128xf32>
    %335 = arith.subf %334, %327 : vector<2x128xf32>
    %336 = arith.mulf %335, %333 : vector<2x128xf32>
    %337 = arith.mulf %327, %273 : vector<2x128xf32>
    %338 = arith.addf %336, %337 : vector<2x128xf32>
    %c1_i32_75 = arith.constant 1 : i32
    %339 = arith.addi %c4_i32, %c1_i32_75 : i32
    %340 = arith.index_cast %339 : i32 to index
    %c0_76 = arith.constant 0 : index
    %c0_77 = arith.constant 0 : index
    %341 = vector.load %arg0[%340, %c0_76, %c0_77] : memref<8x2x384xf32, #tpu.memory_space<vmem>>, vector<1x2x384xf32>
    %342 = vector.shape_cast %341 : vector<1x2x384xf32> to vector<2x384xf32>
    %343 = arith.truncf %306 : vector<2x128xf32> to vector<2x128xbf16>
    %cst_78 = arith.constant dense<0.000000e+00> : vector<2x384xf32>
    %344 = tpu.matmul %343, %0, %cst_78 {dimension_numbers = #tpu.dot_dimension_numbers<[1], [0], [0], [1], [0, 0, 1, 1], [], []>} : vector<2x128xbf16>, vector<128x384xbf16>, vector<2x384xf32> -> vector<2x384xf32>
    %345 = vector.extract_strided_slice %342 {offsets = [0, 0], sizes = [2, 128], strides = [1, 1]} : vector<2x384xf32> to vector<2x128xf32>
    %346 = vector.extract_strided_slice %344 {offsets = [0, 0], sizes = [2, 128], strides = [1, 1]} : vector<2x384xf32> to vector<2x128xf32>
    %347 = arith.addf %345, %346 : vector<2x128xf32>
    %348 = arith.negf %347 : vector<2x128xf32>
    %349 = math.exp %348 : vector<2x128xf32>
    %cst_79 = arith.constant 1.000000e+00 : f32
    %350 = vector.broadcast %cst_79 : f32 to vector<2x128xf32>
    %351 = arith.addf %350, %349 : vector<2x128xf32>
    %352 = arith.divf %350, %351 : vector<2x128xf32>
    %353 = vector.extract_strided_slice %342 {offsets = [0, 128], sizes = [2, 128], strides = [1, 1]} : vector<2x384xf32> to vector<2x128xf32>
    %354 = vector.extract_strided_slice %344 {offsets = [0, 128], sizes = [2, 128], strides = [1, 1]} : vector<2x384xf32> to vector<2x128xf32>
    %355 = arith.addf %353, %354 : vector<2x128xf32>
    %356 = arith.negf %355 : vector<2x128xf32>
    %357 = math.exp %356 : vector<2x128xf32>
    %cst_80 = arith.constant 1.000000e+00 : f32
    %358 = vector.broadcast %cst_80 : f32 to vector<2x128xf32>
    %359 = arith.addf %358, %357 : vector<2x128xf32>
    %360 = arith.divf %358, %359 : vector<2x128xf32>
    %361 = vector.extract_strided_slice %342 {offsets = [0, 256], sizes = [2, 128], strides = [1, 1]} : vector<2x384xf32> to vector<2x128xf32>
    %362 = vector.extract_strided_slice %344 {offsets = [0, 256], sizes = [2, 128], strides = [1, 1]} : vector<2x384xf32> to vector<2x128xf32>
    %363 = arith.addf %362, %8 : vector<2x128xf32>
    %364 = arith.mulf %352, %363 : vector<2x128xf32>
    %365 = arith.addf %361, %364 : vector<2x128xf32>
    %366 = math.tanh %365 : vector<2x128xf32>
    %cst_81 = arith.constant 1.000000e+00 : f32
    %367 = vector.broadcast %cst_81 : f32 to vector<2x128xf32>
    %368 = arith.subf %367, %360 : vector<2x128xf32>
    %369 = arith.mulf %368, %366 : vector<2x128xf32>
    %370 = arith.mulf %360, %306 : vector<2x128xf32>
    %371 = arith.addf %369, %370 : vector<2x128xf32>
    %c5_i32 = arith.constant 5 : i32
    %372 = arith.truncf %371 : vector<2x128xf32> to vector<2x128xbf16>
    %cst_82 = arith.constant dense<0.000000e+00> : vector<2x384xf32>
    %373 = tpu.matmul %372, %1, %cst_82 {dimension_numbers = #tpu.dot_dimension_numbers<[1], [0], [0], [1], [0, 0, 1, 1], [], []>} : vector<2x128xbf16>, vector<128x384xbf16>, vector<2x384xf32> -> vector<2x384xf32>
    %374 = arith.addf %373, %5 : vector<2x384xf32>
    %375 = arith.truncf %338 : vector<2x128xf32> to vector<2x128xbf16>
    %cst_83 = arith.constant dense<0.000000e+00> : vector<2x384xf32>
    %376 = tpu.matmul %375, %2, %cst_83 {dimension_numbers = #tpu.dot_dimension_numbers<[1], [0], [0], [1], [0, 0, 1, 1], [], []>} : vector<2x128xbf16>, vector<128x384xbf16>, vector<2x384xf32> -> vector<2x384xf32>
    %377 = vector.extract_strided_slice %374 {offsets = [0, 0], sizes = [2, 128], strides = [1, 1]} : vector<2x384xf32> to vector<2x128xf32>
    %378 = vector.extract_strided_slice %376 {offsets = [0, 0], sizes = [2, 128], strides = [1, 1]} : vector<2x384xf32> to vector<2x128xf32>
    %379 = arith.addf %377, %378 : vector<2x128xf32>
    %380 = arith.negf %379 : vector<2x128xf32>
    %381 = math.exp %380 : vector<2x128xf32>
    %cst_84 = arith.constant 1.000000e+00 : f32
    %382 = vector.broadcast %cst_84 : f32 to vector<2x128xf32>
    %383 = arith.addf %382, %381 : vector<2x128xf32>
    %384 = arith.divf %382, %383 : vector<2x128xf32>
    %385 = vector.extract_strided_slice %374 {offsets = [0, 128], sizes = [2, 128], strides = [1, 1]} : vector<2x384xf32> to vector<2x128xf32>
    %386 = vector.extract_strided_slice %376 {offsets = [0, 128], sizes = [2, 128], strides = [1, 1]} : vector<2x384xf32> to vector<2x128xf32>
    %387 = arith.addf %385, %386 : vector<2x128xf32>
    %388 = arith.negf %387 : vector<2x128xf32>
    %389 = math.exp %388 : vector<2x128xf32>
    %cst_85 = arith.constant 1.000000e+00 : f32
    %390 = vector.broadcast %cst_85 : f32 to vector<2x128xf32>
    %391 = arith.addf %390, %389 : vector<2x128xf32>
    %392 = arith.divf %390, %391 : vector<2x128xf32>
    %393 = vector.extract_strided_slice %374 {offsets = [0, 256], sizes = [2, 128], strides = [1, 1]} : vector<2x384xf32> to vector<2x128xf32>
    %394 = vector.extract_strided_slice %376 {offsets = [0, 256], sizes = [2, 128], strides = [1, 1]} : vector<2x384xf32> to vector<2x128xf32>
    %395 = arith.addf %394, %11 : vector<2x128xf32>
    %396 = arith.mulf %384, %395 : vector<2x128xf32>
    %397 = arith.addf %393, %396 : vector<2x128xf32>
    %398 = math.tanh %397 : vector<2x128xf32>
    %cst_86 = arith.constant 1.000000e+00 : f32
    %399 = vector.broadcast %cst_86 : f32 to vector<2x128xf32>
    %400 = arith.subf %399, %392 : vector<2x128xf32>
    %401 = arith.mulf %400, %398 : vector<2x128xf32>
    %402 = arith.mulf %392, %338 : vector<2x128xf32>
    %403 = arith.addf %401, %402 : vector<2x128xf32>
    %c1_i32_87 = arith.constant 1 : i32
    %404 = arith.addi %c5_i32, %c1_i32_87 : i32
    %405 = arith.index_cast %404 : i32 to index
    %c0_88 = arith.constant 0 : index
    %c0_89 = arith.constant 0 : index
    %406 = vector.load %arg0[%405, %c0_88, %c0_89] : memref<8x2x384xf32, #tpu.memory_space<vmem>>, vector<1x2x384xf32>
    %407 = vector.shape_cast %406 : vector<1x2x384xf32> to vector<2x384xf32>
    %408 = arith.truncf %371 : vector<2x128xf32> to vector<2x128xbf16>
    %cst_90 = arith.constant dense<0.000000e+00> : vector<2x384xf32>
    %409 = tpu.matmul %408, %0, %cst_90 {dimension_numbers = #tpu.dot_dimension_numbers<[1], [0], [0], [1], [0, 0, 1, 1], [], []>} : vector<2x128xbf16>, vector<128x384xbf16>, vector<2x384xf32> -> vector<2x384xf32>
    %410 = vector.extract_strided_slice %407 {offsets = [0, 0], sizes = [2, 128], strides = [1, 1]} : vector<2x384xf32> to vector<2x128xf32>
    %411 = vector.extract_strided_slice %409 {offsets = [0, 0], sizes = [2, 128], strides = [1, 1]} : vector<2x384xf32> to vector<2x128xf32>
    %412 = arith.addf %410, %411 : vector<2x128xf32>
    %413 = arith.negf %412 : vector<2x128xf32>
    %414 = math.exp %413 : vector<2x128xf32>
    %cst_91 = arith.constant 1.000000e+00 : f32
    %415 = vector.broadcast %cst_91 : f32 to vector<2x128xf32>
    %416 = arith.addf %415, %414 : vector<2x128xf32>
    %417 = arith.divf %415, %416 : vector<2x128xf32>
    %418 = vector.extract_strided_slice %407 {offsets = [0, 128], sizes = [2, 128], strides = [1, 1]} : vector<2x384xf32> to vector<2x128xf32>
    %419 = vector.extract_strided_slice %409 {offsets = [0, 128], sizes = [2, 128], strides = [1, 1]} : vector<2x384xf32> to vector<2x128xf32>
    %420 = arith.addf %418, %419 : vector<2x128xf32>
    %421 = arith.negf %420 : vector<2x128xf32>
    %422 = math.exp %421 : vector<2x128xf32>
    %cst_92 = arith.constant 1.000000e+00 : f32
    %423 = vector.broadcast %cst_92 : f32 to vector<2x128xf32>
    %424 = arith.addf %423, %422 : vector<2x128xf32>
    %425 = arith.divf %423, %424 : vector<2x128xf32>
    %426 = vector.extract_strided_slice %407 {offsets = [0, 256], sizes = [2, 128], strides = [1, 1]} : vector<2x384xf32> to vector<2x128xf32>
    %427 = vector.extract_strided_slice %409 {offsets = [0, 256], sizes = [2, 128], strides = [1, 1]} : vector<2x384xf32> to vector<2x128xf32>
    %428 = arith.addf %427, %8 : vector<2x128xf32>
    %429 = arith.mulf %417, %428 : vector<2x128xf32>
    %430 = arith.addf %426, %429 : vector<2x128xf32>
    %431 = math.tanh %430 : vector<2x128xf32>
    %cst_93 = arith.constant 1.000000e+00 : f32
    %432 = vector.broadcast %cst_93 : f32 to vector<2x128xf32>
    %433 = arith.subf %432, %425 : vector<2x128xf32>
    %434 = arith.mulf %433, %431 : vector<2x128xf32>
    %435 = arith.mulf %425, %371 : vector<2x128xf32>
    %436 = arith.addf %434, %435 : vector<2x128xf32>
    %c6_i32 = arith.constant 6 : i32
    %437 = arith.truncf %436 : vector<2x128xf32> to vector<2x128xbf16>
    %cst_94 = arith.constant dense<0.000000e+00> : vector<2x384xf32>
    %438 = tpu.matmul %437, %1, %cst_94 {dimension_numbers = #tpu.dot_dimension_numbers<[1], [0], [0], [1], [0, 0, 1, 1], [], []>} : vector<2x128xbf16>, vector<128x384xbf16>, vector<2x384xf32> -> vector<2x384xf32>
    %439 = arith.addf %438, %5 : vector<2x384xf32>
    %440 = arith.truncf %403 : vector<2x128xf32> to vector<2x128xbf16>
    %cst_95 = arith.constant dense<0.000000e+00> : vector<2x384xf32>
    %441 = tpu.matmul %440, %2, %cst_95 {dimension_numbers = #tpu.dot_dimension_numbers<[1], [0], [0], [1], [0, 0, 1, 1], [], []>} : vector<2x128xbf16>, vector<128x384xbf16>, vector<2x384xf32> -> vector<2x384xf32>
    %442 = vector.extract_strided_slice %439 {offsets = [0, 0], sizes = [2, 128], strides = [1, 1]} : vector<2x384xf32> to vector<2x128xf32>
    %443 = vector.extract_strided_slice %441 {offsets = [0, 0], sizes = [2, 128], strides = [1, 1]} : vector<2x384xf32> to vector<2x128xf32>
    %444 = arith.addf %442, %443 : vector<2x128xf32>
    %445 = arith.negf %444 : vector<2x128xf32>
    %446 = math.exp %445 : vector<2x128xf32>
    %cst_96 = arith.constant 1.000000e+00 : f32
    %447 = vector.broadcast %cst_96 : f32 to vector<2x128xf32>
    %448 = arith.addf %447, %446 : vector<2x128xf32>
    %449 = arith.divf %447, %448 : vector<2x128xf32>
    %450 = vector.extract_strided_slice %439 {offsets = [0, 128], sizes = [2, 128], strides = [1, 1]} : vector<2x384xf32> to vector<2x128xf32>
    %451 = vector.extract_strided_slice %441 {offsets = [0, 128], sizes = [2, 128], strides = [1, 1]} : vector<2x384xf32> to vector<2x128xf32>
    %452 = arith.addf %450, %451 : vector<2x128xf32>
    %453 = arith.negf %452 : vector<2x128xf32>
    %454 = math.exp %453 : vector<2x128xf32>
    %cst_97 = arith.constant 1.000000e+00 : f32
    %455 = vector.broadcast %cst_97 : f32 to vector<2x128xf32>
    %456 = arith.addf %455, %454 : vector<2x128xf32>
    %457 = arith.divf %455, %456 : vector<2x128xf32>
    %458 = vector.extract_strided_slice %439 {offsets = [0, 256], sizes = [2, 128], strides = [1, 1]} : vector<2x384xf32> to vector<2x128xf32>
    %459 = vector.extract_strided_slice %441 {offsets = [0, 256], sizes = [2, 128], strides = [1, 1]} : vector<2x384xf32> to vector<2x128xf32>
    %460 = arith.addf %459, %11 : vector<2x128xf32>
    %461 = arith.mulf %449, %460 : vector<2x128xf32>
    %462 = arith.addf %458, %461 : vector<2x128xf32>
    %463 = math.tanh %462 : vector<2x128xf32>
    %cst_98 = arith.constant 1.000000e+00 : f32
    %464 = vector.broadcast %cst_98 : f32 to vector<2x128xf32>
    %465 = arith.subf %464, %457 : vector<2x128xf32>
    %466 = arith.mulf %465, %463 : vector<2x128xf32>
    %467 = arith.mulf %457, %403 : vector<2x128xf32>
    %468 = arith.addf %466, %467 : vector<2x128xf32>
    %c1_i32_99 = arith.constant 1 : i32
    %469 = arith.addi %c6_i32, %c1_i32_99 : i32
    %470 = arith.index_cast %469 : i32 to index
    %c0_100 = arith.constant 0 : index
    %c0_101 = arith.constant 0 : index
    %471 = vector.load %arg0[%470, %c0_100, %c0_101] : memref<8x2x384xf32, #tpu.memory_space<vmem>>, vector<1x2x384xf32>
    %472 = vector.shape_cast %471 : vector<1x2x384xf32> to vector<2x384xf32>
    %473 = arith.truncf %436 : vector<2x128xf32> to vector<2x128xbf16>
    %cst_102 = arith.constant dense<0.000000e+00> : vector<2x384xf32>
    %474 = tpu.matmul %473, %0, %cst_102 {dimension_numbers = #tpu.dot_dimension_numbers<[1], [0], [0], [1], [0, 0, 1, 1], [], []>} : vector<2x128xbf16>, vector<128x384xbf16>, vector<2x384xf32> -> vector<2x384xf32>
    %475 = vector.extract_strided_slice %472 {offsets = [0, 0], sizes = [2, 128], strides = [1, 1]} : vector<2x384xf32> to vector<2x128xf32>
    %476 = vector.extract_strided_slice %474 {offsets = [0, 0], sizes = [2, 128], strides = [1, 1]} : vector<2x384xf32> to vector<2x128xf32>
    %477 = arith.addf %475, %476 : vector<2x128xf32>
    %478 = arith.negf %477 : vector<2x128xf32>
    %479 = math.exp %478 : vector<2x128xf32>
    %cst_103 = arith.constant 1.000000e+00 : f32
    %480 = vector.broadcast %cst_103 : f32 to vector<2x128xf32>
    %481 = arith.addf %480, %479 : vector<2x128xf32>
    %482 = arith.divf %480, %481 : vector<2x128xf32>
    %483 = vector.extract_strided_slice %472 {offsets = [0, 128], sizes = [2, 128], strides = [1, 1]} : vector<2x384xf32> to vector<2x128xf32>
    %484 = vector.extract_strided_slice %474 {offsets = [0, 128], sizes = [2, 128], strides = [1, 1]} : vector<2x384xf32> to vector<2x128xf32>
    %485 = arith.addf %483, %484 : vector<2x128xf32>
    %486 = arith.negf %485 : vector<2x128xf32>
    %487 = math.exp %486 : vector<2x128xf32>
    %cst_104 = arith.constant 1.000000e+00 : f32
    %488 = vector.broadcast %cst_104 : f32 to vector<2x128xf32>
    %489 = arith.addf %488, %487 : vector<2x128xf32>
    %490 = arith.divf %488, %489 : vector<2x128xf32>
    %491 = vector.extract_strided_slice %472 {offsets = [0, 256], sizes = [2, 128], strides = [1, 1]} : vector<2x384xf32> to vector<2x128xf32>
    %492 = vector.extract_strided_slice %474 {offsets = [0, 256], sizes = [2, 128], strides = [1, 1]} : vector<2x384xf32> to vector<2x128xf32>
    %493 = arith.addf %492, %8 : vector<2x128xf32>
    %494 = arith.mulf %482, %493 : vector<2x128xf32>
    %495 = arith.addf %491, %494 : vector<2x128xf32>
    %496 = math.tanh %495 : vector<2x128xf32>
    %cst_105 = arith.constant 1.000000e+00 : f32
    %497 = vector.broadcast %cst_105 : f32 to vector<2x128xf32>
    %498 = arith.subf %497, %490 : vector<2x128xf32>
    %499 = arith.mulf %498, %496 : vector<2x128xf32>
    %500 = arith.mulf %490, %436 : vector<2x128xf32>
    %501 = arith.addf %499, %500 : vector<2x128xf32>
    %c7_i32 = arith.constant 7 : i32
    %502 = arith.truncf %501 : vector<2x128xf32> to vector<2x128xbf16>
    %cst_106 = arith.constant dense<0.000000e+00> : vector<2x384xf32>
    %503 = tpu.matmul %502, %1, %cst_106 {dimension_numbers = #tpu.dot_dimension_numbers<[1], [0], [0], [1], [0, 0, 1, 1], [], []>} : vector<2x128xbf16>, vector<128x384xbf16>, vector<2x384xf32> -> vector<2x384xf32>
    %504 = arith.addf %503, %5 : vector<2x384xf32>
    %505 = arith.truncf %468 : vector<2x128xf32> to vector<2x128xbf16>
    %cst_107 = arith.constant dense<0.000000e+00> : vector<2x384xf32>
    %506 = tpu.matmul %505, %2, %cst_107 {dimension_numbers = #tpu.dot_dimension_numbers<[1], [0], [0], [1], [0, 0, 1, 1], [], []>} : vector<2x128xbf16>, vector<128x384xbf16>, vector<2x384xf32> -> vector<2x384xf32>
    %507 = vector.extract_strided_slice %504 {offsets = [0, 0], sizes = [2, 128], strides = [1, 1]} : vector<2x384xf32> to vector<2x128xf32>
    %508 = vector.extract_strided_slice %506 {offsets = [0, 0], sizes = [2, 128], strides = [1, 1]} : vector<2x384xf32> to vector<2x128xf32>
    %509 = arith.addf %507, %508 : vector<2x128xf32>
    %510 = arith.negf %509 : vector<2x128xf32>
    %511 = math.exp %510 : vector<2x128xf32>
    %cst_108 = arith.constant 1.000000e+00 : f32
    %512 = vector.broadcast %cst_108 : f32 to vector<2x128xf32>
    %513 = arith.addf %512, %511 : vector<2x128xf32>
    %514 = arith.divf %512, %513 : vector<2x128xf32>
    %515 = vector.extract_strided_slice %504 {offsets = [0, 128], sizes = [2, 128], strides = [1, 1]} : vector<2x384xf32> to vector<2x128xf32>
    %516 = vector.extract_strided_slice %506 {offsets = [0, 128], sizes = [2, 128], strides = [1, 1]} : vector<2x384xf32> to vector<2x128xf32>
    %517 = arith.addf %515, %516 : vector<2x128xf32>
    %518 = arith.negf %517 : vector<2x128xf32>
    %519 = math.exp %518 : vector<2x128xf32>
    %cst_109 = arith.constant 1.000000e+00 : f32
    %520 = vector.broadcast %cst_109 : f32 to vector<2x128xf32>
    %521 = arith.addf %520, %519 : vector<2x128xf32>
    %522 = arith.divf %520, %521 : vector<2x128xf32>
    %523 = vector.extract_strided_slice %504 {offsets = [0, 256], sizes = [2, 128], strides = [1, 1]} : vector<2x384xf32> to vector<2x128xf32>
    %524 = vector.extract_strided_slice %506 {offsets = [0, 256], sizes = [2, 128], strides = [1, 1]} : vector<2x384xf32> to vector<2x128xf32>
    %525 = arith.addf %524, %11 : vector<2x128xf32>
    %526 = arith.mulf %514, %525 : vector<2x128xf32>
    %527 = arith.addf %523, %526 : vector<2x128xf32>
    %528 = math.tanh %527 : vector<2x128xf32>
    %cst_110 = arith.constant 1.000000e+00 : f32
    %529 = vector.broadcast %cst_110 : f32 to vector<2x128xf32>
    %530 = arith.subf %529, %522 : vector<2x128xf32>
    %531 = arith.mulf %530, %528 : vector<2x128xf32>
    %532 = arith.mulf %522, %468 : vector<2x128xf32>
    %533 = arith.addf %531, %532 : vector<2x128xf32>
    %c0_111 = arith.constant 0 : index
    %c0_112 = arith.constant 0 : index
    %c0_113 = arith.constant 0 : index
    %534 = vector.load %arg11[%c0_111, %c0_112, %c0_113] : memref<2x2x128xf32, #tpu.memory_space<vmem>>, vector<1x2x128xf32>
    %535 = vector.shape_cast %534 : vector<1x2x128xf32> to vector<2x128xf32>
    %536 = vector.shape_cast %501 : vector<2x128xf32> to vector<1x2x128xf32>
    tpu.vector_store %arg11[%c0_111, %c0_112, %c0_113], %536 {strides = array<i32>} : memref<2x2x128xf32, #tpu.memory_space<vmem>>, vector<1x2x128xf32>,
    %c1_114 = arith.constant 1 : index
    %c0_115 = arith.constant 0 : index
    %c0_116 = arith.constant 0 : index
    %537 = vector.load %arg11[%c1_114, %c0_115, %c0_116] : memref<2x2x128xf32, #tpu.memory_space<vmem>>, vector<1x2x128xf32>
    %538 = vector.shape_cast %537 : vector<1x2x128xf32> to vector<2x128xf32>
    %539 = vector.shape_cast %533 : vector<2x128xf32> to vector<1x2x128xf32>
    tpu.vector_store %arg11[%c1_114, %c0_115, %c0_116], %539 {strides = array<i32>} : memref<2x2x128xf32, #tpu.memory_space<vmem>>, vector<1x2x128xf32>,
    %c0_117 = arith.constant 0 : index
    %c0_118 = arith.constant 0 : index
    %540 = vector.load %arg8[%c0_117, %c0_118] : memref<128x128xf32, #tpu.memory_space<vmem>>, vector<128x128xf32>
    %cst_119 = arith.constant dense<0.000000e+00> : vector<2x128xf32>
    %541 = tpu.matmul %533, %540, %cst_119 {dimension_numbers = #tpu.dot_dimension_numbers<[1], [0], [0], [1], [0, 0, 1, 1], [], []>} : vector<2x128xf32>, vector<128x128xf32>, vector<2x128xf32> -> vector<2x128xf32>
    %c0_120 = arith.constant 0 : index
    %c0_121 = arith.constant 0 : index
    %542 = vector.load %arg9[%c0_120, %c0_121] : memref<1x128xf32, #tpu.memory_space<vmem>>, vector<1x128xf32>
    %543 = vector.broadcast %542 : vector<1x128xf32> to vector<2x128xf32>
    %544 = arith.addf %541, %543 : vector<2x128xf32>
    %c0_122 = arith.constant 0 : index
    %c0_123 = arith.constant 0 : index
    %545 = vector.load %arg10[%c0_122, %c0_123] : memref<2x128xf32, #tpu.memory_space<vmem>>, vector<2x128xf32>
    tpu.vector_store %arg10[%c0_122, %c0_123], %544 {strides = array<i32>} : memref<2x128xf32, #tpu.memory_space<vmem>>, vector<2x128xf32>,
    return
  }
}

</mosaic_0001>

<llo_original>
// kernel: gru_melodies_forward.1
$region0: #{gru_melodies_forward.1}
  #allocation0 [shape = 'u32[]', space=smem, size = 0x4, offset = 0x4, fixed_abs, tag = 'smem constant byte address 0x4 - core index']
  #allocation1 [shape = 'u32[144,128]{1,0:T(1,128)}', space=vmem, size = 0x12000, scoped, tag = 'internal scratch']
  %s0 = inlined_call_operand.vmem [shape: f32[8,2,384], index: 0, kind: input, shape index: {}]
  %s1 = inlined_call_operand.vmem [shape: f32[2,2,128], index: 1, kind: input, shape index: {}]
  %s2 = inlined_call_operand.vmem [shape: bf16[128,384], index: 2, kind: input, shape index: {}]
  %s3 = inlined_call_operand.vmem [shape: f32[1,128], index: 3, kind: input, shape index: {}]
  %s4 = inlined_call_operand.vmem [shape: bf16[128,384], index: 4, kind: input, shape index: {}]
  %s5 = inlined_call_operand.hbm [shape: f32[1,384], index: 5, kind: input, shape index: {}]
  %s6 = inlined_call_operand.hbm [shape: bf16[128,384], index: 6, kind: input, shape index: {}]
  %s7 = inlined_call_operand.vmem [shape: f32[1,128], index: 7, kind: input, shape index: {}]
  %s8 = inlined_call_operand.hbm [shape: f32[128,128], index: 8, kind: input, shape index: {}]
  %s9 = inlined_call_operand.hbm [shape: f32[1,128], index: 9, kind: input, shape index: {}]
  %s10 = inlined_call_operand.hbm [shape: f32[2,128], index: 10, kind: output, shape index: {0}]
  %s11 = inlined_call_operand.hbm [shape: f32[2,2,128], index: 11, kind: output, shape index: {1}]
  %12 = xla_tuple %s10, %s11
  %s13 = sld [smem:[#allocation0]]
  $region74: #{gru_melodies_forward.1} parent=0
    _
  %s15 = ssub.s32 1, %s13
  %s16 = scalar_select 0, %s15, %s13
  $region1: #{gru_melodies_forward.1} parent=0
    #allocation2 [shape = 'u8[1536]{0}', space=vmem, size = 0x800, scoped, tag = 'input window, operand 5, single buffered']
    #allocation3 [shape = 's32[1]{0}', space=sflag, size = 0x4, scoped, tag = 'scoped memory for gru_melodies_forward.1']
    #allocation4 [shape = 's32[1]{0}', space=sflag, size = 0x4, scoped, tag = 'scoped memory for gru_melodies_forward.1']
    #allocation5 [shape = 'u8[98304]{0}', space=vmem, size = 0x18000, scoped, tag = 'input window, operand 6, single buffered']
    #allocation6 [shape = 's32[1]{0}', space=sflag, size = 0x4, scoped, tag = 'scoped memory for gru_melodies_forward.1']
    #allocation7 [shape = 'u8[65536]{0}', space=vmem, size = 0x10000, scoped, tag = 'input window, operand 8, single buffered']
    #allocation8 [shape = 'u8[512]{0}', space=vmem, size = 0x400, scoped, tag = 'input window, operand 9, single buffered']
    #allocation9 [shape = 's32[1]{0}', space=sflag, size = 0x4, scoped, tag = 'scoped memory for gru_melodies_forward.1']
    #allocation10 [shape = 'u8[1024]{0}', space=vmem, size = 0x400, scoped, tag = 'output window, operand 0, single buffered']
    #allocation11 [shape = 'u8[2048]{0}', space=vmem, size = 0x800, scoped, tag = 'output window, operand 1, single buffered']
    #allocation12 [shape = 's32[1]{0}', space=sflag, size = 0x4, scoped, tag = 'scoped memory for gru_melodies_forward.1']
    %17 = vsyncpa [#allocation3], 0
    %18 = vsyncpa [#allocation6], 0
    %19 = vsyncpa [#allocation9], 0
    %20 = vsyncpa [#allocation4], 0
    %21 = vsyncpa [#allocation12], 0
    // Predicated region
    $region2: #{gru_melodies_forward.1} parent=1 // pred_check
      _
    $region3: #{gru_melodies_forward.1} parent=1 // pred_check_branch
      %23 = sbr.rel (0) target = $region5
    $region4: #{gru_melodies_forward.1} parent=1 // pred_region
      _
    $region5: #{gru_melodies_forward.1} parent=1 // pred_fallthru
      _
    // Predicated region
    $region6: #{gru_melodies_forward.1} parent=1 // pred_check
      _
    $region7: #{gru_melodies_forward.1} parent=1 // pred_check_branch
      %25 = sbr.rel (0) target = $region9
    $region8: #{gru_melodies_forward.1} parent=1 // pred_region
      _
    $region9: #{gru_melodies_forward.1} parent=1 // pred_fallthru
      _
    // Predicated region
    $region10: #{gru_melodies_forward.1} parent=1 // pred_check
      _
    $region11: #{gru_melodies_forward.1} parent=1 // pred_check_branch
      %27 = sbr.rel (0) target = $region13
    $region12: #{gru_melodies_forward.1} parent=1 // pred_region
      _
    $region13: #{gru_melodies_forward.1} parent=1 // pred_fallthru
      _
    // Predicated region
    $region14: #{gru_melodies_forward.1} parent=1 // pred_check
      _
    $region15: #{gru_melodies_forward.1} parent=1 // pred_check_branch
      %29 = sbr.rel (0) target = $region17
    $region16: #{gru_melodies_forward.1} parent=1 // pred_region
      _
    $region17: #{gru_melodies_forward.1} parent=1 // pred_fallthru
      _
    // Predicated region
    $region18: #{gru_melodies_forward.1} parent=1 // pred_check
      _
    $region19: #{gru_melodies_forward.1} parent=1 // pred_check_branch
      %31 = sbr.rel (0) target = $region21
    $region20: #{gru_melodies_forward.1} parent=1 // pred_region
      _
    $region21: #{gru_melodies_forward.1} parent=1 // pred_fallthru
      _
    // Predicated region
    $region22: #{gru_melodies_forward.1} parent=1 // pred_check
      _
    $region23: #{gru_melodies_forward.1} parent=1 // pred_check_branch
      %33 = sbr.rel (0) target = $region25
    $region24: #{gru_melodies_forward.1} parent=1 // pred_region
      %s35 = ssub.s32 48, 48
      %36 = vsyncadd [#allocation3], %s35
      %s38 = sshll.u32 [#allocation2], 4
      %s39 = int_to_ptr.vmem [resolvable:$true] %s38
      %41 = dma.hbm_to_vmem [thread:$0]  %s5, 48, %s39, [#allocation3]
    $region25: #{gru_melodies_forward.1} parent=1 // pred_fallthru
      _
    // Predicated region
    $region26: #{gru_melodies_forward.1} parent=1 // pred_check
      _
    $region27: #{gru_melodies_forward.1} parent=1 // pred_check_branch
      %43 = sbr.rel (0) target = $region29
    $region28: #{gru_melodies_forward.1} parent=1 // pred_region
      %s45 = ssub.s32 3072, 3072
      %46 = vsyncadd [#allocation6], %s45
      %s47 = sshll.u32 [#allocation5], 4
      %s48 = int_to_ptr.vmem [resolvable:$true] %s47
      %53 = dma.hbm_to_vmem [thread:$0]  %s6, 3072, %s48, [#allocation6], 192, 192, 12
    $region29: #{gru_melodies_forward.1} parent=1 // pred_fallthru
      _
    // Predicated region
    $region30: #{gru_melodies_forward.1} parent=1 // pred_check
      _
    $region31: #{gru_melodies_forward.1} parent=1 // pred_check_branch
      %55 = sbr.rel (0) target = $region33
    $region32: #{gru_melodies_forward.1} parent=1 // pred_region
      _
    $region33: #{gru_melodies_forward.1} parent=1 // pred_fallthru
      _
    // Predicated region
    $region34: #{gru_melodies_forward.1} parent=1 // pred_check
      _
    $region35: #{gru_melodies_forward.1} parent=1 // pred_check_branch
      %57 = sbr.rel (0) target = $region37
    $region36: #{gru_melodies_forward.1} parent=1 // pred_region
      %s59 = ssub.s32 2048, 2048
      %60 = vsyncadd [#allocation6], %s59
      %s61 = sshll.u32 [#allocation7], 4
      %s62 = int_to_ptr.vmem [resolvable:$true] %s61
      %67 = dma.hbm_to_vmem [thread:$0]  %s8, 2048, %s62, [#allocation6], 128, 128, 8
    $region37: #{gru_melodies_forward.1} parent=1 // pred_fallthru
      _
    // Predicated region
    $region38: #{gru_melodies_forward.1} parent=1 // pred_check
      _
    $region39: #{gru_melodies_forward.1} parent=1 // pred_check_branch
      %69 = sbr.rel (0) target = $region41
    $region40: #{gru_melodies_forward.1} parent=1 // pred_region
      %s71 = ssub.s32 16, 16
      %72 = vsyncadd [#allocation9], %s71
      %s74 = sshll.u32 [#allocation8], 4
      %s75 = int_to_ptr.vmem [resolvable:$true] %s74
      %77 = dma.hbm_to_vmem [thread:$0]  %s9, 16, %s75, [#allocation9]
    $region41: #{gru_melodies_forward.1} parent=1 // pred_fallthru
      _
    // Predicated region
    $region42: #{gru_melodies_forward.1} parent=1 // pred_check
      _
    $region43: #{gru_melodies_forward.1} parent=1 // pred_check_branch
      %79 = sbr.rel (0) target = $region45
    $region44: #{gru_melodies_forward.1} parent=1 // pred_region
      %80 = dma.done [#allocation3], 48
    $region45: #{gru_melodies_forward.1} parent=1 // pred_fallthru
      _
    // Predicated region
    $region46: #{gru_melodies_forward.1} parent=1 // pred_check
      _
    $region47: #{gru_melodies_forward.1} parent=1 // pred_check_branch
      %82 = sbr.rel (0) target = $region49
    $region48: #{gru_melodies_forward.1} parent=1 // pred_region
      %83 = dma.done [#allocation6], 3072
    $region49: #{gru_melodies_forward.1} parent=1 // pred_fallthru
      _
    // Predicated region
    $region50: #{gru_melodies_forward.1} parent=1 // pred_check
      _
    $region51: #{gru_melodies_forward.1} parent=1 // pred_check_branch
      %85 = sbr.rel (0) target = $region53
    $region52: #{gru_melodies_forward.1} parent=1 // pred_region
      %86 = dma.done [#allocation6], 2048
    $region53: #{gru_melodies_forward.1} parent=1 // pred_fallthru
      _
    // Predicated region
    $region54: #{gru_melodies_forward.1} parent=1 // pred_check
      _
    $region55: #{gru_melodies_forward.1} parent=1 // pred_check_branch
      %88 = sbr.rel (0) target = $region57
    $region56: #{gru_melodies_forward.1} parent=1 // pred_region
      %89 = dma.done [#allocation9], 16
    $region57: #{gru_melodies_forward.1} parent=1 // pred_fallthru
      _
    %v91 = vld [vmem:[%s2] sm:$0xff]
    %v92 = vld [vmem:[%s2 + $0x8] sm:$0xf]
    %v93 = vld [vmem:[%s2 + $0xc] sm:$0xff]
    %v94 = vld [vmem:[%s2 + $0x14] sm:$0xf]
    %v95 = vld [vmem:[%s2 + $0x18] sm:$0xff]
    %v96 = vld [vmem:[%s2 + $0x20] sm:$0xf]
    %v97 = vld [vmem:[%s2 + $0x24] sm:$0xff]
    %v98 = vld [vmem:[%s2 + $0x2c] sm:$0xf]
    %v99 = vld [vmem:[%s2 + $0x30] sm:$0xff]
    %v100 = vld [vmem:[%s2 + $0x38] sm:$0xf]
    %v101 = vld [vmem:[%s2 + $0x3c] sm:$0xff]
    %v102 = vld [vmem:[%s2 + $0x44] sm:$0xf]
    %v103 = vld [vmem:[%s2 + $0x48] sm:$0xff]
    %v104 = vld [vmem:[%s2 + $0x50] sm:$0xf]
    %v105 = vld [vmem:[%s2 + $0x54] sm:$0xff]
    %v106 = vld [vmem:[%s2 + $0x5c] sm:$0xf]
    %v107 = vld [vmem:[%s2 + $0x60] sm:$0xff]
    %v108 = vld [vmem:[%s2 + $0x68] sm:$0xf]
    %v109 = vld [vmem:[%s2 + $0x6c] sm:$0xff]
    %v110 = vld [vmem:[%s2 + $0x74] sm:$0xf]
    %v111 = vld [vmem:[%s2 + $0x78] sm:$0xff]
    %v112 = vld [vmem:[%s2 + $0x80] sm:$0xf]
    %v113 = vld [vmem:[%s2 + $0x84] sm:$0xff]
    %v114 = vld [vmem:[%s2 + $0x8c] sm:$0xf]
    %v115 = vld [vmem:[%s2 + $0x90] sm:$0xff]
    %v116 = vld [vmem:[%s2 + $0x98] sm:$0xf]
    %v117 = vld [vmem:[%s2 + $0x9c] sm:$0xff]
    %v118 = vld [vmem:[%s2 + $0xa4] sm:$0xf]
    %v119 = vld [vmem:[%s2 + $0xa8] sm:$0xff]
    %v120 = vld [vmem:[%s2 + $0xb0] sm:$0xf]
    %v121 = vld [vmem:[%s2 + $0xb4] sm:$0xff]
    %v122 = vld [vmem:[%s2 + $0xbc] sm:$0xf]
    %v123 = vld [vmem:[%s4] sm:$0xff]
    %v124 = vld [vmem:[%s4 + $0x8] sm:$0xf]
    %v125 = vld [vmem:[%s4 + $0xc] sm:$0xff]
    %v126 = vld [vmem:[%s4 + $0x14] sm:$0xf]
    %v127 = vld [vmem:[%s4 + $0x18] sm:$0xff]
    %v128 = vld [vmem:[%s4 + $0x20] sm:$0xf]
    %v129 = vld [vmem:[%s4 + $0x24] sm:$0xff]
    %v130 = vld [vmem:[%s4 + $0x2c] sm:$0xf]
    %v131 = vld [vmem:[%s4 + $0x30] sm:$0xff]
    %v132 = vld [vmem:[%s4 + $0x38] sm:$0xf]
    %v133 = vld [vmem:[%s4 + $0x3c] sm:$0xff]
    %v134 = vld [vmem:[%s4 + $0x44] sm:$0xf]
    %v135 = vld [vmem:[%s4 + $0x48] sm:$0xff]
    %v136 = vld [vmem:[%s4 + $0x50] sm:$0xf]
    %v137 = vld [vmem:[%s4 + $0x54] sm:$0xff]
    %v138 = vld [vmem:[%s4 + $0x5c] sm:$0xf]
    %v139 = vld [vmem:[%s4 + $0x60] sm:$0xff]
    %v140 = vld [vmem:[%s4 + $0x68] sm:$0xf]
    %v141 = vld [vmem:[%s4 + $0x6c] sm:$0xff]
    %v142 = vld [vmem:[%s4 + $0x74] sm:$0xf]
    %v143 = vld [vmem:[%s4 + $0x78] sm:$0xff]
    %v144 = vld [vmem:[%s4 + $0x80] sm:$0xf]
    %v145 = vld [vmem:[%s4 + $0x84] sm:$0xff]
    %v146 = vld [vmem:[%s4 + $0x8c] sm:$0xf]
    %v147 = vld [vmem:[%s4 + $0x90] sm:$0xff]
    %v148 = vld [vmem:[%s4 + $0x98] sm:$0xf]
    %v149 = vld [vmem:[%s4 + $0x9c] sm:$0xff]
    %v150 = vld [vmem:[%s4 + $0xa4] sm:$0xf]
    %v151 = vld [vmem:[%s4 + $0xa8] sm:$0xff]
    %v152 = vld [vmem:[%s4 + $0xb0] sm:$0xf]
    %v153 = vld [vmem:[%s4 + $0xb4] sm:$0xff]
    %v154 = vld [vmem:[%s4 + $0xbc] sm:$0xf]
    %v155 = vld [vmem:[#allocation5] sm:$0xff]
    %v156 = vld [vmem:[#allocation5 + $0x8] sm:$0xf]
    %v157 = vld [vmem:[#allocation5 + $0xc] sm:$0xff]
    %v158 = vld [vmem:[#allocation5 + $0x14] sm:$0xf]
    %v159 = vld [vmem:[#allocation5 + $0x18] sm:$0xff]
    %v160 = vld [vmem:[#allocation5 + $0x20] sm:$0xf]
    %v161 = vld [vmem:[#allocation5 + $0x24] sm:$0xff]
    %v162 = vld [vmem:[#allocation5 + $0x2c] sm:$0xf]
    %v163 = vld [vmem:[#allocation5 + $0x30] sm:$0xff]
    %v164 = vld [vmem:[#allocation5 + $0x38] sm:$0xf]
    %v165 = vld [vmem:[#allocation5 + $0x3c] sm:$0xff]
    %v166 = vld [vmem:[#allocation5 + $0x44] sm:$0xf]
    %v167 = vld [vmem:[#allocation5 + $0x48] sm:$0xff]
    %v168 = vld [vmem:[#allocation5 + $0x50] sm:$0xf]
    %v169 = vld [vmem:[#allocation5 + $0x54] sm:$0xff]
    %v170 = vld [vmem:[#allocation5 + $0x5c] sm:$0xf]
    %v171 = vld [vmem:[#allocation5 + $0x60] sm:$0xff]
    %v172 = vld [vmem:[#allocation5 + $0x68] sm:$0xf]
    %v173 = vld [vmem:[#allocation5 + $0x6c] sm:$0xff]
    %v174 = vld [vmem:[#allocation5 + $0x74] sm:$0xf]
    %v175 = vld [vmem:[#allocation5 + $0x78] sm:$0xff]
    %v176 = vld [vmem:[#allocation5 + $0x80] sm:$0xf]
    %v177 = vld [vmem:[#allocation5 + $0x84] sm:$0xff]
    %v178 = vld [vmem:[#allocation5 + $0x8c] sm:$0xf]
    %v179 = vld [vmem:[#allocation5 + $0x90] sm:$0xff]
    %v180 = vld [vmem:[#allocation5 + $0x98] sm:$0xf]
    %v181 = vld [vmem:[#allocation5 + $0x9c] sm:$0xff]
    %v182 = vld [vmem:[#allocation5 + $0xa4] sm:$0xf]
    %v183 = vld [vmem:[#allocation5 + $0xa8] sm:$0xff]
    %v184 = vld [vmem:[#allocation5 + $0xb0] sm:$0xf]
    %v185 = vld [vmem:[#allocation5 + $0xb4] sm:$0xff]
    %v186 = vld [vmem:[#allocation5 + $0xbc] sm:$0xf]
    %v187 = vld [vmem:[#allocation2] sm:$0x7]
    %v189 = vlaneseq
    %v190 = vshrl.u32 %v189, 7
    %v191 = vsub.s32 0, %v190
    %v192 = vrot.slane %v187, %v191
    %v193 = vlaneseq
    %v194 = vshrl.u32 %v193, 7
    %v195 = vsub.s32 1, %v194
    %v196 = vrot.slane %v187, %v195
    %v197 = vlaneseq
    %v198 = vshrl.u32 %v197, 7
    %v199 = vsub.s32 2, %v198
    %v200 = vrot.slane %v187, %v199
    %v204 = vld [vmem:[%s3] sm:$0x1]
    %v206 = vlaneseq
    %v207 = vshrl.u32 %v206, 7
    %v208 = vsub.s32 0, %v207
    %v209 = vrot.slane %v204, %v208
    %v211 = vld [vmem:[%s7] sm:$0x1]
    %v213 = vlaneseq
    %v214 = vshrl.u32 %v213, 7
    %v215 = vsub.s32 0, %v214
    %v216 = vrot.slane %v211, %v215
    %s218 = scalar_lea.vmem %s1, 2
    %v219 = vld [vmem:[%s218] sm:$0x3]
    %v220 = vld [vmem:[%s1] sm:$0x3]
    %v221 = vld [vmem:[%s0] sm:$0x3f]
    %v222 = vpack.c.bf16 %v220, %v220
    %v255 = vunpack.c.l.b16 %v91
    %v256 = vunpack.c.h.b16 %v91
    %v257 = vunpack.c.l.b16 %v92
    %v258 = vunpack.c.l.b16 %v93
    %v259 = vunpack.c.h.b16 %v93
    %v260 = vunpack.c.l.b16 %v94
    %v261 = vunpack.c.l.b16 %v95
    %v262 = vunpack.c.h.b16 %v95
    %v263 = vunpack.c.l.b16 %v96
    %v264 = vunpack.c.l.b16 %v97
    %v265 = vunpack.c.h.b16 %v97
    %v266 = vunpack.c.l.b16 %v98
    %v267 = vunpack.c.l.b16 %v99
    %v268 = vunpack.c.h.b16 %v99
    %v269 = vunpack.c.l.b16 %v100
    %v270 = vunpack.c.l.b16 %v101
    %v271 = vunpack.c.h.b16 %v101
    %v272 = vunpack.c.l.b16 %v102
    %v273 = vunpack.c.l.b16 %v103
    %v274 = vunpack.c.h.b16 %v103
    %v275 = vunpack.c.l.b16 %v104
    %v276 = vunpack.c.l.b16 %v105
    %v277 = vunpack.c.h.b16 %v105
    %v278 = vunpack.c.l.b16 %v106
    %v279 = vunpack.c.l.b16 %v107
    %v280 = vunpack.c.h.b16 %v107
    %v281 = vunpack.c.l.b16 %v108
    %v282 = vunpack.c.l.b16 %v109
    %v283 = vunpack.c.h.b16 %v109
    %v284 = vunpack.c.l.b16 %v110
    %v285 = vunpack.c.l.b16 %v111
    %v286 = vunpack.c.h.b16 %v111
    %v287 = vunpack.c.l.b16 %v112
    %v288 = vunpack.c.l.b16 %v113
    %v289 = vunpack.c.h.b16 %v113
    %v290 = vunpack.c.l.b16 %v114
    %v291 = vunpack.c.l.b16 %v115
    %v292 = vunpack.c.h.b16 %v115
    %v293 = vunpack.c.l.b16 %v116
    %v294 = vunpack.c.l.b16 %v117
    %v295 = vunpack.c.h.b16 %v117
    %v296 = vunpack.c.l.b16 %v118
    %v297 = vunpack.c.l.b16 %v119
    %v298 = vunpack.c.h.b16 %v119
    %v299 = vunpack.c.l.b16 %v120
    %v300 = vunpack.c.l.b16 %v121
    %v301 = vunpack.c.h.b16 %v121
    %v302 = vunpack.c.l.b16 %v122
    %v303 = vpack.c.b16 %v258, %v255
    %v304 = vpack.c.b16 %v259, %v256
    %v305 = vpack.c.b16 %v260, %v257
    %v306 = vpack.c.b16 %v264, %v261
    %v307 = vpack.c.b16 %v265, %v262
    %v308 = vpack.c.b16 %v266, %v263
    %v309 = vpack.c.b16 %v270, %v267
    %v310 = vpack.c.b16 %v271, %v268
    %v311 = vpack.c.b16 %v272, %v269
    %v312 = vpack.c.b16 %v276, %v273
    %v313 = vpack.c.b16 %v277, %v274
    %v314 = vpack.c.b16 %v278, %v275
    %v315 = vpack.c.b16 %v282, %v279
    %v316 = vpack.c.b16 %v283, %v280
    %v317 = vpack.c.b16 %v284, %v281
    %v318 = vpack.c.b16 %v288, %v285
    %v319 = vpack.c.b16 %v289, %v286
    %v320 = vpack.c.b16 %v290, %v287
    %v321 = vpack.c.b16 %v294, %v291
    %v322 = vpack.c.b16 %v295, %v292
    %v323 = vpack.c.b16 %v296, %v293
    %v324 = vpack.c.b16 %v300, %v297
    %v325 = vpack.c.b16 %v301, %v298
    %v326 = vpack.c.b16 %v302, %v299
    %351 = vmatprep.subr.bf16.mxu0 %v325
    %352 = vmatpush1.bf16.msra.mxu0 %v324
    %353 = vmatprep.subr.bf16.mxu0 %v322
    %354 = vmatpush1.bf16.msra.mxu0 %v321
    %355 = vmatprep.subr.bf16.mxu0 %v319
    %356 = vmatpush1.bf16.msra.mxu0 %v318
    %357 = vmatprep.subr.bf16.mxu0 %v316
    %358 = vmatpush1.bf16.msra.mxu0 %v315
    %359 = vmatprep.subr.bf16.mxu0 %v313
    %360 = vmatpush1.bf16.msra.mxu0 %v312
    %361 = vmatprep.subr.bf16.mxu0 %v310
    %362 = vmatpush1.bf16.msra.mxu0 %v309
    %363 = vmatprep.subr.bf16.mxu0 %v307
    %364 = vmatpush1.bf16.msra.mxu0 %v306
    %365 = vmatprep.subr.bf16.mxu0 %v304
    %366 = vmatpush1.bf16.msra.mxu0 %v303
    %367 = vmatprep.subr.bf16.mxu0 0
    %368 = vmatpush2.bf16.msra.mxu0 0
    %369 = vmatprep.subr.bf16.mxu0 0
    %370 = vmatpush2.bf16.msra.mxu0 0
    %371 = vmatprep.subr.bf16.mxu0 0
    %372 = vmatpush2.bf16.msra.mxu0 0
    %373 = vmatprep.subr.bf16.mxu0 0
    %374 = vmatpush2.bf16.msra.mxu0 0
    %375 = vmatprep.subr.bf16.mxu0 0
    %376 = vmatpush2.bf16.msra.mxu0 0
    %377 = vmatprep.subr.bf16.mxu0 0
    %378 = vmatpush2.bf16.msra.mxu0 0
    %379 = vmatprep.subr.bf16.mxu0 0
    %380 = vmatpush2.bf16.msra.mxu0 0
    %381 = vmatprep.subr.bf16.mxu0 0
    %382 = vmatpush2.bf16.msra.mxu0 0
    %383 = vmatprep.mubr.bf16.mxu0 0
    %384 = vmatmul.mubr.bf16.gmra.mxu0 %v222
    %v385 = vpop.f32.mrf.mxu0
    %v386 = vadd.f32 0.0, %v385
    %v387 = vpop.f32.mrf.mxu0
    %v388 = vadd.f32 0.0, %v387
    %v389 = vpop.f32.mrf.mxu0
    %v390 = vpop.f32.mrf.mxu0
    %391 = vdwg.mxu0
    %392 = vmatprep.subr.bf16.mxu0 0
    %393 = vmatpush1.bf16.msra.mxu0 %v326
    %394 = vmatprep.subr.bf16.mxu0 0
    %395 = vmatpush1.bf16.msra.mxu0 %v323
    %396 = vmatprep.subr.bf16.mxu0 0
    %397 = vmatpush1.bf16.msra.mxu0 %v320
    %398 = vmatprep.subr.bf16.mxu0 0
    %399 = vmatpush1.bf16.msra.mxu0 %v317
    %400 = vmatprep.subr.bf16.mxu0 0
    %401 = vmatpush1.bf16.msra.mxu0 %v314
    %402 = vmatprep.subr.bf16.mxu0 0
    %403 = vmatpush1.bf16.msra.mxu0 %v311
    %404 = vmatprep.subr.bf16.mxu0 0
    %405 = vmatpush1.bf16.msra.mxu0 %v308
    %406 = vmatprep.subr.bf16.mxu0 0
    %407 = vmatpush1.bf16.msra.mxu0 %v305
    %408 = vmatprep.subr.bf16.mxu0 0
    %409 = vmatpush2.bf16.msra.mxu0 0
    %410 = vmatprep.subr.bf16.mxu0 0
    %411 = vmatpush2.bf16.msra.mxu0 0
    %412 = vmatprep.subr.bf16.mxu0 0
    %413 = vmatpush2.bf16.msra.mxu0 0
    %414 = vmatprep.subr.bf16.mxu0 0
    %415 = vmatpush2.bf16.msra.mxu0 0
    %416 = vmatprep.subr.bf16.mxu0 0
    %417 = vmatpush2.bf16.msra.mxu0 0
    %418 = vmatprep.subr.bf16.mxu0 0
    %419 = vmatpush2.bf16.msra.mxu0 0
    %420 = vmatprep.subr.bf16.mxu0 0
    %421 = vmatpush2.bf16.msra.mxu0 0
    %422 = vmatprep.subr.bf16.mxu0 0
    %423 = vmatpush2.bf16.msra.mxu0 0
    %424 = vmatprep.mubr.bf16.mxu0 0
    %425 = vmatmul.mubr.bf16.gmra.mxu0 %v222
    %v426 = vpop.f32.mrf.mxu0
    %v427 = vadd.f32 0.0, %v426
    %v428 = vpop.f32.mrf.mxu0
    %v429 = vpop.f32.mrf.mxu0
    %v430 = vpop.f32.mrf.mxu0
    %431 = vdwg.mxu0
    %v432 = vadd.f32 %v221, %v386
    %v433 = vxor.u32 %v432, 2147483648
    %v434 = vmul.f32 %v433, 1.442695
    %v435 = vpow.pop %v434
    %v436 = vadd.f32 %v435, 1.0
    %v437 = vrcp.pop %v436
    %v438 = vmul.f32 1.0, %v437
    %v440 = vrot.slane %v221, 2
    %v442 = vadd.f32 %v440, %v388
    %v443 = vxor.u32 %v442, 2147483648
    %v444 = vmul.f32 %v443, 1.442695
    %v445 = vpow.pop %v444
    %v446 = vadd.f32 %v445, 1.0
    %v447 = vrcp.pop %v446
    %v448 = vmul.f32 1.0, %v447
    %v449 = vadd.f32 %v427, %v209
    %v450 = vmul.f32 %v438, %v449
    %v451 = vrot.slane %v221, 4
    %v453 = vadd.f32 %v451, %v450
    %v454 = vtanh.pop %v453
    %v455 = vsub.f32 1.0, %v448
    %v456 = vmul.f32 %v455, %v454
    %v457 = vmul.f32 %v448, %v220
    %v458 = vadd.f32 %v456, %v457
    %v459 = vpack.c.bf16 %v458, %v458
    %v492 = vunpack.c.l.b16 %v123
    %v493 = vunpack.c.h.b16 %v123
    %v494 = vunpack.c.l.b16 %v124
    %v495 = vunpack.c.l.b16 %v125
    %v496 = vunpack.c.h.b16 %v125
    %v497 = vunpack.c.l.b16 %v126
    %v498 = vunpack.c.l.b16 %v127
    %v499 = vunpack.c.h.b16 %v127
    %v500 = vunpack.c.l.b16 %v128
    %v501 = vunpack.c.l.b16 %v129
    %v502 = vunpack.c.h.b16 %v129
    %v503 = vunpack.c.l.b16 %v130
    %v504 = vunpack.c.l.b16 %v131
    %v505 = vunpack.c.h.b16 %v131
    %v506 = vunpack.c.l.b16 %v132
    %v507 = vunpack.c.l.b16 %v133
    %v508 = vunpack.c.h.b16 %v133
    %v509 = vunpack.c.l.b16 %v134
    %v510 = vunpack.c.l.b16 %v135
    %v511 = vunpack.c.h.b16 %v135
    %v512 = vunpack.c.l.b16 %v136
    %v513 = vunpack.c.l.b16 %v137
    %v514 = vunpack.c.h.b16 %v137
    %v515 = vunpack.c.l.b16 %v138
    %v516 = vunpack.c.l.b16 %v139
    %v517 = vunpack.c.h.b16 %v139
    %v518 = vunpack.c.l.b16 %v140
    %v519 = vunpack.c.l.b16 %v141
    %v520 = vunpack.c.h.b16 %v141
    %v521 = vunpack.c.l.b16 %v142
    %v522 = vunpack.c.l.b16 %v143
    %v523 = vunpack.c.h.b16 %v143
    %v524 = vunpack.c.l.b16 %v144
    %v525 = vunpack.c.l.b16 %v145
    %v526 = vunpack.c.h.b16 %v145
    %v527 = vunpack.c.l.b16 %v146
    %v528 = vunpack.c.l.b16 %v147
    %v529 = vunpack.c.h.b16 %v147
    %v530 = vunpack.c.l.b16 %v148
    %v531 = vunpack.c.l.b16 %v149
    %v532 = vunpack.c.h.b16 %v149
    %v533 = vunpack.c.l.b16 %v150
    %v534 = vunpack.c.l.b16 %v151
    %v535 = vunpack.c.h.b16 %v151
    %v536 = vunpack.c.l.b16 %v152
    %v537 = vunpack.c.l.b16 %v153
    %v538 = vunpack.c.h.b16 %v153
    %v539 = vunpack.c.l.b16 %v154
    %v540 = vpack.c.b16 %v495, %v492
    %v541 = vpack.c.b16 %v496, %v493
    %v542 = vpack.c.b16 %v497, %v494
    %v543 = vpack.c.b16 %v501, %v498
    %v544 = vpack.c.b16 %v502, %v499
    %v545 = vpack.c.b16 %v503, %v500
    %v546 = vpack.c.b16 %v507, %v504
    %v547 = vpack.c.b16 %v508, %v505
    %v548 = vpack.c.b16 %v509, %v506
    %v549 = vpack.c.b16 %v513, %v510
    %v550 = vpack.c.b16 %v514, %v511
    %v551 = vpack.c.b16 %v515, %v512
    %v552 = vpack.c.b16 %v519, %v516
    %v553 = vpack.c.b16 %v520, %v517
    %v554 = vpack.c.b16 %v521, %v518
    %v555 = vpack.c.b16 %v525, %v522
    %v556 = vpack.c.b16 %v526, %v523
    %v557 = vpack.c.b16 %v527, %v524
    %v558 = vpack.c.b16 %v531, %v528
    %v559 = vpack.c.b16 %v532, %v529
    %v560 = vpack.c.b16 %v533, %v530
    %v561 = vpack.c.b16 %v537, %v534
    %v562 = vpack.c.b16 %v538, %v535
    %v563 = vpack.c.b16 %v539, %v536
    %588 = vmatprep.subr.bf16.mxu0 %v562
    %589 = vmatpush1.bf16.msra.mxu0 %v561
    %590 = vmatprep.subr.bf16.mxu0 %v559
    %591 = vmatpush1.bf16.msra.mxu0 %v558
    %592 = vmatprep.subr.bf16.mxu0 %v556
    %593 = vmatpush1.bf16.msra.mxu0 %v555
    %594 = vmatprep.subr.bf16.mxu0 %v553
    %595 = vmatpush1.bf16.msra.mxu0 %v552
    %596 = vmatprep.subr.bf16.mxu0 %v550
    %597 = vmatpush1.bf16.msra.mxu0 %v549
    %598 = vmatprep.subr.bf16.mxu0 %v547
    %599 = vmatpush1.bf16.msra.mxu0 %v546
    %600 = vmatprep.subr.bf16.mxu0 %v544
    %601 = vmatpush1.bf16.msra.mxu0 %v543
    %602 = vmatprep.subr.bf16.mxu0 %v541
    %603 = vmatpush1.bf16.msra.mxu0 %v540
    %604 = vmatprep.subr.bf16.mxu0 0
    %605 = vmatpush2.bf16.msra.mxu0 0
    %606 = vmatprep.subr.bf16.mxu0 0
    %607 = vmatpush2.bf16.msra.mxu0 0
    %608 = vmatprep.subr.bf16.mxu0 0
    %609 = vmatpush2.bf16.msra.mxu0 0
    %610 = vmatprep.subr.bf16.mxu0 0
    %611 = vmatpush2.bf16.msra.mxu0 0
    %612 = vmatprep.subr.bf16.mxu0 0
    %613 = vmatpush2.bf16.msra.mxu0 0
    %614 = vmatprep.subr.bf16.mxu0 0
    %615 = vmatpush2.bf16.msra.mxu0 0
    %616 = vmatprep.subr.bf16.mxu0 0
    %617 = vmatpush2.bf16.msra.mxu0 0
    %618 = vmatprep.subr.bf16.mxu0 0
    %619 = vmatpush2.bf16.msra.mxu0 0
    %620 = vmatprep.mubr.bf16.mxu0 0
    %621 = vmatmul.mubr.bf16.gmra.mxu0 %v459
    %v622 = vpop.f32.mrf.mxu0
    %v623 = vadd.f32 %v192, %v622
    %v624 = vpop.f32.mrf.mxu0
    %v625 = vadd.f32 %v196, %v624
    %v626 = vpop.f32.mrf.mxu0
    %v627 = vpop.f32.mrf.mxu0
    %628 = vdwg.mxu0
    %629 = vmatprep.subr.bf16.mxu0 0
    %630 = vmatpush1.bf16.msra.mxu0 %v563
    %631 = vmatprep.subr.bf16.mxu0 0
    %632 = vmatpush1.bf16.msra.mxu0 %v560
    %633 = vmatprep.subr.bf16.mxu0 0
    %634 = vmatpush1.bf16.msra.mxu0 %v557
    %635 = vmatprep.subr.bf16.mxu0 0
    %636 = vmatpush1.bf16.msra.mxu0 %v554
    %637 = vmatprep.subr.bf16.mxu0 0
    %638 = vmatpush1.bf16.msra.mxu0 %v551
    %639 = vmatprep.subr.bf16.mxu0 0
    %640 = vmatpush1.bf16.msra.mxu0 %v548
    %641 = vmatprep.subr.bf16.mxu0 0
    %642 = vmatpush1.bf16.msra.mxu0 %v545
    %643 = vmatprep.subr.bf16.mxu0 0
    %644 = vmatpush1.bf16.msra.mxu0 %v542
    %645 = vmatprep.subr.bf16.mxu0 0
    %646 = vmatpush2.bf16.msra.mxu0 0
    %647 = vmatprep.subr.bf16.mxu0 0
    %648 = vmatpush2.bf16.msra.mxu0 0
    %649 = vmatprep.subr.bf16.mxu0 0
    %650 = vmatpush2.bf16.msra.mxu0 0
    %651 = vmatprep.subr.bf16.mxu0 0
    %652 = vmatpush2.bf16.msra.mxu0 0
    %653 = vmatprep.subr.bf16.mxu0 0
    %654 = vmatpush2.bf16.msra.mxu0 0
    %655 = vmatprep.subr.bf16.mxu0 0
    %656 = vmatpush2.bf16.msra.mxu0 0
    %657 = vmatprep.subr.bf16.mxu0 0
    %658 = vmatpush2.bf16.msra.mxu0 0
    %659 = vmatprep.subr.bf16.mxu0 0
    %660 = vmatpush2.bf16.msra.mxu0 0
    %661 = vmatprep.mubr.bf16.mxu0 0
    %662 = vmatmul.mubr.bf16.gmra.mxu0 %v459
    %v663 = vpop.f32.mrf.mxu0
    %v664 = vadd.f32 %v200, %v663
    %v665 = vpop.f32.mrf.mxu0
    %v666 = vpop.f32.mrf.mxu0
    %v667 = vpop.f32.mrf.mxu0
    %668 = vdwg.mxu0
    %v669 = vpack.c.bf16 %v219, %v219
    %v702 = vunpack.c.l.b16 %v155
    %v703 = vunpack.c.h.b16 %v155
    %v704 = vunpack.c.l.b16 %v156
    %v705 = vunpack.c.l.b16 %v157
    %v706 = vunpack.c.h.b16 %v157
    %v707 = vunpack.c.l.b16 %v158
    %v708 = vunpack.c.l.b16 %v159
    %v709 = vunpack.c.h.b16 %v159
    %v710 = vunpack.c.l.b16 %v160
    %v711 = vunpack.c.l.b16 %v161
    %v712 = vunpack.c.h.b16 %v161
    %v713 = vunpack.c.l.b16 %v162
    %v714 = vunpack.c.l.b16 %v163
    %v715 = vunpack.c.h.b16 %v163
    %v716 = vunpack.c.l.b16 %v164
    %v717 = vunpack.c.l.b16 %v165
    %v718 = vunpack.c.h.b16 %v165
    %v719 = vunpack.c.l.b16 %v166
    %v720 = vunpack.c.l.b16 %v167
    %v721 = vunpack.c.h.b16 %v167
    %v722 = vunpack.c.l.b16 %v168
    %v723 = vunpack.c.l.b16 %v169
    %v724 = vunpack.c.h.b16 %v169
    %v725 = vunpack.c.l.b16 %v170
    %v726 = vunpack.c.l.b16 %v171
    %v727 = vunpack.c.h.b16 %v171
    %v728 = vunpack.c.l.b16 %v172
    %v729 = vunpack.c.l.b16 %v173
    %v730 = vunpack.c.h.b16 %v173
    %v731 = vunpack.c.l.b16 %v174
    %v732 = vunpack.c.l.b16 %v175
    %v733 = vunpack.c.h.b16 %v175
    %v734 = vunpack.c.l.b16 %v176
    %v735 = vunpack.c.l.b16 %v177
    %v736 = vunpack.c.h.b16 %v177
    %v737 = vunpack.c.l.b16 %v178
    %v738 = vunpack.c.l.b16 %v179
    %v739 = vunpack.c.h.b16 %v179
    %v740 = vunpack.c.l.b16 %v180
    %v741 = vunpack.c.l.b16 %v181
    %v742 = vunpack.c.h.b16 %v181
    %v743 = vunpack.c.l.b16 %v182
    %v744 = vunpack.c.l.b16 %v183
    %v745 = vunpack.c.h.b16 %v183
    %v746 = vunpack.c.l.b16 %v184
    %v747 = vunpack.c.l.b16 %v185
    %v748 = vunpack.c.h.b16 %v185
    %v749 = vunpack.c.l.b16 %v186
    %v750 = vpack.c.b16 %v705, %v702
    %v751 = vpack.c.b16 %v706, %v703
    %v752 = vpack.c.b16 %v707, %v704
    %v753 = vpack.c.b16 %v711, %v708
    %v754 = vpack.c.b16 %v712, %v709
    %v755 = vpack.c.b16 %v713, %v710
    %v756 = vpack.c.b16 %v717, %v714
    %v757 = vpack.c.b16 %v718, %v715
    %v758 = vpack.c.b16 %v719, %v716
    %v759 = vpack.c.b16 %v723, %v720
    %v760 = vpack.c.b16 %v724, %v721
    %v761 = vpack.c.b16 %v725, %v722
    %v762 = vpack.c.b16 %v729, %v726
    %v763 = vpack.c.b16 %v730, %v727
    %v764 = vpack.c.b16 %v731, %v728
    %v765 = vpack.c.b16 %v735, %v732
    %v766 = vpack.c.b16 %v736, %v733
    %v767 = vpack.c.b16 %v737, %v734
    %v768 = vpack.c.b16 %v741, %v738
    %v769 = vpack.c.b16 %v742, %v739
    %v770 = vpack.c.b16 %v743, %v740
    %v771 = vpack.c.b16 %v747, %v744
    %v772 = vpack.c.b16 %v748, %v745
    %v773 = vpack.c.b16 %v749, %v746
    %798 = vmatprep.subr.bf16.mxu0 %v772
    %799 = vmatpush1.bf16.msra.mxu0 %v771
    %800 = vmatprep.subr.bf16.mxu0 %v769
    %801 = vmatpush1.bf16.msra.mxu0 %v768
    %802 = vmatprep.subr.bf16.mxu0 %v766
    %803 = vmatpush1.bf16.msra.mxu0 %v765
    %804 = vmatprep.subr.bf16.mxu0 %v763
    %805 = vmatpush1.bf16.msra.mxu0 %v762
    %806 = vmatprep.subr.bf16.mxu0 %v760
    %807 = vmatpush1.bf16.msra.mxu0 %v759
    %808 = vmatprep.subr.bf16.mxu0 %v757
    %809 = vmatpush1.bf16.msra.mxu0 %v756
    %810 = vmatprep.subr.bf16.mxu0 %v754
    %811 = vmatpush1.bf16.msra.mxu0 %v753
    %812 = vmatprep.subr.bf16.mxu0 %v751
    %813 = vmatpush1.bf16.msra.mxu0 %v750
    %814 = vmatprep.subr.bf16.mxu0 0
    %815 = vmatpush2.bf16.msra.mxu0 0
    %816 = vmatprep.subr.bf16.mxu0 0
    %817 = vmatpush2.bf16.msra.mxu0 0
    %818 = vmatprep.subr.bf16.mxu0 0
    %819 = vmatpush2.bf16.msra.mxu0 0
    %820 = vmatprep.subr.bf16.mxu0 0
    %821 = vmatpush2.bf16.msra.mxu0 0
    %822 = vmatprep.subr.bf16.mxu0 0
    %823 = vmatpush2.bf16.msra.mxu0 0
    %824 = vmatprep.subr.bf16.mxu0 0
    %825 = vmatpush2.bf16.msra.mxu0 0
    %826 = vmatprep.subr.bf16.mxu0 0
    %827 = vmatpush2.bf16.msra.mxu0 0
    %828 = vmatprep.subr.bf16.mxu0 0
    %829 = vmatpush2.bf16.msra.mxu0 0
    %830 = vmatprep.mubr.bf16.mxu0 0
    %831 = vmatmul.mubr.bf16.gmra.mxu0 %v669
    %v832 = vpop.f32.mrf.mxu0
    %v833 = vadd.f32 0.0, %v832
    %v834 = vpop.f32.mrf.mxu0
    %v835 = vadd.f32 0.0, %v834
    %v836 = vpop.f32.mrf.mxu0
    %v837 = vpop.f32.mrf.mxu0
    %838 = vdwg.mxu0
    %839 = vmatprep.subr.bf16.mxu0 0
    %840 = vmatpush1.bf16.msra.mxu0 %v773
    %841 = vmatprep.subr.bf16.mxu0 0
    %842 = vmatpush1.bf16.msra.mxu0 %v770
    %843 = vmatprep.subr.bf16.mxu0 0
    %844 = vmatpush1.bf16.msra.mxu0 %v767
    %845 = vmatprep.subr.bf16.mxu0 0
    %846 = vmatpush1.bf16.msra.mxu0 %v764
    %847 = vmatprep.subr.bf16.mxu0 0
    %848 = vmatpush1.bf16.msra.mxu0 %v761
    %849 = vmatprep.subr.bf16.mxu0 0
    %850 = vmatpush1.bf16.msra.mxu0 %v758
    %851 = vmatprep.subr.bf16.mxu0 0
    %852 = vmatpush1.bf16.msra.mxu0 %v755
    %853 = vmatprep.subr.bf16.mxu0 0
    %854 = vmatpush1.bf16.msra.mxu0 %v752
    %855 = vmatprep.subr.bf16.mxu0 0
    %856 = vmatpush2.bf16.msra.mxu0 0
    %857 = vmatprep.subr.bf16.mxu0 0
    %858 = vmatpush2.bf16.msra.mxu0 0
    %859 = vmatprep.subr.bf16.mxu0 0
    %860 = vmatpush2.bf16.msra.mxu0 0
    %861 = vmatprep.subr.bf16.mxu0 0
    %862 = vmatpush2.bf16.msra.mxu0 0
    %863 = vmatprep.subr.bf16.mxu0 0
    %864 = vmatpush2.bf16.msra.mxu0 0
    %865 = vmatprep.subr.bf16.mxu0 0
    %866 = vmatpush2.bf16.msra.mxu0 0
    %867 = vmatprep.subr.bf16.mxu0 0
    %868 = vmatpush2.bf16.msra.mxu0 0
    %869 = vmatprep.subr.bf16.mxu0 0
    %870 = vmatpush2.bf16.msra.mxu0 0
    %871 = vmatprep.mubr.bf16.mxu0 0
    %872 = vmatmul.mubr.bf16.gmra.mxu0 %v669
    %v873 = vpop.f32.mrf.mxu0
    %v874 = vadd.f32 0.0, %v873
    %v875 = vpop.f32.mrf.mxu0
    %v876 = vpop.f32.mrf.mxu0
    %v877 = vpop.f32.mrf.mxu0
    %878 = vdwg.mxu0
    %v879 = vadd.f32 %v623, %v833
    %v880 = vxor.u32 %v879, 2147483648
    %v881 = vmul.f32 %v880, 1.442695
    %v882 = vpow.pop %v881
    %v883 = vadd.f32 %v882, 1.0
    %v884 = vrcp.pop %v883
    %v885 = vmul.f32 1.0, %v884
    %v886 = vadd.f32 %v625, %v835
    %v887 = vxor.u32 %v886, 2147483648
    %v888 = vmul.f32 %v887, 1.442695
    %v889 = vpow.pop %v888
    %v890 = vadd.f32 %v889, 1.0
    %v891 = vrcp.pop %v890
    %v892 = vmul.f32 1.0, %v891
    %v893 = vadd.f32 %v874, %v216
    %v894 = vmul.f32 %v885, %v893
    %v895 = vadd.f32 %v664, %v894
    %v896 = vtanh.pop %v895
    %v897 = vsub.f32 1.0, %v892
    %v898 = vmul.f32 %v897, %v896
    %v899 = vmul.f32 %v892, %v219
    %v900 = vadd.f32 %v898, %v899
    %s901 = scalar_lea.vmem %s0, 6
    %v902 = vld [vmem:[%s901] sm:$0x3f]
    %903 = vmatprep.subr.bf16.mxu0 %v325
    %904 = vmatpush1.bf16.msra.mxu0 %v324
    %905 = vmatprep.subr.bf16.mxu0 %v322
    %906 = vmatpush1.bf16.msra.mxu0 %v321
    %907 = vmatprep.subr.bf16.mxu0 %v319
    %908 = vmatpush1.bf16.msra.mxu0 %v318
    %909 = vmatprep.subr.bf16.mxu0 %v316
    %910 = vmatpush1.bf16.msra.mxu0 %v315
    %911 = vmatprep.subr.bf16.mxu0 %v313
    %912 = vmatpush1.bf16.msra.mxu0 %v312
    %913 = vmatprep.subr.bf16.mxu0 %v310
    %914 = vmatpush1.bf16.msra.mxu0 %v309
    %915 = vmatprep.subr.bf16.mxu0 %v307
    %916 = vmatpush1.bf16.msra.mxu0 %v306
    %917 = vmatprep.subr.bf16.mxu0 %v304
    %918 = vmatpush1.bf16.msra.mxu0 %v303
    %919 = vmatprep.subr.bf16.mxu0 0
    %920 = vmatpush2.bf16.msra.mxu0 0
    %921 = vmatprep.subr.bf16.mxu0 0
    %922 = vmatpush2.bf16.msra.mxu0 0
    %923 = vmatprep.subr.bf16.mxu0 0
    %924 = vmatpush2.bf16.msra.mxu0 0
    %925 = vmatprep.subr.bf16.mxu0 0
    %926 = vmatpush2.bf16.msra.mxu0 0
    %927 = vmatprep.subr.bf16.mxu0 0
    %928 = vmatpush2.bf16.msra.mxu0 0
    %929 = vmatprep.subr.bf16.mxu0 0
    %930 = vmatpush2.bf16.msra.mxu0 0
    %931 = vmatprep.subr.bf16.mxu0 0
    %932 = vmatpush2.bf16.msra.mxu0 0
    %933 = vmatprep.subr.bf16.mxu0 0
    %934 = vmatpush2.bf16.msra.mxu0 0
    %935 = vmatprep.mubr.bf16.mxu0 0
    %936 = vmatmul.mubr.bf16.gmra.mxu0 %v459
    %v937 = vpop.f32.mrf.mxu0
    %v938 = vadd.f32 0.0, %v937
    %v939 = vpop.f32.mrf.mxu0
    %v940 = vadd.f32 0.0, %v939
    %v941 = vpop.f32.mrf.mxu0
    %v942 = vpop.f32.mrf.mxu0
    %943 = vdwg.mxu0
    %944 = vmatprep.subr.bf16.mxu0 0
    %945 = vmatpush1.bf16.msra.mxu0 %v326
    %946 = vmatprep.subr.bf16.mxu0 0
    %947 = vmatpush1.bf16.msra.mxu0 %v323
    %948 = vmatprep.subr.bf16.mxu0 0
    %949 = vmatpush1.bf16.msra.mxu0 %v320
    %950 = vmatprep.subr.bf16.mxu0 0
    %951 = vmatpush1.bf16.msra.mxu0 %v317
    %952 = vmatprep.subr.bf16.mxu0 0
    %953 = vmatpush1.bf16.msra.mxu0 %v314
    %954 = vmatprep.subr.bf16.mxu0 0
    %955 = vmatpush1.bf16.msra.mxu0 %v311
    %956 = vmatprep.subr.bf16.mxu0 0
    %957 = vmatpush1.bf16.msra.mxu0 %v308
    %958 = vmatprep.subr.bf16.mxu0 0
    %959 = vmatpush1.bf16.msra.mxu0 %v305
    %960 = vmatprep.subr.bf16.mxu0 0
    %961 = vmatpush2.bf16.msra.mxu0 0
    %962 = vmatprep.subr.bf16.mxu0 0
    %963 = vmatpush2.bf16.msra.mxu0 0
    %964 = vmatprep.subr.bf16.mxu0 0
    %965 = vmatpush2.bf16.msra.mxu0 0
    %966 = vmatprep.subr.bf16.mxu0 0
    %967 = vmatpush2.bf16.msra.mxu0 0
    %968 = vmatprep.subr.bf16.mxu0 0
    %969 = vmatpush2.bf16.msra.mxu0 0
    %970 = vmatprep.subr.bf16.mxu0 0
    %971 = vmatpush2.bf16.msra.mxu0 0
    %972 = vmatprep.subr.bf16.mxu0 0
    %973 = vmatpush2.bf16.msra.mxu0 0
    %974 = vmatprep.subr.bf16.mxu0 0
    %975 = vmatpush2.bf16.msra.mxu0 0
    %976 = vmatprep.mubr.bf16.mxu0 0
    %977 = vmatmul.mubr.bf16.gmra.mxu0 %v459
    %v978 = vpop.f32.mrf.mxu0
    %v979 = vadd.f32 0.0, %v978
    %v980 = vpop.f32.mrf.mxu0
    %v981 = vpop.f32.mrf.mxu0
    %v982 = vpop.f32.mrf.mxu0
    %983 = vdwg.mxu0
    %v984 = vadd.f32 %v902, %v938
    %v985 = vxor.u32 %v984, 2147483648
    %v986 = vmul.f32 %v985, 1.442695
    %v987 = vpow.pop %v986
    %v988 = vadd.f32 %v987, 1.0
    %v989 = vrcp.pop %v988
    %v990 = vmul.f32 1.0, %v989
    %v992 = vrot.slane %v902, 2
    %v994 = vadd.f32 %v992, %v940
    %v995 = vxor.u32 %v994, 2147483648
    %v996 = vmul.f32 %v995, 1.442695
    %v997 = vpow.pop %v996
    %v998 = vadd.f32 %v997, 1.0
    %v999 = vrcp.pop %v998
    %v1000 = vmul.f32 1.0, %v999
    %v1001 = vadd.f32 %v979, %v209
    %v1002 = vmul.f32 %v990, %v1001
    %v1003 = vrot.slane %v902, 4
    %v1005 = vadd.f32 %v1003, %v1002
    %v1006 = vtanh.pop %v1005
    %v1007 = vsub.f32 1.0, %v1000
    %v1008 = vmul.f32 %v1007, %v1006
    %v1009 = vmul.f32 %v1000, %v458
    %v1010 = vadd.f32 %v1008, %v1009
    %v1011 = vpack.c.bf16 %v1010, %v1010
    %1012 = vmatprep.subr.bf16.mxu0 %v562
    %1013 = vmatpush1.bf16.msra.mxu0 %v561
    %1014 = vmatprep.subr.bf16.mxu0 %v559
    %1015 = vmatpush1.bf16.msra.mxu0 %v558
    %1016 = vmatprep.subr.bf16.mxu0 %v556
    %1017 = vmatpush1.bf16.msra.mxu0 %v555
    %1018 = vmatprep.subr.bf16.mxu0 %v553
    %1019 = vmatpush1.bf16.msra.mxu0 %v552
    %1020 = vmatprep.subr.bf16.mxu0 %v550
    %1021 = vmatpush1.bf16.msra.mxu0 %v549
    %1022 = vmatprep.subr.bf16.mxu0 %v547
    %1023 = vmatpush1.bf16.msra.mxu0 %v546
    %1024 = vmatprep.subr.bf16.mxu0 %v544
    %1025 = vmatpush1.bf16.msra.mxu0 %v543
    %1026 = vmatprep.subr.bf16.mxu0 %v541
    %1027 = vmatpush1.bf16.msra.mxu0 %v540
    %1028 = vmatprep.subr.bf16.mxu0 0
    %1029 = vmatpush2.bf16.msra.mxu0 0
    %1030 = vmatprep.subr.bf16.mxu0 0
    %1031 = vmatpush2.bf16.msra.mxu0 0
    %1032 = vmatprep.subr.bf16.mxu0 0
    %1033 = vmatpush2.bf16.msra.mxu0 0
    %1034 = vmatprep.subr.bf16.mxu0 0
    %1035 = vmatpush2.bf16.msra.mxu0 0
    %1036 = vmatprep.subr.bf16.mxu0 0
    %1037 = vmatpush2.bf16.msra.mxu0 0
    %1038 = vmatprep.subr.bf16.mxu0 0
    %1039 = vmatpush2.bf16.msra.mxu0 0
    %1040 = vmatprep.subr.bf16.mxu0 0
    %1041 = vmatpush2.bf16.msra.mxu0 0
    %1042 = vmatprep.subr.bf16.mxu0 0
    %1043 = vmatpush2.bf16.msra.mxu0 0
    %1044 = vmatprep.mubr.bf16.mxu0 0
    %1045 = vmatmul.mubr.bf16.gmra.mxu0 %v1011
    %v1046 = vpop.f32.mrf.mxu0
    %v1047 = vadd.f32 %v192, %v1046
    %v1048 = vpop.f32.mrf.mxu0
    %v1049 = vadd.f32 %v196, %v1048
    %v1050 = vpop.f32.mrf.mxu0
    %v1051 = vpop.f32.mrf.mxu0
    %1052 = vdwg.mxu0
    %1053 = vmatprep.subr.bf16.mxu0 0
    %1054 = vmatpush1.bf16.msra.mxu0 %v563
    %1055 = vmatprep.subr.bf16.mxu0 0
    %1056 = vmatpush1.bf16.msra.mxu0 %v560
    %1057 = vmatprep.subr.bf16.mxu0 0
    %1058 = vmatpush1.bf16.msra.mxu0 %v557
    %1059 = vmatprep.subr.bf16.mxu0 0
    %1060 = vmatpush1.bf16.msra.mxu0 %v554
    %1061 = vmatprep.subr.bf16.mxu0 0
    %1062 = vmatpush1.bf16.msra.mxu0 %v551
    %1063 = vmatprep.subr.bf16.mxu0 0
    %1064 = vmatpush1.bf16.msra.mxu0 %v548
    %1065 = vmatprep.subr.bf16.mxu0 0
    %1066 = vmatpush1.bf16.msra.mxu0 %v545
    %1067 = vmatprep.subr.bf16.mxu0 0
    %1068 = vmatpush1.bf16.msra.mxu0 %v542
    %1069 = vmatprep.subr.bf16.mxu0 0
    %1070 = vmatpush2.bf16.msra.mxu0 0
    %1071 = vmatprep.subr.bf16.mxu0 0
    %1072 = vmatpush2.bf16.msra.mxu0 0
    %1073 = vmatprep.subr.bf16.mxu0 0
    %1074 = vmatpush2.bf16.msra.mxu0 0
    %1075 = vmatprep.subr.bf16.mxu0 0
    %1076 = vmatpush2.bf16.msra.mxu0 0
    %1077 = vmatprep.subr.bf16.mxu0 0
    %1078 = vmatpush2.bf16.msra.mxu0 0
    %1079 = vmatprep.subr.bf16.mxu0 0
    %1080 = vmatpush2.bf16.msra.mxu0 0
    %1081 = vmatprep.subr.bf16.mxu0 0
    %1082 = vmatpush2.bf16.msra.mxu0 0
    %1083 = vmatprep.subr.bf16.mxu0 0
    %1084 = vmatpush2.bf16.msra.mxu0 0
    %1085 = vmatprep.mubr.bf16.mxu0 0
    %1086 = vmatmul.mubr.bf16.gmra.mxu0 %v1011
    %v1087 = vpop.f32.mrf.mxu0
    %v1088 = vadd.f32 %v200, %v1087
    %v1089 = vpop.f32.mrf.mxu0
    %v1090 = vpop.f32.mrf.mxu0
    %v1091 = vpop.f32.mrf.mxu0
    %1092 = vdwg.mxu0
    %v1093 = vpack.c.bf16 %v900, %v900
    %1094 = vmatprep.subr.bf16.mxu0 %v772
    %1095 = vmatpush1.bf16.msra.mxu0 %v771
    %1096 = vmatprep.subr.bf16.mxu0 %v769
    %1097 = vmatpush1.bf16.msra.mxu0 %v768
    %1098 = vmatprep.subr.bf16.mxu0 %v766
    %1099 = vmatpush1.bf16.msra.mxu0 %v765
    %1100 = vmatprep.subr.bf16.mxu0 %v763
    %1101 = vmatpush1.bf16.msra.mxu0 %v762
    %1102 = vmatprep.subr.bf16.mxu0 %v760
    %1103 = vmatpush1.bf16.msra.mxu0 %v759
    %1104 = vmatprep.subr.bf16.mxu0 %v757
    %1105 = vmatpush1.bf16.msra.mxu0 %v756
    %1106 = vmatprep.subr.bf16.mxu0 %v754
    %1107 = vmatpush1.bf16.msra.mxu0 %v753
    %1108 = vmatprep.subr.bf16.mxu0 %v751
    %1109 = vmatpush1.bf16.msra.mxu0 %v750
    %1110 = vmatprep.subr.bf16.mxu0 0
    %1111 = vmatpush2.bf16.msra.mxu0 0
    %1112 = vmatprep.subr.bf16.mxu0 0
    %1113 = vmatpush2.bf16.msra.mxu0 0
    %1114 = vmatprep.subr.bf16.mxu0 0
    %1115 = vmatpush2.bf16.msra.mxu0 0
    %1116 = vmatprep.subr.bf16.mxu0 0
    %1117 = vmatpush2.bf16.msra.mxu0 0
    %1118 = vmatprep.subr.bf16.mxu0 0
    %1119 = vmatpush2.bf16.msra.mxu0 0
    %1120 = vmatprep.subr.bf16.mxu0 0
    %1121 = vmatpush2.bf16.msra.mxu0 0
    %1122 = vmatprep.subr.bf16.mxu0 0
    %1123 = vmatpush2.bf16.msra.mxu0 0
    %1124 = vmatprep.subr.bf16.mxu0 0
    %1125 = vmatpush2.bf16.msra.mxu0 0
    %1126 = vmatprep.mubr.bf16.mxu0 0
    %1127 = vmatmul.mubr.bf16.gmra.mxu0 %v1093
    %v1128 = vpop.f32.mrf.mxu0
    %v1129 = vadd.f32 0.0, %v1128
    %v1130 = vpop.f32.mrf.mxu0
    %v1131 = vadd.f32 0.0, %v1130
    %v1132 = vpop.f32.mrf.mxu0
    %v1133 = vpop.f32.mrf.mxu0
    %1134 = vdwg.mxu0
    %1135 = vmatprep.subr.bf16.mxu0 0
    %1136 = vmatpush1.bf16.msra.mxu0 %v773
    %1137 = vmatprep.subr.bf16.mxu0 0
    %1138 = vmatpush1.bf16.msra.mxu0 %v770
    %1139 = vmatprep.subr.bf16.mxu0 0
    %1140 = vmatpush1.bf16.msra.mxu0 %v767
    %1141 = vmatprep.subr.bf16.mxu0 0
    %1142 = vmatpush1.bf16.msra.mxu0 %v764
    %1143 = vmatprep.subr.bf16.mxu0 0
    %1144 = vmatpush1.bf16.msra.mxu0 %v761
    %1145 = vmatprep.subr.bf16.mxu0 0
    %1146 = vmatpush1.bf16.msra.mxu0 %v758
    %1147 = vmatprep.subr.bf16.mxu0 0
    %1148 = vmatpush1.bf16.msra.mxu0 %v755
    %1149 = vmatprep.subr.bf16.mxu0 0
    %1150 = vmatpush1.bf16.msra.mxu0 %v752
    %1151 = vmatprep.subr.bf16.mxu0 0
    %1152 = vmatpush2.bf16.msra.mxu0 0
    %1153 = vmatprep.subr.bf16.mxu0 0
    %1154 = vmatpush2.bf16.msra.mxu0 0
    %1155 = vmatprep.subr.bf16.mxu0 0
    %1156 = vmatpush2.bf16.msra.mxu0 0
    %1157 = vmatprep.subr.bf16.mxu0 0
    %1158 = vmatpush2.bf16.msra.mxu0 0
    %1159 = vmatprep.subr.bf16.mxu0 0
    %1160 = vmatpush2.bf16.msra.mxu0 0
    %1161 = vmatprep.subr.bf16.mxu0 0
    %1162 = vmatpush2.bf16.msra.mxu0 0
    %1163 = vmatprep.subr.bf16.mxu0 0
    %1164 = vmatpush2.bf16.msra.mxu0 0
    %1165 = vmatprep.subr.bf16.mxu0 0
    %1166 = vmatpush2.bf16.msra.mxu0 0
    %1167 = vmatprep.mubr.bf16.mxu0 0
    %1168 = vmatmul.mubr.bf16.gmra.mxu0 %v1093
    %v1169 = vpop.f32.mrf.mxu0
    %v1170 = vadd.f32 0.0, %v1169
    %v1171 = vpop.f32.mrf.mxu0
    %v1172 = vpop.f32.mrf.mxu0
    %v1173 = vpop.f32.mrf.mxu0
    %1174 = vdwg.mxu0
    %v1175 = vadd.f32 %v1047, %v1129
    %v1176 = vxor.u32 %v1175, 2147483648
    %v1177 = vmul.f32 %v1176, 1.442695
    %v1178 = vpow.pop %v1177
    %v1179 = vadd.f32 %v1178, 1.0
    %v1180 = vrcp.pop %v1179
    %v1181 = vmul.f32 1.0, %v1180
    %v1182 = vadd.f32 %v1049, %v1131
    %v1183 = vxor.u32 %v1182, 2147483648
    %v1184 = vmul.f32 %v1183, 1.442695
    %v1185 = vpow.pop %v1184
    %v1186 = vadd.f32 %v1185, 1.0
    %v1187 = vrcp.pop %v1186
    %v1188 = vmul.f32 1.0, %v1187
    %v1189 = vadd.f32 %v1170, %v216
    %v1190 = vmul.f32 %v1181, %v1189
    %v1191 = vadd.f32 %v1088, %v1190
    %v1192 = vtanh.pop %v1191
    %v1193 = vsub.f32 1.0, %v1188
    %v1194 = vmul.f32 %v1193, %v1192
    %v1195 = vmul.f32 %v1188, %v900
    %v1196 = vadd.f32 %v1194, %v1195
    %s1197 = scalar_lea.vmem %s0, 12
    %v1198 = vld [vmem:[%s1197] sm:$0x3f]
    %1199 = vmatprep.subr.bf16.mxu0 %v325
    %1200 = vmatpush1.bf16.msra.mxu0 %v324
    %1201 = vmatprep.subr.bf16.mxu0 %v322
    %1202 = vmatpush1.bf16.msra.mxu0 %v321
    %1203 = vmatprep.subr.bf16.mxu0 %v319
    %1204 = vmatpush1.bf16.msra.mxu0 %v318
    %1205 = vmatprep.subr.bf16.mxu0 %v316
    %1206 = vmatpush1.bf16.msra.mxu0 %v315
    %1207 = vmatprep.subr.bf16.mxu0 %v313
    %1208 = vmatpush1.bf16.msra.mxu0 %v312
    %1209 = vmatprep.subr.bf16.mxu0 %v310
    %1210 = vmatpush1.bf16.msra.mxu0 %v309
    %1211 = vmatprep.subr.bf16.mxu0 %v307
    %1212 = vmatpush1.bf16.msra.mxu0 %v306
    %1213 = vmatprep.subr.bf16.mxu0 %v304
    %1214 = vmatpush1.bf16.msra.mxu0 %v303
    %1215 = vmatprep.subr.bf16.mxu0 0
    %1216 = vmatpush2.bf16.msra.mxu0 0
    %1217 = vmatprep.subr.bf16.mxu0 0
    %1218 = vmatpush2.bf16.msra.mxu0 0
    %1219 = vmatprep.subr.bf16.mxu0 0
    %1220 = vmatpush2.bf16.msra.mxu0 0
    %1221 = vmatprep.subr.bf16.mxu0 0
    %1222 = vmatpush2.bf16.msra.mxu0 0
    %1223 = vmatprep.subr.bf16.mxu0 0
    %1224 = vmatpush2.bf16.msra.mxu0 0
    %1225 = vmatprep.subr.bf16.mxu0 0
    %1226 = vmatpush2.bf16.msra.mxu0 0
    %1227 = vmatprep.subr.bf16.mxu0 0
    %1228 = vmatpush2.bf16.msra.mxu0 0
    %1229 = vmatprep.subr.bf16.mxu0 0
    %1230 = vmatpush2.bf16.msra.mxu0 0
    %1231 = vmatprep.mubr.bf16.mxu0 0
    %1232 = vmatmul.mubr.bf16.gmra.mxu0 %v1011
    %v1233 = vpop.f32.mrf.mxu0
    %v1234 = vadd.f32 0.0, %v1233
    %v1235 = vpop.f32.mrf.mxu0
    %v1236 = vadd.f32 0.0, %v1235
    %v1237 = vpop.f32.mrf.mxu0
    %v1238 = vpop.f32.mrf.mxu0
    %1239 = vdwg.mxu0
    %1240 = vmatprep.subr.bf16.mxu0 0
    %1241 = vmatpush1.bf16.msra.mxu0 %v326
    %1242 = vmatprep.subr.bf16.mxu0 0
    %1243 = vmatpush1.bf16.msra.mxu0 %v323
    %1244 = vmatprep.subr.bf16.mxu0 0
    %1245 = vmatpush1.bf16.msra.mxu0 %v320
    %1246 = vmatprep.subr.bf16.mxu0 0
    %1247 = vmatpush1.bf16.msra.mxu0 %v317
    %1248 = vmatprep.subr.bf16.mxu0 0
    %1249 = vmatpush1.bf16.msra.mxu0 %v314
    %1250 = vmatprep.subr.bf16.mxu0 0
    %1251 = vmatpush1.bf16.msra.mxu0 %v311
    %1252 = vmatprep.subr.bf16.mxu0 0
    %1253 = vmatpush1.bf16.msra.mxu0 %v308
    %1254 = vmatprep.subr.bf16.mxu0 0
    %1255 = vmatpush1.bf16.msra.mxu0 %v305
    %1256 = vmatprep.subr.bf16.mxu0 0
    %1257 = vmatpush2.bf16.msra.mxu0 0
    %1258 = vmatprep.subr.bf16.mxu0 0
    %1259 = vmatpush2.bf16.msra.mxu0 0
    %1260 = vmatprep.subr.bf16.mxu0 0
    %1261 = vmatpush2.bf16.msra.mxu0 0
    %1262 = vmatprep.subr.bf16.mxu0 0
    %1263 = vmatpush2.bf16.msra.mxu0 0
    %1264 = vmatprep.subr.bf16.mxu0 0
    %1265 = vmatpush2.bf16.msra.mxu0 0
    %1266 = vmatprep.subr.bf16.mxu0 0
    %1267 = vmatpush2.bf16.msra.mxu0 0
    %1268 = vmatprep.subr.bf16.mxu0 0
    %1269 = vmatpush2.bf16.msra.mxu0 0
    %1270 = vmatprep.subr.bf16.mxu0 0
    %1271 = vmatpush2.bf16.msra.mxu0 0
    %1272 = vmatprep.mubr.bf16.mxu0 0
    %1273 = vmatmul.mubr.bf16.gmra.mxu0 %v1011
    %v1274 = vpop.f32.mrf.mxu0
    %v1275 = vadd.f32 0.0, %v1274
    %v1276 = vpop.f32.mrf.mxu0
    %v1277 = vpop.f32.mrf.mxu0
    %v1278 = vpop.f32.mrf.mxu0
    %1279 = vdwg.mxu0
    %v1280 = vadd.f32 %v1198, %v1234
    %v1281 = vxor.u32 %v1280, 2147483648
    %v1282 = vmul.f32 %v1281, 1.442695
    %v1283 = vpow.pop %v1282
    %v1284 = vadd.f32 %v1283, 1.0
    %v1285 = vrcp.pop %v1284
    %v1286 = vmul.f32 1.0, %v1285
    %v1288 = vrot.slane %v1198, 2
    %v1290 = vadd.f32 %v1288, %v1236
    %v1291 = vxor.u32 %v1290, 2147483648
    %v1292 = vmul.f32 %v1291, 1.442695
    %v1293 = vpow.pop %v1292
    %v1294 = vadd.f32 %v1293, 1.0
    %v1295 = vrcp.pop %v1294
    %v1296 = vmul.f32 1.0, %v1295
    %v1297 = vadd.f32 %v1275, %v209
    %v1298 = vmul.f32 %v1286, %v1297
    %v1299 = vrot.slane %v1198, 4
    %v1301 = vadd.f32 %v1299, %v1298
    %v1302 = vtanh.pop %v1301
    %v1303 = vsub.f32 1.0, %v1296
    %v1304 = vmul.f32 %v1303, %v1302
    %v1305 = vmul.f32 %v1296, %v1010
    %v1306 = vadd.f32 %v1304, %v1305
    %v1307 = vpack.c.bf16 %v1306, %v1306
    %1308 = vmatprep.subr.bf16.mxu0 %v562
    %1309 = vmatpush1.bf16.msra.mxu0 %v561
    %1310 = vmatprep.subr.bf16.mxu0 %v559
    %1311 = vmatpush1.bf16.msra.mxu0 %v558
    %1312 = vmatprep.subr.bf16.mxu0 %v556
    %1313 = vmatpush1.bf16.msra.mxu0 %v555
    %1314 = vmatprep.subr.bf16.mxu0 %v553
    %1315 = vmatpush1.bf16.msra.mxu0 %v552
    %1316 = vmatprep.subr.bf16.mxu0 %v550
    %1317 = vmatpush1.bf16.msra.mxu0 %v549
    %1318 = vmatprep.subr.bf16.mxu0 %v547
    %1319 = vmatpush1.bf16.msra.mxu0 %v546
    %1320 = vmatprep.subr.bf16.mxu0 %v544
    %1321 = vmatpush1.bf16.msra.mxu0 %v543
    %1322 = vmatprep.subr.bf16.mxu0 %v541
    %1323 = vmatpush1.bf16.msra.mxu0 %v540
    %1324 = vmatprep.subr.bf16.mxu0 0
    %1325 = vmatpush2.bf16.msra.mxu0 0
    %1326 = vmatprep.subr.bf16.mxu0 0
    %1327 = vmatpush2.bf16.msra.mxu0 0
    %1328 = vmatprep.subr.bf16.mxu0 0
    %1329 = vmatpush2.bf16.msra.mxu0 0
    %1330 = vmatprep.subr.bf16.mxu0 0
    %1331 = vmatpush2.bf16.msra.mxu0 0
    %1332 = vmatprep.subr.bf16.mxu0 0
    %1333 = vmatpush2.bf16.msra.mxu0 0
    %1334 = vmatprep.subr.bf16.mxu0 0
    %1335 = vmatpush2.bf16.msra.mxu0 0
    %1336 = vmatprep.subr.bf16.mxu0 0
    %1337 = vmatpush2.bf16.msra.mxu0 0
    %1338 = vmatprep.subr.bf16.mxu0 0
    %1339 = vmatpush2.bf16.msra.mxu0 0
    %1340 = vmatprep.mubr.bf16.mxu0 0
    %1341 = vmatmul.mubr.bf16.gmra.mxu0 %v1307
    %v1342 = vpop.f32.mrf.mxu0
    %v1343 = vadd.f32 %v192, %v1342
    %v1344 = vpop.f32.mrf.mxu0
    %v1345 = vadd.f32 %v196, %v1344
    %v1346 = vpop.f32.mrf.mxu0
    %v1347 = vpop.f32.mrf.mxu0
    %1348 = vdwg.mxu0
    %1349 = vmatprep.subr.bf16.mxu0 0
    %1350 = vmatpush1.bf16.msra.mxu0 %v563
    %1351 = vmatprep.subr.bf16.mxu0 0
    %1352 = vmatpush1.bf16.msra.mxu0 %v560
    %1353 = vmatprep.subr.bf16.mxu0 0
    %1354 = vmatpush1.bf16.msra.mxu0 %v557
    %1355 = vmatprep.subr.bf16.mxu0 0
    %1356 = vmatpush1.bf16.msra.mxu0 %v554
    %1357 = vmatprep.subr.bf16.mxu0 0
    %1358 = vmatpush1.bf16.msra.mxu0 %v551
    %1359 = vmatprep.subr.bf16.mxu0 0
    %1360 = vmatpush1.bf16.msra.mxu0 %v548
    %1361 = vmatprep.subr.bf16.mxu0 0
    %1362 = vmatpush1.bf16.msra.mxu0 %v545
    %1363 = vmatprep.subr.bf16.mxu0 0
    %1364 = vmatpush1.bf16.msra.mxu0 %v542
    %1365 = vmatprep.subr.bf16.mxu0 0
    %1366 = vmatpush2.bf16.msra.mxu0 0
    %1367 = vmatprep.subr.bf16.mxu0 0
    %1368 = vmatpush2.bf16.msra.mxu0 0
    %1369 = vmatprep.subr.bf16.mxu0 0
    %1370 = vmatpush2.bf16.msra.mxu0 0
    %1371 = vmatprep.subr.bf16.mxu0 0
    %1372 = vmatpush2.bf16.msra.mxu0 0
    %1373 = vmatprep.subr.bf16.mxu0 0
    %1374 = vmatpush2.bf16.msra.mxu0 0
    %1375 = vmatprep.subr.bf16.mxu0 0
    %1376 = vmatpush2.bf16.msra.mxu0 0
    %1377 = vmatprep.subr.bf16.mxu0 0
    %1378 = vmatpush2.bf16.msra.mxu0 0
    %1379 = vmatprep.subr.bf16.mxu0 0
    %1380 = vmatpush2.bf16.msra.mxu0 0
    %1381 = vmatprep.mubr.bf16.mxu0 0
    %1382 = vmatmul.mubr.bf16.gmra.mxu0 %v1307
    %v1383 = vpop.f32.mrf.mxu0
    %v1384 = vadd.f32 %v200, %v1383
    %v1385 = vpop.f32.mrf.mxu0
    %v1386 = vpop.f32.mrf.mxu0
    %v1387 = vpop.f32.mrf.mxu0
    %1388 = vdwg.mxu0
    %v1389 = vpack.c.bf16 %v1196, %v1196
    %1390 = vmatprep.subr.bf16.mxu0 %v772
    %1391 = vmatpush1.bf16.msra.mxu0 %v771
    %1392 = vmatprep.subr.bf16.mxu0 %v769
    %1393 = vmatpush1.bf16.msra.mxu0 %v768
    %1394 = vmatprep.subr.bf16.mxu0 %v766
    %1395 = vmatpush1.bf16.msra.mxu0 %v765
    %1396 = vmatprep.subr.bf16.mxu0 %v763
    %1397 = vmatpush1.bf16.msra.mxu0 %v762
    %1398 = vmatprep.subr.bf16.mxu0 %v760
    %1399 = vmatpush1.bf16.msra.mxu0 %v759
    %1400 = vmatprep.subr.bf16.mxu0 %v757
    %1401 = vmatpush1.bf16.msra.mxu0 %v756
    %1402 = vmatprep.subr.bf16.mxu0 %v754
    %1403 = vmatpush1.bf16.msra.mxu0 %v753
    %1404 = vmatprep.subr.bf16.mxu0 %v751
    %1405 = vmatpush1.bf16.msra.mxu0 %v750
    %1406 = vmatprep.subr.bf16.mxu0 0
    %1407 = vmatpush2.bf16.msra.mxu0 0
    %1408 = vmatprep.subr.bf16.mxu0 0
    %1409 = vmatpush2.bf16.msra.mxu0 0
    %1410 = vmatprep.subr.bf16.mxu0 0
    %1411 = vmatpush2.bf16.msra.mxu0 0
    %1412 = vmatprep.subr.bf16.mxu0 0
    %1413 = vmatpush2.bf16.msra.mxu0 0
    %1414 = vmatprep.subr.bf16.mxu0 0
    %1415 = vmatpush2.bf16.msra.mxu0 0
    %1416 = vmatprep.subr.bf16.mxu0 0
    %1417 = vmatpush2.bf16.msra.mxu0 0
    %1418 = vmatprep.subr.bf16.mxu0 0
    %1419 = vmatpush2.bf16.msra.mxu0 0
    %1420 = vmatprep.subr.bf16.mxu0 0
    %1421 = vmatpush2.bf16.msra.mxu0 0
    %1422 = vmatprep.mubr.bf16.mxu0 0
    %1423 = vmatmul.mubr.bf16.gmra.mxu0 %v1389
    %v1424 = vpop.f32.mrf.mxu0
    %v1425 = vadd.f32 0.0, %v1424
    %v1426 = vpop.f32.mrf.mxu0
    %v1427 = vadd.f32 0.0, %v1426
    %v1428 = vpop.f32.mrf.mxu0
    %v1429 = vpop.f32.mrf.mxu0
    %1430 = vdwg.mxu0
    %1431 = vmatprep.subr.bf16.mxu0 0
    %1432 = vmatpush1.bf16.msra.mxu0 %v773
    %1433 = vmatprep.subr.bf16.mxu0 0
    %1434 = vmatpush1.bf16.msra.mxu0 %v770
    %1435 = vmatprep.subr.bf16.mxu0 0
    %1436 = vmatpush1.bf16.msra.mxu0 %v767
    %1437 = vmatprep.subr.bf16.mxu0 0
    %1438 = vmatpush1.bf16.msra.mxu0 %v764
    %1439 = vmatprep.subr.bf16.mxu0 0
    %1440 = vmatpush1.bf16.msra.mxu0 %v761
    %1441 = vmatprep.subr.bf16.mxu0 0
    %1442 = vmatpush1.bf16.msra.mxu0 %v758
    %1443 = vmatprep.subr.bf16.mxu0 0
    %1444 = vmatpush1.bf16.msra.mxu0 %v755
    %1445 = vmatprep.subr.bf16.mxu0 0
    %1446 = vmatpush1.bf16.msra.mxu0 %v752
    %1447 = vmatprep.subr.bf16.mxu0 0
    %1448 = vmatpush2.bf16.msra.mxu0 0
    %1449 = vmatprep.subr.bf16.mxu0 0
    %1450 = vmatpush2.bf16.msra.mxu0 0
    %1451 = vmatprep.subr.bf16.mxu0 0
    %1452 = vmatpush2.bf16.msra.mxu0 0
    %1453 = vmatprep.subr.bf16.mxu0 0
    %1454 = vmatpush2.bf16.msra.mxu0 0
    %1455 = vmatprep.subr.bf16.mxu0 0
    %1456 = vmatpush2.bf16.msra.mxu0 0
    %1457 = vmatprep.subr.bf16.mxu0 0
    %1458 = vmatpush2.bf16.msra.mxu0 0
    %1459 = vmatprep.subr.bf16.mxu0 0
    %1460 = vmatpush2.bf16.msra.mxu0 0
    %1461 = vmatprep.subr.bf16.mxu0 0
    %1462 = vmatpush2.bf16.msra.mxu0 0
    %1463 = vmatprep.mubr.bf16.mxu0 0
    %1464 = vmatmul.mubr.bf16.gmra.mxu0 %v1389
    %v1465 = vpop.f32.mrf.mxu0
    %v1466 = vadd.f32 0.0, %v1465
    %v1467 = vpop.f32.mrf.mxu0
    %v1468 = vpop.f32.mrf.mxu0
    %v1469 = vpop.f32.mrf.mxu0
    %1470 = vdwg.mxu0
    %v1471 = vadd.f32 %v1343, %v1425
    %v1472 = vxor.u32 %v1471, 2147483648
    %v1473 = vmul.f32 %v1472, 1.442695
    %v1474 = vpow.pop %v1473
    %v1475 = vadd.f32 %v1474, 1.0
    %v1476 = vrcp.pop %v1475
    %v1477 = vmul.f32 1.0, %v1476
    %v1478 = vadd.f32 %v1345, %v1427
    %v1479 = vxor.u32 %v1478, 2147483648
    %v1480 = vmul.f32 %v1479, 1.442695
    %v1481 = vpow.pop %v1480
    %v1482 = vadd.f32 %v1481, 1.0
    %v1483 = vrcp.pop %v1482
    %v1484 = vmul.f32 1.0, %v1483
    %v1485 = vadd.f32 %v1466, %v216
    %v1486 = vmul.f32 %v1477, %v1485
    %v1487 = vadd.f32 %v1384, %v1486
    %v1488 = vtanh.pop %v1487
    %v1489 = vsub.f32 1.0, %v1484
    %v1490 = vmul.f32 %v1489, %v1488
    %v1491 = vmul.f32 %v1484, %v1196
    %v1492 = vadd.f32 %v1490, %v1491
    %s1493 = scalar_lea.vmem %s0, 18
    %v1494 = vld [vmem:[%s1493] sm:$0x3f]
    %1495 = vmatprep.subr.bf16.mxu0 %v325
    %1496 = vmatpush1.bf16.msra.mxu0 %v324
    %1497 = vmatprep.subr.bf16.mxu0 %v322
    %1498 = vmatpush1.bf16.msra.mxu0 %v321
    %1499 = vmatprep.subr.bf16.mxu0 %v319
    %1500 = vmatpush1.bf16.msra.mxu0 %v318
    %1501 = vmatprep.subr.bf16.mxu0 %v316
    %1502 = vmatpush1.bf16.msra.mxu0 %v315
    %1503 = vmatprep.subr.bf16.mxu0 %v313
    %1504 = vmatpush1.bf16.msra.mxu0 %v312
    %1505 = vmatprep.subr.bf16.mxu0 %v310
    %1506 = vmatpush1.bf16.msra.mxu0 %v309
    %1507 = vmatprep.subr.bf16.mxu0 %v307
    %1508 = vmatpush1.bf16.msra.mxu0 %v306
    %1509 = vmatprep.subr.bf16.mxu0 %v304
    %1510 = vmatpush1.bf16.msra.mxu0 %v303
    %1511 = vmatprep.subr.bf16.mxu0 0
    %1512 = vmatpush2.bf16.msra.mxu0 0
    %1513 = vmatprep.subr.bf16.mxu0 0
    %1514 = vmatpush2.bf16.msra.mxu0 0
    %1515 = vmatprep.subr.bf16.mxu0 0
    %1516 = vmatpush2.bf16.msra.mxu0 0
    %1517 = vmatprep.subr.bf16.mxu0 0
    %1518 = vmatpush2.bf16.msra.mxu0 0
    %1519 = vmatprep.subr.bf16.mxu0 0
    %1520 = vmatpush2.bf16.msra.mxu0 0
    %1521 = vmatprep.subr.bf16.mxu0 0
    %1522 = vmatpush2.bf16.msra.mxu0 0
    %1523 = vmatprep.subr.bf16.mxu0 0
    %1524 = vmatpush2.bf16.msra.mxu0 0
    %1525 = vmatprep.subr.bf16.mxu0 0
    %1526 = vmatpush2.bf16.msra.mxu0 0
    %1527 = vmatprep.mubr.bf16.mxu0 0
    %1528 = vmatmul.mubr.bf16.gmra.mxu0 %v1307
    %v1529 = vpop.f32.mrf.mxu0
    %v1530 = vadd.f32 0.0, %v1529
    %v1531 = vpop.f32.mrf.mxu0
    %v1532 = vadd.f32 0.0, %v1531
    %v1533 = vpop.f32.mrf.mxu0
    %v1534 = vpop.f32.mrf.mxu0
    %1535 = vdwg.mxu0
    %1536 = vmatprep.subr.bf16.mxu0 0
    %1537 = vmatpush1.bf16.msra.mxu0 %v326
    %1538 = vmatprep.subr.bf16.mxu0 0
    %1539 = vmatpush1.bf16.msra.mxu0 %v323
    %1540 = vmatprep.subr.bf16.mxu0 0
    %1541 = vmatpush1.bf16.msra.mxu0 %v320
    %1542 = vmatprep.subr.bf16.mxu0 0
    %1543 = vmatpush1.bf16.msra.mxu0 %v317
    %1544 = vmatprep.subr.bf16.mxu0 0
    %1545 = vmatpush1.bf16.msra.mxu0 %v314
    %1546 = vmatprep.subr.bf16.mxu0 0
    %1547 = vmatpush1.bf16.msra.mxu0 %v311
    %1548 = vmatprep.subr.bf16.mxu0 0
    %1549 = vmatpush1.bf16.msra.mxu0 %v308
    %1550 = vmatprep.subr.bf16.mxu0 0
    %1551 = vmatpush1.bf16.msra.mxu0 %v305
    %1552 = vmatprep.subr.bf16.mxu0 0
    %1553 = vmatpush2.bf16.msra.mxu0 0
    %1554 = vmatprep.subr.bf16.mxu0 0
    %1555 = vmatpush2.bf16.msra.mxu0 0
    %1556 = vmatprep.subr.bf16.mxu0 0
    %1557 = vmatpush2.bf16.msra.mxu0 0
    %1558 = vmatprep.subr.bf16.mxu0 0
    %1559 = vmatpush2.bf16.msra.mxu0 0
    %1560 = vmatprep.subr.bf16.mxu0 0
    %1561 = vmatpush2.bf16.msra.mxu0 0
    %1562 = vmatprep.subr.bf16.mxu0 0
    %1563 = vmatpush2.bf16.msra.mxu0 0
    %1564 = vmatprep.subr.bf16.mxu0 0
    %1565 = vmatpush2.bf16.msra.mxu0 0
    %1566 = vmatprep.subr.bf16.mxu0 0
    %1567 = vmatpush2.bf16.msra.mxu0 0
    %1568 = vmatprep.mubr.bf16.mxu0 0
    %1569 = vmatmul.mubr.bf16.gmra.mxu0 %v1307
    %v1570 = vpop.f32.mrf.mxu0
    %v1571 = vadd.f32 0.0, %v1570
    %v1572 = vpop.f32.mrf.mxu0
    %v1573 = vpop.f32.mrf.mxu0
    %v1574 = vpop.f32.mrf.mxu0
    %1575 = vdwg.mxu0
    %v1576 = vadd.f32 %v1494, %v1530
    %v1577 = vxor.u32 %v1576, 2147483648
    %v1578 = vmul.f32 %v1577, 1.442695
    %v1579 = vpow.pop %v1578
    %v1580 = vadd.f32 %v1579, 1.0
    %v1581 = vrcp.pop %v1580
    %v1582 = vmul.f32 1.0, %v1581
    %v1584 = vrot.slane %v1494, 2
    %v1586 = vadd.f32 %v1584, %v1532
    %v1587 = vxor.u32 %v1586, 2147483648
    %v1588 = vmul.f32 %v1587, 1.442695
    %v1589 = vpow.pop %v1588
    %v1590 = vadd.f32 %v1589, 1.0
    %v1591 = vrcp.pop %v1590
    %v1592 = vmul.f32 1.0, %v1591
    %v1593 = vadd.f32 %v1571, %v209
    %v1594 = vmul.f32 %v1582, %v1593
    %v1595 = vrot.slane %v1494, 4
    %v1597 = vadd.f32 %v1595, %v1594
    %v1598 = vtanh.pop %v1597
    %v1599 = vsub.f32 1.0, %v1592
    %v1600 = vmul.f32 %v1599, %v1598
    %v1601 = vmul.f32 %v1592, %v1306
    %v1602 = vadd.f32 %v1600, %v1601
    %v1603 = vpack.c.bf16 %v1602, %v1602
    %1604 = vmatprep.subr.bf16.mxu0 %v562
    %1605 = vmatpush1.bf16.msra.mxu0 %v561
    %1606 = vmatprep.subr.bf16.mxu0 %v559
    %1607 = vmatpush1.bf16.msra.mxu0 %v558
    %1608 = vmatprep.subr.bf16.mxu0 %v556
    %1609 = vmatpush1.bf16.msra.mxu0 %v555
    %1610 = vmatprep.subr.bf16.mxu0 %v553
    %1611 = vmatpush1.bf16.msra.mxu0 %v552
    %1612 = vmatprep.subr.bf16.mxu0 %v550
    %1613 = vmatpush1.bf16.msra.mxu0 %v549
    %1614 = vmatprep.subr.bf16.mxu0 %v547
    %1615 = vmatpush1.bf16.msra.mxu0 %v546
    %1616 = vmatprep.subr.bf16.mxu0 %v544
    %1617 = vmatpush1.bf16.msra.mxu0 %v543
    %1618 = vmatprep.subr.bf16.mxu0 %v541
    %1619 = vmatpush1.bf16.msra.mxu0 %v540
    %1620 = vmatprep.subr.bf16.mxu0 0
    %1621 = vmatpush2.bf16.msra.mxu0 0
    %1622 = vmatprep.subr.bf16.mxu0 0
    %1623 = vmatpush2.bf16.msra.mxu0 0
    %1624 = vmatprep.subr.bf16.mxu0 0
    %1625 = vmatpush2.bf16.msra.mxu0 0
    %1626 = vmatprep.subr.bf16.mxu0 0
    %1627 = vmatpush2.bf16.msra.mxu0 0
    %1628 = vmatprep.subr.bf16.mxu0 0
    %1629 = vmatpush2.bf16.msra.mxu0 0
    %1630 = vmatprep.subr.bf16.mxu0 0
    %1631 = vmatpush2.bf16.msra.mxu0 0
    %1632 = vmatprep.subr.bf16.mxu0 0
    %1633 = vmatpush2.bf16.msra.mxu0 0
    %1634 = vmatprep.subr.bf16.mxu0 0
    %1635 = vmatpush2.bf16.msra.mxu0 0
    %1636 = vmatprep.mubr.bf16.mxu0 0
    %1637 = vmatmul.mubr.bf16.gmra.mxu0 %v1603
    %v1638 = vpop.f32.mrf.mxu0
    %v1639 = vadd.f32 %v192, %v1638
    %v1640 = vpop.f32.mrf.mxu0
    %v1641 = vadd.f32 %v196, %v1640
    %v1642 = vpop.f32.mrf.mxu0
    %v1643 = vpop.f32.mrf.mxu0
    %1644 = vdwg.mxu0
    %1645 = vmatprep.subr.bf16.mxu0 0
    %1646 = vmatpush1.bf16.msra.mxu0 %v563
    %1647 = vmatprep.subr.bf16.mxu0 0
    %1648 = vmatpush1.bf16.msra.mxu0 %v560
    %1649 = vmatprep.subr.bf16.mxu0 0
    %1650 = vmatpush1.bf16.msra.mxu0 %v557
    %1651 = vmatprep.subr.bf16.mxu0 0
    %1652 = vmatpush1.bf16.msra.mxu0 %v554
    %1653 = vmatprep.subr.bf16.mxu0 0
    %1654 = vmatpush1.bf16.msra.mxu0 %v551
    %1655 = vmatprep.subr.bf16.mxu0 0
    %1656 = vmatpush1.bf16.msra.mxu0 %v548
    %1657 = vmatprep.subr.bf16.mxu0 0
    %1658 = vmatpush1.bf16.msra.mxu0 %v545
    %1659 = vmatprep.subr.bf16.mxu0 0
    %1660 = vmatpush1.bf16.msra.mxu0 %v542
    %1661 = vmatprep.subr.bf16.mxu0 0
    %1662 = vmatpush2.bf16.msra.mxu0 0
    %1663 = vmatprep.subr.bf16.mxu0 0
    %1664 = vmatpush2.bf16.msra.mxu0 0
    %1665 = vmatprep.subr.bf16.mxu0 0
    %1666 = vmatpush2.bf16.msra.mxu0 0
    %1667 = vmatprep.subr.bf16.mxu0 0
    %1668 = vmatpush2.bf16.msra.mxu0 0
    %1669 = vmatprep.subr.bf16.mxu0 0
    %1670 = vmatpush2.bf16.msra.mxu0 0
    %1671 = vmatprep.subr.bf16.mxu0 0
    %1672 = vmatpush2.bf16.msra.mxu0 0
    %1673 = vmatprep.subr.bf16.mxu0 0
    %1674 = vmatpush2.bf16.msra.mxu0 0
    %1675 = vmatprep.subr.bf16.mxu0 0
    %1676 = vmatpush2.bf16.msra.mxu0 0
    %1677 = vmatprep.mubr.bf16.mxu0 0
    %1678 = vmatmul.mubr.bf16.gmra.mxu0 %v1603
    %v1679 = vpop.f32.mrf.mxu0
    %v1680 = vadd.f32 %v200, %v1679
    %v1681 = vpop.f32.mrf.mxu0
    %v1682 = vpop.f32.mrf.mxu0
    %v1683 = vpop.f32.mrf.mxu0
    %1684 = vdwg.mxu0
    %v1685 = vpack.c.bf16 %v1492, %v1492
    %1686 = vmatprep.subr.bf16.mxu0 %v772
    %1687 = vmatpush1.bf16.msra.mxu0 %v771
    %1688 = vmatprep.subr.bf16.mxu0 %v769
    %1689 = vmatpush1.bf16.msra.mxu0 %v768
    %1690 = vmatprep.subr.bf16.mxu0 %v766
    %1691 = vmatpush1.bf16.msra.mxu0 %v765
    %1692 = vmatprep.subr.bf16.mxu0 %v763
    %1693 = vmatpush1.bf16.msra.mxu0 %v762
    %1694 = vmatprep.subr.bf16.mxu0 %v760
    %1695 = vmatpush1.bf16.msra.mxu0 %v759
    %1696 = vmatprep.subr.bf16.mxu0 %v757
    %1697 = vmatpush1.bf16.msra.mxu0 %v756
    %1698 = vmatprep.subr.bf16.mxu0 %v754
    %1699 = vmatpush1.bf16.msra.mxu0 %v753
    %1700 = vmatprep.subr.bf16.mxu0 %v751
    %1701 = vmatpush1.bf16.msra.mxu0 %v750
    %1702 = vmatprep.subr.bf16.mxu0 0
    %1703 = vmatpush2.bf16.msra.mxu0 0
    %1704 = vmatprep.subr.bf16.mxu0 0
    %1705 = vmatpush2.bf16.msra.mxu0 0
    %1706 = vmatprep.subr.bf16.mxu0 0
    %1707 = vmatpush2.bf16.msra.mxu0 0
    %1708 = vmatprep.subr.bf16.mxu0 0
    %1709 = vmatpush2.bf16.msra.mxu0 0
    %1710 = vmatprep.subr.bf16.mxu0 0
    %1711 = vmatpush2.bf16.msra.mxu0 0
    %1712 = vmatprep.subr.bf16.mxu0 0
    %1713 = vmatpush2.bf16.msra.mxu0 0
    %1714 = vmatprep.subr.bf16.mxu0 0
    %1715 = vmatpush2.bf16.msra.mxu0 0
    %1716 = vmatprep.subr.bf16.mxu0 0
    %1717 = vmatpush2.bf16.msra.mxu0 0
    %1718 = vmatprep.mubr.bf16.mxu0 0
    %1719 = vmatmul.mubr.bf16.gmra.mxu0 %v1685
    %v1720 = vpop.f32.mrf.mxu0
    %v1721 = vadd.f32 0.0, %v1720
    %v1722 = vpop.f32.mrf.mxu0
    %v1723 = vadd.f32 0.0, %v1722
    %v1724 = vpop.f32.mrf.mxu0
    %v1725 = vpop.f32.mrf.mxu0
    %1726 = vdwg.mxu0
    %1727 = vmatprep.subr.bf16.mxu0 0
    %1728 = vmatpush1.bf16.msra.mxu0 %v773
    %1729 = vmatprep.subr.bf16.mxu0 0
    %1730 = vmatpush1.bf16.msra.mxu0 %v770
    %1731 = vmatprep.subr.bf16.mxu0 0
    %1732 = vmatpush1.bf16.msra.mxu0 %v767
    %1733 = vmatprep.subr.bf16.mxu0 0
    %1734 = vmatpush1.bf16.msra.mxu0 %v764
    %1735 = vmatprep.subr.bf16.mxu0 0
    %1736 = vmatpush1.bf16.msra.mxu0 %v761
    %1737 = vmatprep.subr.bf16.mxu0 0
    %1738 = vmatpush1.bf16.msra.mxu0 %v758
    %1739 = vmatprep.subr.bf16.mxu0 0
    %1740 = vmatpush1.bf16.msra.mxu0 %v755
    %1741 = vmatprep.subr.bf16.mxu0 0
    %1742 = vmatpush1.bf16.msra.mxu0 %v752
    %1743 = vmatprep.subr.bf16.mxu0 0
    %1744 = vmatpush2.bf16.msra.mxu0 0
    %1745 = vmatprep.subr.bf16.mxu0 0
    %1746 = vmatpush2.bf16.msra.mxu0 0
    %1747 = vmatprep.subr.bf16.mxu0 0
    %1748 = vmatpush2.bf16.msra.mxu0 0
    %1749 = vmatprep.subr.bf16.mxu0 0
    %1750 = vmatpush2.bf16.msra.mxu0 0
    %1751 = vmatprep.subr.bf16.mxu0 0
    %1752 = vmatpush2.bf16.msra.mxu0 0
    %1753 = vmatprep.subr.bf16.mxu0 0
    %1754 = vmatpush2.bf16.msra.mxu0 0
    %1755 = vmatprep.subr.bf16.mxu0 0
    %1756 = vmatpush2.bf16.msra.mxu0 0
    %1757 = vmatprep.subr.bf16.mxu0 0
    %1758 = vmatpush2.bf16.msra.mxu0 0
    %1759 = vmatprep.mubr.bf16.mxu0 0
    %1760 = vmatmul.mubr.bf16.gmra.mxu0 %v1685
    %v1761 = vpop.f32.mrf.mxu0
    %v1762 = vadd.f32 0.0, %v1761
    %v1763 = vpop.f32.mrf.mxu0
    %v1764 = vpop.f32.mrf.mxu0
    %v1765 = vpop.f32.mrf.mxu0
    %1766 = vdwg.mxu0
    %v1767 = vadd.f32 %v1639, %v1721
    %v1768 = vxor.u32 %v1767, 2147483648
    %v1769 = vmul.f32 %v1768, 1.442695
    %v1770 = vpow.pop %v1769
    %v1771 = vadd.f32 %v1770, 1.0
    %v1772 = vrcp.pop %v1771
    %v1773 = vmul.f32 1.0, %v1772
    %v1774 = vadd.f32 %v1641, %v1723
    %v1775 = vxor.u32 %v1774, 2147483648
    %v1776 = vmul.f32 %v1775, 1.442695
    %v1777 = vpow.pop %v1776
    %v1778 = vadd.f32 %v1777, 1.0
    %v1779 = vrcp.pop %v1778
    %v1780 = vmul.f32 1.0, %v1779
    %v1781 = vadd.f32 %v1762, %v216
    %v1782 = vmul.f32 %v1773, %v1781
    %v1783 = vadd.f32 %v1680, %v1782
    %v1784 = vtanh.pop %v1783
    %v1785 = vsub.f32 1.0, %v1780
    %v1786 = vmul.f32 %v1785, %v1784
    %v1787 = vmul.f32 %v1780, %v1492
    %v1788 = vadd.f32 %v1786, %v1787
    %s1789 = scalar_lea.vmem %s0, 24
    %v1790 = vld [vmem:[%s1789] sm:$0x3f]
    %1791 = vmatprep.subr.bf16.mxu0 %v325
    %1792 = vmatpush1.bf16.msra.mxu0 %v324
    %1793 = vmatprep.subr.bf16.mxu0 %v322
    %1794 = vmatpush1.bf16.msra.mxu0 %v321
    %1795 = vmatprep.subr.bf16.mxu0 %v319
    %1796 = vmatpush1.bf16.msra.mxu0 %v318
    %1797 = vmatprep.subr.bf16.mxu0 %v316
    %1798 = vmatpush1.bf16.msra.mxu0 %v315
    %1799 = vmatprep.subr.bf16.mxu0 %v313
    %1800 = vmatpush1.bf16.msra.mxu0 %v312
    %1801 = vmatprep.subr.bf16.mxu0 %v310
    %1802 = vmatpush1.bf16.msra.mxu0 %v309
    %1803 = vmatprep.subr.bf16.mxu0 %v307
    %1804 = vmatpush1.bf16.msra.mxu0 %v306
    %1805 = vmatprep.subr.bf16.mxu0 %v304
    %1806 = vmatpush1.bf16.msra.mxu0 %v303
    %1807 = vmatprep.subr.bf16.mxu0 0
    %1808 = vmatpush2.bf16.msra.mxu0 0
    %1809 = vmatprep.subr.bf16.mxu0 0
    %1810 = vmatpush2.bf16.msra.mxu0 0
    %1811 = vmatprep.subr.bf16.mxu0 0
    %1812 = vmatpush2.bf16.msra.mxu0 0
    %1813 = vmatprep.subr.bf16.mxu0 0
    %1814 = vmatpush2.bf16.msra.mxu0 0
    %1815 = vmatprep.subr.bf16.mxu0 0
    %1816 = vmatpush2.bf16.msra.mxu0 0
    %1817 = vmatprep.subr.bf16.mxu0 0
    %1818 = vmatpush2.bf16.msra.mxu0 0
    %1819 = vmatprep.subr.bf16.mxu0 0
    %1820 = vmatpush2.bf16.msra.mxu0 0
    %1821 = vmatprep.subr.bf16.mxu0 0
    %1822 = vmatpush2.bf16.msra.mxu0 0
    %1823 = vmatprep.mubr.bf16.mxu0 0
    %1824 = vmatmul.mubr.bf16.gmra.mxu0 %v1603
    %v1825 = vpop.f32.mrf.mxu0
    %v1826 = vadd.f32 0.0, %v1825
    %v1827 = vpop.f32.mrf.mxu0
    %v1828 = vadd.f32 0.0, %v1827
    %v1829 = vpop.f32.mrf.mxu0
    %v1830 = vpop.f32.mrf.mxu0
    %1831 = vdwg.mxu0
    %1832 = vmatprep.subr.bf16.mxu0 0
    %1833 = vmatpush1.bf16.msra.mxu0 %v326
    %1834 = vmatprep.subr.bf16.mxu0 0
    %1835 = vmatpush1.bf16.msra.mxu0 %v323
    %1836 = vmatprep.subr.bf16.mxu0 0
    %1837 = vmatpush1.bf16.msra.mxu0 %v320
    %1838 = vmatprep.subr.bf16.mxu0 0
    %1839 = vmatpush1.bf16.msra.mxu0 %v317
    %1840 = vmatprep.subr.bf16.mxu0 0
    %1841 = vmatpush1.bf16.msra.mxu0 %v314
    %1842 = vmatprep.subr.bf16.mxu0 0
    %1843 = vmatpush1.bf16.msra.mxu0 %v311
    %1844 = vmatprep.subr.bf16.mxu0 0
    %1845 = vmatpush1.bf16.msra.mxu0 %v308
    %1846 = vmatprep.subr.bf16.mxu0 0
    %1847 = vmatpush1.bf16.msra.mxu0 %v305
    %1848 = vmatprep.subr.bf16.mxu0 0
    %1849 = vmatpush2.bf16.msra.mxu0 0
    %1850 = vmatprep.subr.bf16.mxu0 0
    %1851 = vmatpush2.bf16.msra.mxu0 0
    %1852 = vmatprep.subr.bf16.mxu0 0
    %1853 = vmatpush2.bf16.msra.mxu0 0
    %1854 = vmatprep.subr.bf16.mxu0 0
    %1855 = vmatpush2.bf16.msra.mxu0 0
    %1856 = vmatprep.subr.bf16.mxu0 0
    %1857 = vmatpush2.bf16.msra.mxu0 0
    %1858 = vmatprep.subr.bf16.mxu0 0
    %1859 = vmatpush2.bf16.msra.mxu0 0
    %1860 = vmatprep.subr.bf16.mxu0 0
    %1861 = vmatpush2.bf16.msra.mxu0 0
    %1862 = vmatprep.subr.bf16.mxu0 0
    %1863 = vmatpush2.bf16.msra.mxu0 0
    %1864 = vmatprep.mubr.bf16.mxu0 0
    %1865 = vmatmul.mubr.bf16.gmra.mxu0 %v1603
    %v1866 = vpop.f32.mrf.mxu0
    %v1867 = vadd.f32 0.0, %v1866
    %v1868 = vpop.f32.mrf.mxu0
    %v1869 = vpop.f32.mrf.mxu0
    %v1870 = vpop.f32.mrf.mxu0
    %1871 = vdwg.mxu0
    %v1872 = vadd.f32 %v1790, %v1826
    %v1873 = vxor.u32 %v1872, 2147483648
    %v1874 = vmul.f32 %v1873, 1.442695
    %v1875 = vpow.pop %v1874
    %v1876 = vadd.f32 %v1875, 1.0
    %v1877 = vrcp.pop %v1876
    %v1878 = vmul.f32 1.0, %v1877
    %v1880 = vrot.slane %v1790, 2
    %v1882 = vadd.f32 %v1880, %v1828
    %v1883 = vxor.u32 %v1882, 2147483648
    %v1884 = vmul.f32 %v1883, 1.442695
    %v1885 = vpow.pop %v1884
    %v1886 = vadd.f32 %v1885, 1.0
    %v1887 = vrcp.pop %v1886
    %v1888 = vmul.f32 1.0, %v1887
    %v1889 = vadd.f32 %v1867, %v209
    %v1890 = vmul.f32 %v1878, %v1889
    %v1891 = vrot.slane %v1790, 4
    %v1893 = vadd.f32 %v1891, %v1890
    %v1894 = vtanh.pop %v1893
    %v1895 = vsub.f32 1.0, %v1888
    %v1896 = vmul.f32 %v1895, %v1894
    %v1897 = vmul.f32 %v1888, %v1602
    %v1898 = vadd.f32 %v1896, %v1897
    %v1899 = vpack.c.bf16 %v1898, %v1898
    %1900 = vmatprep.subr.bf16.mxu0 %v562
    %1901 = vmatpush1.bf16.msra.mxu0 %v561
    %1902 = vmatprep.subr.bf16.mxu0 %v559
    %1903 = vmatpush1.bf16.msra.mxu0 %v558
    %1904 = vmatprep.subr.bf16.mxu0 %v556
    %1905 = vmatpush1.bf16.msra.mxu0 %v555
    %1906 = vmatprep.subr.bf16.mxu0 %v553
    %1907 = vmatpush1.bf16.msra.mxu0 %v552
    %1908 = vmatprep.subr.bf16.mxu0 %v550
    %1909 = vmatpush1.bf16.msra.mxu0 %v549
    %1910 = vmatprep.subr.bf16.mxu0 %v547
    %1911 = vmatpush1.bf16.msra.mxu0 %v546
    %1912 = vmatprep.subr.bf16.mxu0 %v544
    %1913 = vmatpush1.bf16.msra.mxu0 %v543
    %1914 = vmatprep.subr.bf16.mxu0 %v541
    %1915 = vmatpush1.bf16.msra.mxu0 %v540
    %1916 = vmatprep.subr.bf16.mxu0 0
    %1917 = vmatpush2.bf16.msra.mxu0 0
    %1918 = vmatprep.subr.bf16.mxu0 0
    %1919 = vmatpush2.bf16.msra.mxu0 0
    %1920 = vmatprep.subr.bf16.mxu0 0
    %1921 = vmatpush2.bf16.msra.mxu0 0
    %1922 = vmatprep.subr.bf16.mxu0 0
    %1923 = vmatpush2.bf16.msra.mxu0 0
    %1924 = vmatprep.subr.bf16.mxu0 0
    %1925 = vmatpush2.bf16.msra.mxu0 0
    %1926 = vmatprep.subr.bf16.mxu0 0
    %1927 = vmatpush2.bf16.msra.mxu0 0
    %1928 = vmatprep.subr.bf16.mxu0 0
    %1929 = vmatpush2.bf16.msra.mxu0 0
    %1930 = vmatprep.subr.bf16.mxu0 0
    %1931 = vmatpush2.bf16.msra.mxu0 0
    %1932 = vmatprep.mubr.bf16.mxu0 0
    %1933 = vmatmul.mubr.bf16.gmra.mxu0 %v1899
    %v1934 = vpop.f32.mrf.mxu0
    %v1935 = vadd.f32 %v192, %v1934
    %v1936 = vpop.f32.mrf.mxu0
    %v1937 = vadd.f32 %v196, %v1936
    %v1938 = vpop.f32.mrf.mxu0
    %v1939 = vpop.f32.mrf.mxu0
    %1940 = vdwg.mxu0
    %1941 = vmatprep.subr.bf16.mxu0 0
    %1942 = vmatpush1.bf16.msra.mxu0 %v563
    %1943 = vmatprep.subr.bf16.mxu0 0
    %1944 = vmatpush1.bf16.msra.mxu0 %v560
    %1945 = vmatprep.subr.bf16.mxu0 0
    %1946 = vmatpush1.bf16.msra.mxu0 %v557
    %1947 = vmatprep.subr.bf16.mxu0 0
    %1948 = vmatpush1.bf16.msra.mxu0 %v554
    %1949 = vmatprep.subr.bf16.mxu0 0
    %1950 = vmatpush1.bf16.msra.mxu0 %v551
    %1951 = vmatprep.subr.bf16.mxu0 0
    %1952 = vmatpush1.bf16.msra.mxu0 %v548
    %1953 = vmatprep.subr.bf16.mxu0 0
    %1954 = vmatpush1.bf16.msra.mxu0 %v545
    %1955 = vmatprep.subr.bf16.mxu0 0
    %1956 = vmatpush1.bf16.msra.mxu0 %v542
    %1957 = vmatprep.subr.bf16.mxu0 0
    %1958 = vmatpush2.bf16.msra.mxu0 0
    %1959 = vmatprep.subr.bf16.mxu0 0
    %1960 = vmatpush2.bf16.msra.mxu0 0
    %1961 = vmatprep.subr.bf16.mxu0 0
    %1962 = vmatpush2.bf16.msra.mxu0 0
    %1963 = vmatprep.subr.bf16.mxu0 0
    %1964 = vmatpush2.bf16.msra.mxu0 0
    %1965 = vmatprep.subr.bf16.mxu0 0
    %1966 = vmatpush2.bf16.msra.mxu0 0
    %1967 = vmatprep.subr.bf16.mxu0 0
    %1968 = vmatpush2.bf16.msra.mxu0 0
    %1969 = vmatprep.subr.bf16.mxu0 0
    %1970 = vmatpush2.bf16.msra.mxu0 0
    %1971 = vmatprep.subr.bf16.mxu0 0
    %1972 = vmatpush2.bf16.msra.mxu0 0
    %1973 = vmatprep.mubr.bf16.mxu0 0
    %1974 = vmatmul.mubr.bf16.gmra.mxu0 %v1899
    %v1975 = vpop.f32.mrf.mxu0
    %v1976 = vadd.f32 %v200, %v1975
    %v1977 = vpop.f32.mrf.mxu0
    %v1978 = vpop.f32.mrf.mxu0
    %v1979 = vpop.f32.mrf.mxu0
    %1980 = vdwg.mxu0
    %v1981 = vpack.c.bf16 %v1788, %v1788
    %1982 = vmatprep.subr.bf16.mxu0 %v772
    %1983 = vmatpush1.bf16.msra.mxu0 %v771
    %1984 = vmatprep.subr.bf16.mxu0 %v769
    %1985 = vmatpush1.bf16.msra.mxu0 %v768
    %1986 = vmatprep.subr.bf16.mxu0 %v766
    %1987 = vmatpush1.bf16.msra.mxu0 %v765
    %1988 = vmatprep.subr.bf16.mxu0 %v763
    %1989 = vmatpush1.bf16.msra.mxu0 %v762
    %1990 = vmatprep.subr.bf16.mxu0 %v760
    %1991 = vmatpush1.bf16.msra.mxu0 %v759
    %1992 = vmatprep.subr.bf16.mxu0 %v757
    %1993 = vmatpush1.bf16.msra.mxu0 %v756
    %1994 = vmatprep.subr.bf16.mxu0 %v754
    %1995 = vmatpush1.bf16.msra.mxu0 %v753
    %1996 = vmatprep.subr.bf16.mxu0 %v751
    %1997 = vmatpush1.bf16.msra.mxu0 %v750
    %1998 = vmatprep.subr.bf16.mxu0 0
    %1999 = vmatpush2.bf16.msra.mxu0 0
    %2000 = vmatprep.subr.bf16.mxu0 0
    %2001 = vmatpush2.bf16.msra.mxu0 0
    %2002 = vmatprep.subr.bf16.mxu0 0
    %2003 = vmatpush2.bf16.msra.mxu0 0
    %2004 = vmatprep.subr.bf16.mxu0 0
    %2005 = vmatpush2.bf16.msra.mxu0 0
    %2006 = vmatprep.subr.bf16.mxu0 0
    %2007 = vmatpush2.bf16.msra.mxu0 0
    %2008 = vmatprep.subr.bf16.mxu0 0
    %2009 = vmatpush2.bf16.msra.mxu0 0
    %2010 = vmatprep.subr.bf16.mxu0 0
    %2011 = vmatpush2.bf16.msra.mxu0 0
    %2012 = vmatprep.subr.bf16.mxu0 0
    %2013 = vmatpush2.bf16.msra.mxu0 0
    %2014 = vmatprep.mubr.bf16.mxu0 0
    %2015 = vmatmul.mubr.bf16.gmra.mxu0 %v1981
    %v2016 = vpop.f32.mrf.mxu0
    %v2017 = vadd.f32 0.0, %v2016
    %v2018 = vpop.f32.mrf.mxu0
    %v2019 = vadd.f32 0.0, %v2018
    %v2020 = vpop.f32.mrf.mxu0
    %v2021 = vpop.f32.mrf.mxu0
    %2022 = vdwg.mxu0
    %2023 = vmatprep.subr.bf16.mxu0 0
    %2024 = vmatpush1.bf16.msra.mxu0 %v773
    %2025 = vmatprep.subr.bf16.mxu0 0
    %2026 = vmatpush1.bf16.msra.mxu0 %v770
    %2027 = vmatprep.subr.bf16.mxu0 0
    %2028 = vmatpush1.bf16.msra.mxu0 %v767
    %2029 = vmatprep.subr.bf16.mxu0 0
    %2030 = vmatpush1.bf16.msra.mxu0 %v764
    %2031 = vmatprep.subr.bf16.mxu0 0
    %2032 = vmatpush1.bf16.msra.mxu0 %v761
    %2033 = vmatprep.subr.bf16.mxu0 0
    %2034 = vmatpush1.bf16.msra.mxu0 %v758
    %2035 = vmatprep.subr.bf16.mxu0 0
    %2036 = vmatpush1.bf16.msra.mxu0 %v755
    %2037 = vmatprep.subr.bf16.mxu0 0
    %2038 = vmatpush1.bf16.msra.mxu0 %v752
    %2039 = vmatprep.subr.bf16.mxu0 0
    %2040 = vmatpush2.bf16.msra.mxu0 0
    %2041 = vmatprep.subr.bf16.mxu0 0
    %2042 = vmatpush2.bf16.msra.mxu0 0
    %2043 = vmatprep.subr.bf16.mxu0 0
    %2044 = vmatpush2.bf16.msra.mxu0 0
    %2045 = vmatprep.subr.bf16.mxu0 0
    %2046 = vmatpush2.bf16.msra.mxu0 0
    %2047 = vmatprep.subr.bf16.mxu0 0
    %2048 = vmatpush2.bf16.msra.mxu0 0
    %2049 = vmatprep.subr.bf16.mxu0 0
    %2050 = vmatpush2.bf16.msra.mxu0 0
    %2051 = vmatprep.subr.bf16.mxu0 0
    %2052 = vmatpush2.bf16.msra.mxu0 0
    %2053 = vmatprep.subr.bf16.mxu0 0
    %2054 = vmatpush2.bf16.msra.mxu0 0
    %2055 = vmatprep.mubr.bf16.mxu0 0
    %2056 = vmatmul.mubr.bf16.gmra.mxu0 %v1981
    %v2057 = vpop.f32.mrf.mxu0
    %v2058 = vadd.f32 0.0, %v2057
    %v2059 = vpop.f32.mrf.mxu0
    %v2060 = vpop.f32.mrf.mxu0
    %v2061 = vpop.f32.mrf.mxu0
    %2062 = vdwg.mxu0
    %v2063 = vadd.f32 %v1935, %v2017
    %v2064 = vxor.u32 %v2063, 2147483648
    %v2065 = vmul.f32 %v2064, 1.442695
    %v2066 = vpow.pop %v2065
    %v2067 = vadd.f32 %v2066, 1.0
    %v2068 = vrcp.pop %v2067
    %v2069 = vmul.f32 1.0, %v2068
    %v2070 = vadd.f32 %v1937, %v2019
    %v2071 = vxor.u32 %v2070, 2147483648
    %v2072 = vmul.f32 %v2071, 1.442695
    %v2073 = vpow.pop %v2072
    %v2074 = vadd.f32 %v2073, 1.0
    %v2075 = vrcp.pop %v2074
    %v2076 = vmul.f32 1.0, %v2075
    %v2077 = vadd.f32 %v2058, %v216
    %v2078 = vmul.f32 %v2069, %v2077
    %v2079 = vadd.f32 %v1976, %v2078
    %v2080 = vtanh.pop %v2079
    %v2081 = vsub.f32 1.0, %v2076
    %v2082 = vmul.f32 %v2081, %v2080
    %v2083 = vmul.f32 %v2076, %v1788
    %v2084 = vadd.f32 %v2082, %v2083
    %s2085 = scalar_lea.vmem %s0, 30
    %v2086 = vld [vmem:[%s2085] sm:$0x3f]
    %2087 = vmatprep.subr.bf16.mxu0 %v325
    %2088 = vmatpush1.bf16.msra.mxu0 %v324
    %2089 = vmatprep.subr.bf16.mxu0 %v322
    %2090 = vmatpush1.bf16.msra.mxu0 %v321
    %2091 = vmatprep.subr.bf16.mxu0 %v319
    %2092 = vmatpush1.bf16.msra.mxu0 %v318
    %2093 = vmatprep.subr.bf16.mxu0 %v316
    %2094 = vmatpush1.bf16.msra.mxu0 %v315
    %2095 = vmatprep.subr.bf16.mxu0 %v313
    %2096 = vmatpush1.bf16.msra.mxu0 %v312
    %2097 = vmatprep.subr.bf16.mxu0 %v310
    %2098 = vmatpush1.bf16.msra.mxu0 %v309
    %2099 = vmatprep.subr.bf16.mxu0 %v307
    %2100 = vmatpush1.bf16.msra.mxu0 %v306
    %2101 = vmatprep.subr.bf16.mxu0 %v304
    %2102 = vmatpush1.bf16.msra.mxu0 %v303
    %2103 = vmatprep.subr.bf16.mxu0 0
    %2104 = vmatpush2.bf16.msra.mxu0 0
    %2105 = vmatprep.subr.bf16.mxu0 0
    %2106 = vmatpush2.bf16.msra.mxu0 0
    %2107 = vmatprep.subr.bf16.mxu0 0
    %2108 = vmatpush2.bf16.msra.mxu0 0
    %2109 = vmatprep.subr.bf16.mxu0 0
    %2110 = vmatpush2.bf16.msra.mxu0 0
    %2111 = vmatprep.subr.bf16.mxu0 0
    %2112 = vmatpush2.bf16.msra.mxu0 0
    %2113 = vmatprep.subr.bf16.mxu0 0
    %2114 = vmatpush2.bf16.msra.mxu0 0
    %2115 = vmatprep.subr.bf16.mxu0 0
    %2116 = vmatpush2.bf16.msra.mxu0 0
    %2117 = vmatprep.subr.bf16.mxu0 0
    %2118 = vmatpush2.bf16.msra.mxu0 0
    %2119 = vmatprep.mubr.bf16.mxu0 0
    %2120 = vmatmul.mubr.bf16.gmra.mxu0 %v1899
    %v2121 = vpop.f32.mrf.mxu0
    %v2122 = vadd.f32 0.0, %v2121
    %v2123 = vpop.f32.mrf.mxu0
    %v2124 = vadd.f32 0.0, %v2123
    %v2125 = vpop.f32.mrf.mxu0
    %v2126 = vpop.f32.mrf.mxu0
    %2127 = vdwg.mxu0
    %2128 = vmatprep.subr.bf16.mxu0 0
    %2129 = vmatpush1.bf16.msra.mxu0 %v326
    %2130 = vmatprep.subr.bf16.mxu0 0
    %2131 = vmatpush1.bf16.msra.mxu0 %v323
    %2132 = vmatprep.subr.bf16.mxu0 0
    %2133 = vmatpush1.bf16.msra.mxu0 %v320
    %2134 = vmatprep.subr.bf16.mxu0 0
    %2135 = vmatpush1.bf16.msra.mxu0 %v317
    %2136 = vmatprep.subr.bf16.mxu0 0
    %2137 = vmatpush1.bf16.msra.mxu0 %v314
    %2138 = vmatprep.subr.bf16.mxu0 0
    %2139 = vmatpush1.bf16.msra.mxu0 %v311
    %2140 = vmatprep.subr.bf16.mxu0 0
    %2141 = vmatpush1.bf16.msra.mxu0 %v308
    %2142 = vmatprep.subr.bf16.mxu0 0
    %2143 = vmatpush1.bf16.msra.mxu0 %v305
    %2144 = vmatprep.subr.bf16.mxu0 0
    %2145 = vmatpush2.bf16.msra.mxu0 0
    %2146 = vmatprep.subr.bf16.mxu0 0
    %2147 = vmatpush2.bf16.msra.mxu0 0
    %2148 = vmatprep.subr.bf16.mxu0 0
    %2149 = vmatpush2.bf16.msra.mxu0 0
    %2150 = vmatprep.subr.bf16.mxu0 0
    %2151 = vmatpush2.bf16.msra.mxu0 0
    %2152 = vmatprep.subr.bf16.mxu0 0
    %2153 = vmatpush2.bf16.msra.mxu0 0
    %2154 = vmatprep.subr.bf16.mxu0 0
    %2155 = vmatpush2.bf16.msra.mxu0 0
    %2156 = vmatprep.subr.bf16.mxu0 0
    %2157 = vmatpush2.bf16.msra.mxu0 0
    %2158 = vmatprep.subr.bf16.mxu0 0
    %2159 = vmatpush2.bf16.msra.mxu0 0
    %2160 = vmatprep.mubr.bf16.mxu0 0
    %2161 = vmatmul.mubr.bf16.gmra.mxu0 %v1899
    %v2162 = vpop.f32.mrf.mxu0
    %v2163 = vadd.f32 0.0, %v2162
    %v2164 = vpop.f32.mrf.mxu0
    %v2165 = vpop.f32.mrf.mxu0
    %v2166 = vpop.f32.mrf.mxu0
    %2167 = vdwg.mxu0
    %v2168 = vadd.f32 %v2086, %v2122
    %v2169 = vxor.u32 %v2168, 2147483648
    %v2170 = vmul.f32 %v2169, 1.442695
    %v2171 = vpow.pop %v2170
    %v2172 = vadd.f32 %v2171, 1.0
    %v2173 = vrcp.pop %v2172
    %v2174 = vmul.f32 1.0, %v2173
    %v2176 = vrot.slane %v2086, 2
    %v2178 = vadd.f32 %v2176, %v2124
    %v2179 = vxor.u32 %v2178, 2147483648
    %v2180 = vmul.f32 %v2179, 1.442695
    %v2181 = vpow.pop %v2180
    %v2182 = vadd.f32 %v2181, 1.0
    %v2183 = vrcp.pop %v2182
    %v2184 = vmul.f32 1.0, %v2183
    %v2185 = vadd.f32 %v2163, %v209
    %v2186 = vmul.f32 %v2174, %v2185
    %v2187 = vrot.slane %v2086, 4
    %v2189 = vadd.f32 %v2187, %v2186
    %v2190 = vtanh.pop %v2189
    %v2191 = vsub.f32 1.0, %v2184
    %v2192 = vmul.f32 %v2191, %v2190
    %v2193 = vmul.f32 %v2184, %v1898
    %v2194 = vadd.f32 %v2192, %v2193
    %v2195 = vpack.c.bf16 %v2194, %v2194
    %2196 = vmatprep.subr.bf16.mxu0 %v562
    %2197 = vmatpush1.bf16.msra.mxu0 %v561
    %2198 = vmatprep.subr.bf16.mxu0 %v559
    %2199 = vmatpush1.bf16.msra.mxu0 %v558
    %2200 = vmatprep.subr.bf16.mxu0 %v556
    %2201 = vmatpush1.bf16.msra.mxu0 %v555
    %2202 = vmatprep.subr.bf16.mxu0 %v553
    %2203 = vmatpush1.bf16.msra.mxu0 %v552
    %2204 = vmatprep.subr.bf16.mxu0 %v550
    %2205 = vmatpush1.bf16.msra.mxu0 %v549
    %2206 = vmatprep.subr.bf16.mxu0 %v547
    %2207 = vmatpush1.bf16.msra.mxu0 %v546
    %2208 = vmatprep.subr.bf16.mxu0 %v544
    %2209 = vmatpush1.bf16.msra.mxu0 %v543
    %2210 = vmatprep.subr.bf16.mxu0 %v541
    %2211 = vmatpush1.bf16.msra.mxu0 %v540
    %2212 = vmatprep.subr.bf16.mxu0 0
    %2213 = vmatpush2.bf16.msra.mxu0 0
    %2214 = vmatprep.subr.bf16.mxu0 0
    %2215 = vmatpush2.bf16.msra.mxu0 0
    %2216 = vmatprep.subr.bf16.mxu0 0
    %2217 = vmatpush2.bf16.msra.mxu0 0
    %2218 = vmatprep.subr.bf16.mxu0 0
    %2219 = vmatpush2.bf16.msra.mxu0 0
    %2220 = vmatprep.subr.bf16.mxu0 0
    %2221 = vmatpush2.bf16.msra.mxu0 0
    %2222 = vmatprep.subr.bf16.mxu0 0
    %2223 = vmatpush2.bf16.msra.mxu0 0
    %2224 = vmatprep.subr.bf16.mxu0 0
    %2225 = vmatpush2.bf16.msra.mxu0 0
    %2226 = vmatprep.subr.bf16.mxu0 0
    %2227 = vmatpush2.bf16.msra.mxu0 0
    %2228 = vmatprep.mubr.bf16.mxu0 0
    %2229 = vmatmul.mubr.bf16.gmra.mxu0 %v2195
    %v2230 = vpop.f32.mrf.mxu0
    %v2231 = vadd.f32 %v192, %v2230
    %v2232 = vpop.f32.mrf.mxu0
    %v2233 = vadd.f32 %v196, %v2232
    %v2234 = vpop.f32.mrf.mxu0
    %v2235 = vpop.f32.mrf.mxu0
    %2236 = vdwg.mxu0
    %2237 = vmatprep.subr.bf16.mxu0 0
    %2238 = vmatpush1.bf16.msra.mxu0 %v563
    %2239 = vmatprep.subr.bf16.mxu0 0
    %2240 = vmatpush1.bf16.msra.mxu0 %v560
    %2241 = vmatprep.subr.bf16.mxu0 0
    %2242 = vmatpush1.bf16.msra.mxu0 %v557
    %2243 = vmatprep.subr.bf16.mxu0 0
    %2244 = vmatpush1.bf16.msra.mxu0 %v554
    %2245 = vmatprep.subr.bf16.mxu0 0
    %2246 = vmatpush1.bf16.msra.mxu0 %v551
    %2247 = vmatprep.subr.bf16.mxu0 0
    %2248 = vmatpush1.bf16.msra.mxu0 %v548
    %2249 = vmatprep.subr.bf16.mxu0 0
    %2250 = vmatpush1.bf16.msra.mxu0 %v545
    %2251 = vmatprep.subr.bf16.mxu0 0
    %2252 = vmatpush1.bf16.msra.mxu0 %v542
    %2253 = vmatprep.subr.bf16.mxu0 0
    %2254 = vmatpush2.bf16.msra.mxu0 0
    %2255 = vmatprep.subr.bf16.mxu0 0
    %2256 = vmatpush2.bf16.msra.mxu0 0
    %2257 = vmatprep.subr.bf16.mxu0 0
    %2258 = vmatpush2.bf16.msra.mxu0 0
    %2259 = vmatprep.subr.bf16.mxu0 0
    %2260 = vmatpush2.bf16.msra.mxu0 0
    %2261 = vmatprep.subr.bf16.mxu0 0
    %2262 = vmatpush2.bf16.msra.mxu0 0
    %2263 = vmatprep.subr.bf16.mxu0 0
    %2264 = vmatpush2.bf16.msra.mxu0 0
    %2265 = vmatprep.subr.bf16.mxu0 0
    %2266 = vmatpush2.bf16.msra.mxu0 0
    %2267 = vmatprep.subr.bf16.mxu0 0
    %2268 = vmatpush2.bf16.msra.mxu0 0
    %2269 = vmatprep.mubr.bf16.mxu0 0
    %2270 = vmatmul.mubr.bf16.gmra.mxu0 %v2195
    %v2271 = vpop.f32.mrf.mxu0
    %v2272 = vadd.f32 %v200, %v2271
    %v2273 = vpop.f32.mrf.mxu0
    %v2274 = vpop.f32.mrf.mxu0
    %v2275 = vpop.f32.mrf.mxu0
    %2276 = vdwg.mxu0
    %v2277 = vpack.c.bf16 %v2084, %v2084
    %2278 = vmatprep.subr.bf16.mxu0 %v772
    %2279 = vmatpush1.bf16.msra.mxu0 %v771
    %2280 = vmatprep.subr.bf16.mxu0 %v769
    %2281 = vmatpush1.bf16.msra.mxu0 %v768
    %2282 = vmatprep.subr.bf16.mxu0 %v766
    %2283 = vmatpush1.bf16.msra.mxu0 %v765
    %2284 = vmatprep.subr.bf16.mxu0 %v763
    %2285 = vmatpush1.bf16.msra.mxu0 %v762
    %2286 = vmatprep.subr.bf16.mxu0 %v760
    %2287 = vmatpush1.bf16.msra.mxu0 %v759
    %2288 = vmatprep.subr.bf16.mxu0 %v757
    %2289 = vmatpush1.bf16.msra.mxu0 %v756
    %2290 = vmatprep.subr.bf16.mxu0 %v754
    %2291 = vmatpush1.bf16.msra.mxu0 %v753
    %2292 = vmatprep.subr.bf16.mxu0 %v751
    %2293 = vmatpush1.bf16.msra.mxu0 %v750
    %2294 = vmatprep.subr.bf16.mxu0 0
    %2295 = vmatpush2.bf16.msra.mxu0 0
    %2296 = vmatprep.subr.bf16.mxu0 0
    %2297 = vmatpush2.bf16.msra.mxu0 0
    %2298 = vmatprep.subr.bf16.mxu0 0
    %2299 = vmatpush2.bf16.msra.mxu0 0
    %2300 = vmatprep.subr.bf16.mxu0 0
    %2301 = vmatpush2.bf16.msra.mxu0 0
    %2302 = vmatprep.subr.bf16.mxu0 0
    %2303 = vmatpush2.bf16.msra.mxu0 0
    %2304 = vmatprep.subr.bf16.mxu0 0
    %2305 = vmatpush2.bf16.msra.mxu0 0
    %2306 = vmatprep.subr.bf16.mxu0 0
    %2307 = vmatpush2.bf16.msra.mxu0 0
    %2308 = vmatprep.subr.bf16.mxu0 0
    %2309 = vmatpush2.bf16.msra.mxu0 0
    %2310 = vmatprep.mubr.bf16.mxu0 0
    %2311 = vmatmul.mubr.bf16.gmra.mxu0 %v2277
    %v2312 = vpop.f32.mrf.mxu0
    %v2313 = vadd.f32 0.0, %v2312
    %v2314 = vpop.f32.mrf.mxu0
    %v2315 = vadd.f32 0.0, %v2314
    %v2316 = vpop.f32.mrf.mxu0
    %v2317 = vpop.f32.mrf.mxu0
    %2318 = vdwg.mxu0
    %2319 = vmatprep.subr.bf16.mxu0 0
    %2320 = vmatpush1.bf16.msra.mxu0 %v773
    %2321 = vmatprep.subr.bf16.mxu0 0
    %2322 = vmatpush1.bf16.msra.mxu0 %v770
    %2323 = vmatprep.subr.bf16.mxu0 0
    %2324 = vmatpush1.bf16.msra.mxu0 %v767
    %2325 = vmatprep.subr.bf16.mxu0 0
    %2326 = vmatpush1.bf16.msra.mxu0 %v764
    %2327 = vmatprep.subr.bf16.mxu0 0
    %2328 = vmatpush1.bf16.msra.mxu0 %v761
    %2329 = vmatprep.subr.bf16.mxu0 0
    %2330 = vmatpush1.bf16.msra.mxu0 %v758
    %2331 = vmatprep.subr.bf16.mxu0 0
    %2332 = vmatpush1.bf16.msra.mxu0 %v755
    %2333 = vmatprep.subr.bf16.mxu0 0
    %2334 = vmatpush1.bf16.msra.mxu0 %v752
    %2335 = vmatprep.subr.bf16.mxu0 0
    %2336 = vmatpush2.bf16.msra.mxu0 0
    %2337 = vmatprep.subr.bf16.mxu0 0
    %2338 = vmatpush2.bf16.msra.mxu0 0
    %2339 = vmatprep.subr.bf16.mxu0 0
    %2340 = vmatpush2.bf16.msra.mxu0 0
    %2341 = vmatprep.subr.bf16.mxu0 0
    %2342 = vmatpush2.bf16.msra.mxu0 0
    %2343 = vmatprep.subr.bf16.mxu0 0
    %2344 = vmatpush2.bf16.msra.mxu0 0
    %2345 = vmatprep.subr.bf16.mxu0 0
    %2346 = vmatpush2.bf16.msra.mxu0 0
    %2347 = vmatprep.subr.bf16.mxu0 0
    %2348 = vmatpush2.bf16.msra.mxu0 0
    %2349 = vmatprep.subr.bf16.mxu0 0
    %2350 = vmatpush2.bf16.msra.mxu0 0
    %2351 = vmatprep.mubr.bf16.mxu0 0
    %2352 = vmatmul.mubr.bf16.gmra.mxu0 %v2277
    %v2353 = vpop.f32.mrf.mxu0
    %v2354 = vadd.f32 0.0, %v2353
    %v2355 = vpop.f32.mrf.mxu0
    %v2356 = vpop.f32.mrf.mxu0
    %v2357 = vpop.f32.mrf.mxu0
    %2358 = vdwg.mxu0
    %v2359 = vadd.f32 %v2231, %v2313
    %v2360 = vxor.u32 %v2359, 2147483648
    %v2361 = vmul.f32 %v2360, 1.442695
    %v2362 = vpow.pop %v2361
    %v2363 = vadd.f32 %v2362, 1.0
    %v2364 = vrcp.pop %v2363
    %v2365 = vmul.f32 1.0, %v2364
    %v2366 = vadd.f32 %v2233, %v2315
    %v2367 = vxor.u32 %v2366, 2147483648
    %v2368 = vmul.f32 %v2367, 1.442695
    %v2369 = vpow.pop %v2368
    %v2370 = vadd.f32 %v2369, 1.0
    %v2371 = vrcp.pop %v2370
    %v2372 = vmul.f32 1.0, %v2371
    %v2373 = vadd.f32 %v2354, %v216
    %v2374 = vmul.f32 %v2365, %v2373
    %v2375 = vadd.f32 %v2272, %v2374
    %v2376 = vtanh.pop %v2375
    %v2377 = vsub.f32 1.0, %v2372
    %v2378 = vmul.f32 %v2377, %v2376
    %v2379 = vmul.f32 %v2372, %v2084
    %v2380 = vadd.f32 %v2378, %v2379
    %s2381 = scalar_lea.vmem %s0, 36
    %v2382 = vld [vmem:[%s2381] sm:$0x3f]
    %2383 = vmatprep.subr.bf16.mxu0 %v325
    %2384 = vmatpush1.bf16.msra.mxu0 %v324
    %2385 = vmatprep.subr.bf16.mxu0 %v322
    %2386 = vmatpush1.bf16.msra.mxu0 %v321
    %2387 = vmatprep.subr.bf16.mxu0 %v319
    %2388 = vmatpush1.bf16.msra.mxu0 %v318
    %2389 = vmatprep.subr.bf16.mxu0 %v316
    %2390 = vmatpush1.bf16.msra.mxu0 %v315
    %2391 = vmatprep.subr.bf16.mxu0 %v313
    %2392 = vmatpush1.bf16.msra.mxu0 %v312
    %2393 = vmatprep.subr.bf16.mxu0 %v310
    %2394 = vmatpush1.bf16.msra.mxu0 %v309
    %2395 = vmatprep.subr.bf16.mxu0 %v307
    %2396 = vmatpush1.bf16.msra.mxu0 %v306
    %2397 = vmatprep.subr.bf16.mxu0 %v304
    %2398 = vmatpush1.bf16.msra.mxu0 %v303
    %2399 = vmatprep.subr.bf16.mxu0 0
    %2400 = vmatpush2.bf16.msra.mxu0 0
    %2401 = vmatprep.subr.bf16.mxu0 0
    %2402 = vmatpush2.bf16.msra.mxu0 0
    %2403 = vmatprep.subr.bf16.mxu0 0
    %2404 = vmatpush2.bf16.msra.mxu0 0
    %2405 = vmatprep.subr.bf16.mxu0 0
    %2406 = vmatpush2.bf16.msra.mxu0 0
    %2407 = vmatprep.subr.bf16.mxu0 0
    %2408 = vmatpush2.bf16.msra.mxu0 0
    %2409 = vmatprep.subr.bf16.mxu0 0
    %2410 = vmatpush2.bf16.msra.mxu0 0
    %2411 = vmatprep.subr.bf16.mxu0 0
    %2412 = vmatpush2.bf16.msra.mxu0 0
    %2413 = vmatprep.subr.bf16.mxu0 0
    %2414 = vmatpush2.bf16.msra.mxu0 0
    %2415 = vmatprep.mubr.bf16.mxu0 0
    %2416 = vmatmul.mubr.bf16.gmra.mxu0 %v2195
    %v2417 = vpop.f32.mrf.mxu0
    %v2418 = vadd.f32 0.0, %v2417
    %v2419 = vpop.f32.mrf.mxu0
    %v2420 = vadd.f32 0.0, %v2419
    %v2421 = vpop.f32.mrf.mxu0
    %v2422 = vpop.f32.mrf.mxu0
    %2423 = vdwg.mxu0
    %2424 = vmatprep.subr.bf16.mxu0 0
    %2425 = vmatpush1.bf16.msra.mxu0 %v326
    %2426 = vmatprep.subr.bf16.mxu0 0
    %2427 = vmatpush1.bf16.msra.mxu0 %v323
    %2428 = vmatprep.subr.bf16.mxu0 0
    %2429 = vmatpush1.bf16.msra.mxu0 %v320
    %2430 = vmatprep.subr.bf16.mxu0 0
    %2431 = vmatpush1.bf16.msra.mxu0 %v317
    %2432 = vmatprep.subr.bf16.mxu0 0
    %2433 = vmatpush1.bf16.msra.mxu0 %v314
    %2434 = vmatprep.subr.bf16.mxu0 0
    %2435 = vmatpush1.bf16.msra.mxu0 %v311
    %2436 = vmatprep.subr.bf16.mxu0 0
    %2437 = vmatpush1.bf16.msra.mxu0 %v308
    %2438 = vmatprep.subr.bf16.mxu0 0
    %2439 = vmatpush1.bf16.msra.mxu0 %v305
    %2440 = vmatprep.subr.bf16.mxu0 0
    %2441 = vmatpush2.bf16.msra.mxu0 0
    %2442 = vmatprep.subr.bf16.mxu0 0
    %2443 = vmatpush2.bf16.msra.mxu0 0
    %2444 = vmatprep.subr.bf16.mxu0 0
    %2445 = vmatpush2.bf16.msra.mxu0 0
    %2446 = vmatprep.subr.bf16.mxu0 0
    %2447 = vmatpush2.bf16.msra.mxu0 0
    %2448 = vmatprep.subr.bf16.mxu0 0
    %2449 = vmatpush2.bf16.msra.mxu0 0
    %2450 = vmatprep.subr.bf16.mxu0 0
    %2451 = vmatpush2.bf16.msra.mxu0 0
    %2452 = vmatprep.subr.bf16.mxu0 0
    %2453 = vmatpush2.bf16.msra.mxu0 0
    %2454 = vmatprep.subr.bf16.mxu0 0
    %2455 = vmatpush2.bf16.msra.mxu0 0
    %2456 = vmatprep.mubr.bf16.mxu0 0
    %2457 = vmatmul.mubr.bf16.gmra.mxu0 %v2195
    %v2458 = vpop.f32.mrf.mxu0
    %v2459 = vadd.f32 0.0, %v2458
    %v2460 = vpop.f32.mrf.mxu0
    %v2461 = vpop.f32.mrf.mxu0
    %v2462 = vpop.f32.mrf.mxu0
    %2463 = vdwg.mxu0
    %v2464 = vadd.f32 %v2382, %v2418
    %v2465 = vxor.u32 %v2464, 2147483648
    %v2466 = vmul.f32 %v2465, 1.442695
    %v2467 = vpow.pop %v2466
    %v2468 = vadd.f32 %v2467, 1.0
    %v2469 = vrcp.pop %v2468
    %v2470 = vmul.f32 1.0, %v2469
    %v2472 = vrot.slane %v2382, 2
    %v2474 = vadd.f32 %v2472, %v2420
    %v2475 = vxor.u32 %v2474, 2147483648
    %v2476 = vmul.f32 %v2475, 1.442695
    %v2477 = vpow.pop %v2476
    %v2478 = vadd.f32 %v2477, 1.0
    %v2479 = vrcp.pop %v2478
    %v2480 = vmul.f32 1.0, %v2479
    %v2481 = vadd.f32 %v2459, %v209
    %v2482 = vmul.f32 %v2470, %v2481
    %v2483 = vrot.slane %v2382, 4
    %v2485 = vadd.f32 %v2483, %v2482
    %v2486 = vtanh.pop %v2485
    %v2487 = vsub.f32 1.0, %v2480
    %v2488 = vmul.f32 %v2487, %v2486
    %v2489 = vmul.f32 %v2480, %v2194
    %v2490 = vadd.f32 %v2488, %v2489
    %v2491 = vpack.c.bf16 %v2490, %v2490
    %2492 = vmatprep.subr.bf16.mxu0 %v562
    %2493 = vmatpush1.bf16.msra.mxu0 %v561
    %2494 = vmatprep.subr.bf16.mxu0 %v559
    %2495 = vmatpush1.bf16.msra.mxu0 %v558
    %2496 = vmatprep.subr.bf16.mxu0 %v556
    %2497 = vmatpush1.bf16.msra.mxu0 %v555
    %2498 = vmatprep.subr.bf16.mxu0 %v553
    %2499 = vmatpush1.bf16.msra.mxu0 %v552
    %2500 = vmatprep.subr.bf16.mxu0 %v550
    %2501 = vmatpush1.bf16.msra.mxu0 %v549
    %2502 = vmatprep.subr.bf16.mxu0 %v547
    %2503 = vmatpush1.bf16.msra.mxu0 %v546
    %2504 = vmatprep.subr.bf16.mxu0 %v544
    %2505 = vmatpush1.bf16.msra.mxu0 %v543
    %2506 = vmatprep.subr.bf16.mxu0 %v541
    %2507 = vmatpush1.bf16.msra.mxu0 %v540
    %2508 = vmatprep.subr.bf16.mxu0 0
    %2509 = vmatpush2.bf16.msra.mxu0 0
    %2510 = vmatprep.subr.bf16.mxu0 0
    %2511 = vmatpush2.bf16.msra.mxu0 0
    %2512 = vmatprep.subr.bf16.mxu0 0
    %2513 = vmatpush2.bf16.msra.mxu0 0
    %2514 = vmatprep.subr.bf16.mxu0 0
    %2515 = vmatpush2.bf16.msra.mxu0 0
    %2516 = vmatprep.subr.bf16.mxu0 0
    %2517 = vmatpush2.bf16.msra.mxu0 0
    %2518 = vmatprep.subr.bf16.mxu0 0
    %2519 = vmatpush2.bf16.msra.mxu0 0
    %2520 = vmatprep.subr.bf16.mxu0 0
    %2521 = vmatpush2.bf16.msra.mxu0 0
    %2522 = vmatprep.subr.bf16.mxu0 0
    %2523 = vmatpush2.bf16.msra.mxu0 0
    %2524 = vmatprep.mubr.bf16.mxu0 0
    %2525 = vmatmul.mubr.bf16.gmra.mxu0 %v2491
    %v2526 = vpop.f32.mrf.mxu0
    %v2527 = vadd.f32 %v192, %v2526
    %v2528 = vpop.f32.mrf.mxu0
    %v2529 = vadd.f32 %v196, %v2528
    %v2530 = vpop.f32.mrf.mxu0
    %v2531 = vpop.f32.mrf.mxu0
    %2532 = vdwg.mxu0
    %2533 = vmatprep.subr.bf16.mxu0 0
    %2534 = vmatpush1.bf16.msra.mxu0 %v563
    %2535 = vmatprep.subr.bf16.mxu0 0
    %2536 = vmatpush1.bf16.msra.mxu0 %v560
    %2537 = vmatprep.subr.bf16.mxu0 0
    %2538 = vmatpush1.bf16.msra.mxu0 %v557
    %2539 = vmatprep.subr.bf16.mxu0 0
    %2540 = vmatpush1.bf16.msra.mxu0 %v554
    %2541 = vmatprep.subr.bf16.mxu0 0
    %2542 = vmatpush1.bf16.msra.mxu0 %v551
    %2543 = vmatprep.subr.bf16.mxu0 0
    %2544 = vmatpush1.bf16.msra.mxu0 %v548
    %2545 = vmatprep.subr.bf16.mxu0 0
    %2546 = vmatpush1.bf16.msra.mxu0 %v545
    %2547 = vmatprep.subr.bf16.mxu0 0
    %2548 = vmatpush1.bf16.msra.mxu0 %v542
    %2549 = vmatprep.subr.bf16.mxu0 0
    %2550 = vmatpush2.bf16.msra.mxu0 0
    %2551 = vmatprep.subr.bf16.mxu0 0
    %2552 = vmatpush2.bf16.msra.mxu0 0
    %2553 = vmatprep.subr.bf16.mxu0 0
    %2554 = vmatpush2.bf16.msra.mxu0 0
    %2555 = vmatprep.subr.bf16.mxu0 0
    %2556 = vmatpush2.bf16.msra.mxu0 0
    %2557 = vmatprep.subr.bf16.mxu0 0
    %2558 = vmatpush2.bf16.msra.mxu0 0
    %2559 = vmatprep.subr.bf16.mxu0 0
    %2560 = vmatpush2.bf16.msra.mxu0 0
    %2561 = vmatprep.subr.bf16.mxu0 0
    %2562 = vmatpush2.bf16.msra.mxu0 0
    %2563 = vmatprep.subr.bf16.mxu0 0
    %2564 = vmatpush2.bf16.msra.mxu0 0
    %2565 = vmatprep.mubr.bf16.mxu0 0
    %2566 = vmatmul.mubr.bf16.gmra.mxu0 %v2491
    %v2567 = vpop.f32.mrf.mxu0
    %v2568 = vadd.f32 %v200, %v2567
    %v2569 = vpop.f32.mrf.mxu0
    %v2570 = vpop.f32.mrf.mxu0
    %v2571 = vpop.f32.mrf.mxu0
    %2572 = vdwg.mxu0
    %v2573 = vpack.c.bf16 %v2380, %v2380
    %2574 = vmatprep.subr.bf16.mxu0 %v772
    %2575 = vmatpush1.bf16.msra.mxu0 %v771
    %2576 = vmatprep.subr.bf16.mxu0 %v769
    %2577 = vmatpush1.bf16.msra.mxu0 %v768
    %2578 = vmatprep.subr.bf16.mxu0 %v766
    %2579 = vmatpush1.bf16.msra.mxu0 %v765
    %2580 = vmatprep.subr.bf16.mxu0 %v763
    %2581 = vmatpush1.bf16.msra.mxu0 %v762
    %2582 = vmatprep.subr.bf16.mxu0 %v760
    %2583 = vmatpush1.bf16.msra.mxu0 %v759
    %2584 = vmatprep.subr.bf16.mxu0 %v757
    %2585 = vmatpush1.bf16.msra.mxu0 %v756
    %2586 = vmatprep.subr.bf16.mxu0 %v754
    %2587 = vmatpush1.bf16.msra.mxu0 %v753
    %2588 = vmatprep.subr.bf16.mxu0 %v751
    %2589 = vmatpush1.bf16.msra.mxu0 %v750
    %2590 = vmatprep.subr.bf16.mxu0 0
    %2591 = vmatpush2.bf16.msra.mxu0 0
    %2592 = vmatprep.subr.bf16.mxu0 0
    %2593 = vmatpush2.bf16.msra.mxu0 0
    %2594 = vmatprep.subr.bf16.mxu0 0
    %2595 = vmatpush2.bf16.msra.mxu0 0
    %2596 = vmatprep.subr.bf16.mxu0 0
    %2597 = vmatpush2.bf16.msra.mxu0 0
    %2598 = vmatprep.subr.bf16.mxu0 0
    %2599 = vmatpush2.bf16.msra.mxu0 0
    %2600 = vmatprep.subr.bf16.mxu0 0
    %2601 = vmatpush2.bf16.msra.mxu0 0
    %2602 = vmatprep.subr.bf16.mxu0 0
    %2603 = vmatpush2.bf16.msra.mxu0 0
    %2604 = vmatprep.subr.bf16.mxu0 0
    %2605 = vmatpush2.bf16.msra.mxu0 0
    %2606 = vmatprep.mubr.bf16.mxu0 0
    %2607 = vmatmul.mubr.bf16.gmra.mxu0 %v2573
    %v2608 = vpop.f32.mrf.mxu0
    %v2609 = vadd.f32 0.0, %v2608
    %v2610 = vpop.f32.mrf.mxu0
    %v2611 = vadd.f32 0.0, %v2610
    %v2612 = vpop.f32.mrf.mxu0
    %v2613 = vpop.f32.mrf.mxu0
    %2614 = vdwg.mxu0
    %2615 = vmatprep.subr.bf16.mxu0 0
    %2616 = vmatpush1.bf16.msra.mxu0 %v773
    %2617 = vmatprep.subr.bf16.mxu0 0
    %2618 = vmatpush1.bf16.msra.mxu0 %v770
    %2619 = vmatprep.subr.bf16.mxu0 0
    %2620 = vmatpush1.bf16.msra.mxu0 %v767
    %2621 = vmatprep.subr.bf16.mxu0 0
    %2622 = vmatpush1.bf16.msra.mxu0 %v764
    %2623 = vmatprep.subr.bf16.mxu0 0
    %2624 = vmatpush1.bf16.msra.mxu0 %v761
    %2625 = vmatprep.subr.bf16.mxu0 0
    %2626 = vmatpush1.bf16.msra.mxu0 %v758
    %2627 = vmatprep.subr.bf16.mxu0 0
    %2628 = vmatpush1.bf16.msra.mxu0 %v755
    %2629 = vmatprep.subr.bf16.mxu0 0
    %2630 = vmatpush1.bf16.msra.mxu0 %v752
    %2631 = vmatprep.subr.bf16.mxu0 0
    %2632 = vmatpush2.bf16.msra.mxu0 0
    %2633 = vmatprep.subr.bf16.mxu0 0
    %2634 = vmatpush2.bf16.msra.mxu0 0
    %2635 = vmatprep.subr.bf16.mxu0 0
    %2636 = vmatpush2.bf16.msra.mxu0 0
    %2637 = vmatprep.subr.bf16.mxu0 0
    %2638 = vmatpush2.bf16.msra.mxu0 0
    %2639 = vmatprep.subr.bf16.mxu0 0
    %2640 = vmatpush2.bf16.msra.mxu0 0
    %2641 = vmatprep.subr.bf16.mxu0 0
    %2642 = vmatpush2.bf16.msra.mxu0 0
    %2643 = vmatprep.subr.bf16.mxu0 0
    %2644 = vmatpush2.bf16.msra.mxu0 0
    %2645 = vmatprep.subr.bf16.mxu0 0
    %2646 = vmatpush2.bf16.msra.mxu0 0
    %2647 = vmatprep.mubr.bf16.mxu0 0
    %2648 = vmatmul.mubr.bf16.gmra.mxu0 %v2573
    %v2649 = vpop.f32.mrf.mxu0
    %v2650 = vadd.f32 0.0, %v2649
    %v2651 = vpop.f32.mrf.mxu0
    %v2652 = vpop.f32.mrf.mxu0
    %v2653 = vpop.f32.mrf.mxu0
    %2654 = vdwg.mxu0
    %v2655 = vadd.f32 %v2527, %v2609
    %v2656 = vxor.u32 %v2655, 2147483648
    %v2657 = vmul.f32 %v2656, 1.442695
    %v2658 = vpow.pop %v2657
    %v2659 = vadd.f32 %v2658, 1.0
    %v2660 = vrcp.pop %v2659
    %v2661 = vmul.f32 1.0, %v2660
    %v2662 = vadd.f32 %v2529, %v2611
    %v2663 = vxor.u32 %v2662, 2147483648
    %v2664 = vmul.f32 %v2663, 1.442695
    %v2665 = vpow.pop %v2664
    %v2666 = vadd.f32 %v2665, 1.0
    %v2667 = vrcp.pop %v2666
    %v2668 = vmul.f32 1.0, %v2667
    %v2669 = vadd.f32 %v2650, %v216
    %v2670 = vmul.f32 %v2661, %v2669
    %v2671 = vadd.f32 %v2568, %v2670
    %v2672 = vtanh.pop %v2671
    %v2673 = vsub.f32 1.0, %v2668
    %v2674 = vmul.f32 %v2673, %v2672
    %v2675 = vmul.f32 %v2668, %v2380
    %v2676 = vadd.f32 %v2674, %v2675
    %s2677 = scalar_lea.vmem %s0, 42
    %v2678 = vld [vmem:[%s2677] sm:$0x3f]
    %2679 = vmatprep.subr.bf16.mxu0 %v325
    %2680 = vmatpush1.bf16.msra.mxu0 %v324
    %2681 = vmatprep.subr.bf16.mxu0 %v322
    %2682 = vmatpush1.bf16.msra.mxu0 %v321
    %2683 = vmatprep.subr.bf16.mxu0 %v319
    %2684 = vmatpush1.bf16.msra.mxu0 %v318
    %2685 = vmatprep.subr.bf16.mxu0 %v316
    %2686 = vmatpush1.bf16.msra.mxu0 %v315
    %2687 = vmatprep.subr.bf16.mxu0 %v313
    %2688 = vmatpush1.bf16.msra.mxu0 %v312
    %2689 = vmatprep.subr.bf16.mxu0 %v310
    %2690 = vmatpush1.bf16.msra.mxu0 %v309
    %2691 = vmatprep.subr.bf16.mxu0 %v307
    %2692 = vmatpush1.bf16.msra.mxu0 %v306
    %2693 = vmatprep.subr.bf16.mxu0 %v304
    %2694 = vmatpush1.bf16.msra.mxu0 %v303
    %2695 = vmatprep.subr.bf16.mxu0 0
    %2696 = vmatpush2.bf16.msra.mxu0 0
    %2697 = vmatprep.subr.bf16.mxu0 0
    %2698 = vmatpush2.bf16.msra.mxu0 0
    %2699 = vmatprep.subr.bf16.mxu0 0
    %2700 = vmatpush2.bf16.msra.mxu0 0
    %2701 = vmatprep.subr.bf16.mxu0 0
    %2702 = vmatpush2.bf16.msra.mxu0 0
    %2703 = vmatprep.subr.bf16.mxu0 0
    %2704 = vmatpush2.bf16.msra.mxu0 0
    %2705 = vmatprep.subr.bf16.mxu0 0
    %2706 = vmatpush2.bf16.msra.mxu0 0
    %2707 = vmatprep.subr.bf16.mxu0 0
    %2708 = vmatpush2.bf16.msra.mxu0 0
    %2709 = vmatprep.subr.bf16.mxu0 0
    %2710 = vmatpush2.bf16.msra.mxu0 0
    %2711 = vmatprep.mubr.bf16.mxu0 0
    %2712 = vmatmul.mubr.bf16.gmra.mxu0 %v2491
    %v2713 = vpop.f32.mrf.mxu0
    %v2714 = vadd.f32 0.0, %v2713
    %v2715 = vpop.f32.mrf.mxu0
    %v2716 = vadd.f32 0.0, %v2715
    %v2717 = vpop.f32.mrf.mxu0
    %v2718 = vpop.f32.mrf.mxu0
    %2719 = vdwg.mxu0
    %2720 = vmatprep.subr.bf16.mxu0 0
    %2721 = vmatpush1.bf16.msra.mxu0 %v326
    %2722 = vmatprep.subr.bf16.mxu0 0
    %2723 = vmatpush1.bf16.msra.mxu0 %v323
    %2724 = vmatprep.subr.bf16.mxu0 0
    %2725 = vmatpush1.bf16.msra.mxu0 %v320
    %2726 = vmatprep.subr.bf16.mxu0 0
    %2727 = vmatpush1.bf16.msra.mxu0 %v317
    %2728 = vmatprep.subr.bf16.mxu0 0
    %2729 = vmatpush1.bf16.msra.mxu0 %v314
    %2730 = vmatprep.subr.bf16.mxu0 0
    %2731 = vmatpush1.bf16.msra.mxu0 %v311
    %2732 = vmatprep.subr.bf16.mxu0 0
    %2733 = vmatpush1.bf16.msra.mxu0 %v308
    %2734 = vmatprep.subr.bf16.mxu0 0
    %2735 = vmatpush1.bf16.msra.mxu0 %v305
    %2736 = vmatprep.subr.bf16.mxu0 0
    %2737 = vmatpush2.bf16.msra.mxu0 0
    %2738 = vmatprep.subr.bf16.mxu0 0
    %2739 = vmatpush2.bf16.msra.mxu0 0
    %2740 = vmatprep.subr.bf16.mxu0 0
    %2741 = vmatpush2.bf16.msra.mxu0 0
    %2742 = vmatprep.subr.bf16.mxu0 0
    %2743 = vmatpush2.bf16.msra.mxu0 0
    %2744 = vmatprep.subr.bf16.mxu0 0
    %2745 = vmatpush2.bf16.msra.mxu0 0
    %2746 = vmatprep.subr.bf16.mxu0 0
    %2747 = vmatpush2.bf16.msra.mxu0 0
    %2748 = vmatprep.subr.bf16.mxu0 0
    %2749 = vmatpush2.bf16.msra.mxu0 0
    %2750 = vmatprep.subr.bf16.mxu0 0
    %2751 = vmatpush2.bf16.msra.mxu0 0
    %2752 = vmatprep.mubr.bf16.mxu0 0
    %2753 = vmatmul.mubr.bf16.gmra.mxu0 %v2491
    %v2754 = vpop.f32.mrf.mxu0
    %v2755 = vadd.f32 0.0, %v2754
    %v2756 = vpop.f32.mrf.mxu0
    %v2757 = vpop.f32.mrf.mxu0
    %v2758 = vpop.f32.mrf.mxu0
    %2759 = vdwg.mxu0
    %v2760 = vadd.f32 %v2678, %v2714
    %v2761 = vxor.u32 %v2760, 2147483648
    %v2762 = vmul.f32 %v2761, 1.442695
    %v2763 = vpow.pop %v2762
    %v2764 = vadd.f32 %v2763, 1.0
    %v2765 = vrcp.pop %v2764
    %v2766 = vmul.f32 1.0, %v2765
    %v2768 = vrot.slane %v2678, 2
    %v2770 = vadd.f32 %v2768, %v2716
    %v2771 = vxor.u32 %v2770, 2147483648
    %v2772 = vmul.f32 %v2771, 1.442695
    %v2773 = vpow.pop %v2772
    %v2774 = vadd.f32 %v2773, 1.0
    %v2775 = vrcp.pop %v2774
    %v2776 = vmul.f32 1.0, %v2775
    %v2777 = vadd.f32 %v2755, %v209
    %v2778 = vmul.f32 %v2766, %v2777
    %v2779 = vrot.slane %v2678, 4
    %v2781 = vadd.f32 %v2779, %v2778
    %v2782 = vtanh.pop %v2781
    %v2783 = vsub.f32 1.0, %v2776
    %v2784 = vmul.f32 %v2783, %v2782
    %v2785 = vmul.f32 %v2776, %v2490
    %v2786 = vadd.f32 %v2784, %v2785
    %v2787 = vpack.c.bf16 %v2786, %v2786
    %2788 = vmatprep.subr.bf16.mxu0 %v562
    %2789 = vmatpush1.bf16.msra.mxu0 %v561
    %2790 = vmatprep.subr.bf16.mxu0 %v559
    %2791 = vmatpush1.bf16.msra.mxu0 %v558
    %2792 = vmatprep.subr.bf16.mxu0 %v556
    %2793 = vmatpush1.bf16.msra.mxu0 %v555
    %2794 = vmatprep.subr.bf16.mxu0 %v553
    %2795 = vmatpush1.bf16.msra.mxu0 %v552
    %2796 = vmatprep.subr.bf16.mxu0 %v550
    %2797 = vmatpush1.bf16.msra.mxu0 %v549
    %2798 = vmatprep.subr.bf16.mxu0 %v547
    %2799 = vmatpush1.bf16.msra.mxu0 %v546
    %2800 = vmatprep.subr.bf16.mxu0 %v544
    %2801 = vmatpush1.bf16.msra.mxu0 %v543
    %2802 = vmatprep.subr.bf16.mxu0 %v541
    %2803 = vmatpush1.bf16.msra.mxu0 %v540
    %2804 = vmatprep.subr.bf16.mxu0 0
    %2805 = vmatpush2.bf16.msra.mxu0 0
    %2806 = vmatprep.subr.bf16.mxu0 0
    %2807 = vmatpush2.bf16.msra.mxu0 0
    %2808 = vmatprep.subr.bf16.mxu0 0
    %2809 = vmatpush2.bf16.msra.mxu0 0
    %2810 = vmatprep.subr.bf16.mxu0 0
    %2811 = vmatpush2.bf16.msra.mxu0 0
    %2812 = vmatprep.subr.bf16.mxu0 0
    %2813 = vmatpush2.bf16.msra.mxu0 0
    %2814 = vmatprep.subr.bf16.mxu0 0
    %2815 = vmatpush2.bf16.msra.mxu0 0
    %2816 = vmatprep.subr.bf16.mxu0 0
    %2817 = vmatpush2.bf16.msra.mxu0 0
    %2818 = vmatprep.subr.bf16.mxu0 0
    %2819 = vmatpush2.bf16.msra.mxu0 0
    %2820 = vmatprep.mubr.bf16.mxu0 0
    %2821 = vmatmul.mubr.bf16.gmra.mxu0 %v2787
    %v2822 = vpop.f32.mrf.mxu0
    %v2823 = vadd.f32 %v192, %v2822
    %v2824 = vpop.f32.mrf.mxu0
    %v2825 = vadd.f32 %v196, %v2824
    %v2826 = vpop.f32.mrf.mxu0
    %v2827 = vpop.f32.mrf.mxu0
    %2828 = vdwg.mxu0
    %2829 = vmatprep.subr.bf16.mxu0 0
    %2830 = vmatpush1.bf16.msra.mxu0 %v563
    %2831 = vmatprep.subr.bf16.mxu0 0
    %2832 = vmatpush1.bf16.msra.mxu0 %v560
    %2833 = vmatprep.subr.bf16.mxu0 0
    %2834 = vmatpush1.bf16.msra.mxu0 %v557
    %2835 = vmatprep.subr.bf16.mxu0 0
    %2836 = vmatpush1.bf16.msra.mxu0 %v554
    %2837 = vmatprep.subr.bf16.mxu0 0
    %2838 = vmatpush1.bf16.msra.mxu0 %v551
    %2839 = vmatprep.subr.bf16.mxu0 0
    %2840 = vmatpush1.bf16.msra.mxu0 %v548
    %2841 = vmatprep.subr.bf16.mxu0 0
    %2842 = vmatpush1.bf16.msra.mxu0 %v545
    %2843 = vmatprep.subr.bf16.mxu0 0
    %2844 = vmatpush1.bf16.msra.mxu0 %v542
    %2845 = vmatprep.subr.bf16.mxu0 0
    %2846 = vmatpush2.bf16.msra.mxu0 0
    %2847 = vmatprep.subr.bf16.mxu0 0
    %2848 = vmatpush2.bf16.msra.mxu0 0
    %2849 = vmatprep.subr.bf16.mxu0 0
    %2850 = vmatpush2.bf16.msra.mxu0 0
    %2851 = vmatprep.subr.bf16.mxu0 0
    %2852 = vmatpush2.bf16.msra.mxu0 0
    %2853 = vmatprep.subr.bf16.mxu0 0
    %2854 = vmatpush2.bf16.msra.mxu0 0
    %2855 = vmatprep.subr.bf16.mxu0 0
    %2856 = vmatpush2.bf16.msra.mxu0 0
    %2857 = vmatprep.subr.bf16.mxu0 0
    %2858 = vmatpush2.bf16.msra.mxu0 0
    %2859 = vmatprep.subr.bf16.mxu0 0
    %2860 = vmatpush2.bf16.msra.mxu0 0
    %2861 = vmatprep.mubr.bf16.mxu0 0
    %2862 = vmatmul.mubr.bf16.gmra.mxu0 %v2787
    %v2863 = vpop.f32.mrf.mxu0
    %v2864 = vadd.f32 %v200, %v2863
    %v2865 = vpop.f32.mrf.mxu0
    %v2866 = vpop.f32.mrf.mxu0
    %v2867 = vpop.f32.mrf.mxu0
    %2868 = vdwg.mxu0
    %v2869 = vpack.c.bf16 %v2676, %v2676
    %2870 = vmatprep.subr.bf16.mxu0 %v772
    %2871 = vmatpush1.bf16.msra.mxu0 %v771
    %2872 = vmatprep.subr.bf16.mxu0 %v769
    %2873 = vmatpush1.bf16.msra.mxu0 %v768
    %2874 = vmatprep.subr.bf16.mxu0 %v766
    %2875 = vmatpush1.bf16.msra.mxu0 %v765
    %2876 = vmatprep.subr.bf16.mxu0 %v763
    %2877 = vmatpush1.bf16.msra.mxu0 %v762
    %2878 = vmatprep.subr.bf16.mxu0 %v760
    %2879 = vmatpush1.bf16.msra.mxu0 %v759
    %2880 = vmatprep.subr.bf16.mxu0 %v757
    %2881 = vmatpush1.bf16.msra.mxu0 %v756
    %2882 = vmatprep.subr.bf16.mxu0 %v754
    %2883 = vmatpush1.bf16.msra.mxu0 %v753
    %2884 = vmatprep.subr.bf16.mxu0 %v751
    %2885 = vmatpush1.bf16.msra.mxu0 %v750
    %2886 = vmatprep.subr.bf16.mxu0 0
    %2887 = vmatpush2.bf16.msra.mxu0 0
    %2888 = vmatprep.subr.bf16.mxu0 0
    %2889 = vmatpush2.bf16.msra.mxu0 0
    %2890 = vmatprep.subr.bf16.mxu0 0
    %2891 = vmatpush2.bf16.msra.mxu0 0
    %2892 = vmatprep.subr.bf16.mxu0 0
    %2893 = vmatpush2.bf16.msra.mxu0 0
    %2894 = vmatprep.subr.bf16.mxu0 0
    %2895 = vmatpush2.bf16.msra.mxu0 0
    %2896 = vmatprep.subr.bf16.mxu0 0
    %2897 = vmatpush2.bf16.msra.mxu0 0
    %2898 = vmatprep.subr.bf16.mxu0 0
    %2899 = vmatpush2.bf16.msra.mxu0 0
    %2900 = vmatprep.subr.bf16.mxu0 0
    %2901 = vmatpush2.bf16.msra.mxu0 0
    %2902 = vmatprep.mubr.bf16.mxu0 0
    %2903 = vmatmul.mubr.bf16.gmra.mxu0 %v2869
    %v2904 = vpop.f32.mrf.mxu0
    %v2905 = vadd.f32 0.0, %v2904
    %v2906 = vpop.f32.mrf.mxu0
    %v2907 = vadd.f32 0.0, %v2906
    %v2908 = vpop.f32.mrf.mxu0
    %v2909 = vpop.f32.mrf.mxu0
    %2910 = vdwg.mxu0
    %2911 = vmatprep.subr.bf16.mxu0 0
    %2912 = vmatpush1.bf16.msra.mxu0 %v773
    %2913 = vmatprep.subr.bf16.mxu0 0
    %2914 = vmatpush1.bf16.msra.mxu0 %v770
    %2915 = vmatprep.subr.bf16.mxu0 0
    %2916 = vmatpush1.bf16.msra.mxu0 %v767
    %2917 = vmatprep.subr.bf16.mxu0 0
    %2918 = vmatpush1.bf16.msra.mxu0 %v764
    %2919 = vmatprep.subr.bf16.mxu0 0
    %2920 = vmatpush1.bf16.msra.mxu0 %v761
    %2921 = vmatprep.subr.bf16.mxu0 0
    %2922 = vmatpush1.bf16.msra.mxu0 %v758
    %2923 = vmatprep.subr.bf16.mxu0 0
    %2924 = vmatpush1.bf16.msra.mxu0 %v755
    %2925 = vmatprep.subr.bf16.mxu0 0
    %2926 = vmatpush1.bf16.msra.mxu0 %v752
    %2927 = vmatprep.subr.bf16.mxu0 0
    %2928 = vmatpush2.bf16.msra.mxu0 0
    %2929 = vmatprep.subr.bf16.mxu0 0
    %2930 = vmatpush2.bf16.msra.mxu0 0
    %2931 = vmatprep.subr.bf16.mxu0 0
    %2932 = vmatpush2.bf16.msra.mxu0 0
    %2933 = vmatprep.subr.bf16.mxu0 0
    %2934 = vmatpush2.bf16.msra.mxu0 0
    %2935 = vmatprep.subr.bf16.mxu0 0
    %2936 = vmatpush2.bf16.msra.mxu0 0
    %2937 = vmatprep.subr.bf16.mxu0 0
    %2938 = vmatpush2.bf16.msra.mxu0 0
    %2939 = vmatprep.subr.bf16.mxu0 0
    %2940 = vmatpush2.bf16.msra.mxu0 0
    %2941 = vmatprep.subr.bf16.mxu0 0
    %2942 = vmatpush2.bf16.msra.mxu0 0
    %2943 = vmatprep.mubr.bf16.mxu0 0
    %2944 = vmatmul.mubr.bf16.gmra.mxu0 %v2869
    %v2945 = vpop.f32.mrf.mxu0
    %v2946 = vadd.f32 0.0, %v2945
    %v2947 = vpop.f32.mrf.mxu0
    %v2948 = vpop.f32.mrf.mxu0
    %v2949 = vpop.f32.mrf.mxu0
    %2950 = vdwg.mxu0
    %v2951 = vadd.f32 %v2823, %v2905
    %v2952 = vxor.u32 %v2951, 2147483648
    %v2953 = vmul.f32 %v2952, 1.442695
    %v2954 = vpow.pop %v2953
    %v2955 = vadd.f32 %v2954, 1.0
    %v2956 = vrcp.pop %v2955
    %v2957 = vmul.f32 1.0, %v2956
    %v2958 = vadd.f32 %v2825, %v2907
    %v2959 = vxor.u32 %v2958, 2147483648
    %v2960 = vmul.f32 %v2959, 1.442695
    %v2961 = vpow.pop %v2960
    %v2962 = vadd.f32 %v2961, 1.0
    %v2963 = vrcp.pop %v2962
    %v2964 = vmul.f32 1.0, %v2963
    %v2965 = vadd.f32 %v2946, %v216
    %v2966 = vmul.f32 %v2957, %v2965
    %v2967 = vadd.f32 %v2864, %v2966
    %v2968 = vtanh.pop %v2967
    %v2969 = vsub.f32 1.0, %v2964
    %v2970 = vmul.f32 %v2969, %v2968
    %v2971 = vmul.f32 %v2964, %v2676
    %v2972 = vadd.f32 %v2970, %v2971
    %2973 = vst [vmem:[#allocation11] sm:$0x3] %v2786
    %s2974 = scalar_lea.vmem [#allocation11], 2
    %2975 = vst [vmem:[%s2974] sm:$0x3] %v2972
    %v2976 = vld [vmem:[#allocation7] sm:$0xff]
    %v2977 = vld [vmem:[#allocation7 + $0x8] sm:$0xff]
    %v2978 = vld [vmem:[#allocation7 + $0x10] sm:$0xff]
    %v2979 = vld [vmem:[#allocation7 + $0x18] sm:$0xff]
    %v2980 = vld [vmem:[#allocation7 + $0x20] sm:$0xff]
    %v2981 = vld [vmem:[#allocation7 + $0x28] sm:$0xff]
    %v2982 = vld [vmem:[#allocation7 + $0x30] sm:$0xff]
    %v2983 = vld [vmem:[#allocation7 + $0x38] sm:$0xff]
    %v2984 = vld [vmem:[#allocation7 + $0x40] sm:$0xff]
    %v2985 = vld [vmem:[#allocation7 + $0x48] sm:$0xff]
    %v2986 = vld [vmem:[#allocation7 + $0x50] sm:$0xff]
    %v2987 = vld [vmem:[#allocation7 + $0x58] sm:$0xff]
    %v2988 = vld [vmem:[#allocation7 + $0x60] sm:$0xff]
    %v2989 = vld [vmem:[#allocation7 + $0x68] sm:$0xff]
    %v2990 = vld [vmem:[#allocation7 + $0x70] sm:$0xff]
    %v2991 = vld [vmem:[#allocation7 + $0x78] sm:$0xff]
    %v2992 = vld [vmem:[#allocation8] sm:$0x1]
    %v2994 = vlaneseq
    %v2995 = vshrl.u32 %v2994, 7
    %v2996 = vsub.s32 0, %v2995
    %v2997 = vrot.slane %v2992, %v2996
    %2999 = vmatprep.subr.mxu0 0.0
    %3000 = vmatpush1.msra.mxu0 %v2991
    %3001 = vmatprep.subr.mxu0 0.0
    %3002 = vmatpush1.msra.mxu0 %v2990
    %3003 = vmatprep.subr.mxu0 0.0
    %3004 = vmatpush1.msra.mxu0 %v2989
    %3005 = vmatprep.subr.mxu0 0.0
    %3006 = vmatpush1.msra.mxu0 %v2988
    %3007 = vmatprep.subr.mxu0 0.0
    %3008 = vmatpush1.msra.mxu0 %v2987
    %3009 = vmatprep.subr.mxu0 0.0
    %3010 = vmatpush1.msra.mxu0 %v2986
    %3011 = vmatprep.subr.mxu0 0.0
    %3012 = vmatpush1.msra.mxu0 %v2985
    %3013 = vmatprep.subr.mxu0 0.0
    %3014 = vmatpush1.msra.mxu0 %v2984
    %3015 = vmatprep.subr.mxu0 0.0
    %3016 = vmatpush1.msra.mxu0 %v2983
    %3017 = vmatprep.subr.mxu0 0.0
    %3018 = vmatpush1.msra.mxu0 %v2982
    %3019 = vmatprep.subr.mxu0 0.0
    %3020 = vmatpush1.msra.mxu0 %v2981
    %3021 = vmatprep.subr.mxu0 0.0
    %3022 = vmatpush1.msra.mxu0 %v2980
    %3023 = vmatprep.subr.mxu0 0.0
    %3024 = vmatpush1.msra.mxu0 %v2979
    %3025 = vmatprep.subr.mxu0 0.0
    %3026 = vmatpush1.msra.mxu0 %v2978
    %3027 = vmatprep.subr.mxu0 0.0
    %3028 = vmatpush1.msra.mxu0 %v2977
    %3029 = vmatprep.subr.mxu0 0.0
    %3030 = vmatpush1.msra.mxu0 %v2976
    %3031 = vmatprep.subr.mxu0 0.0
    %3032 = vmatpush2.msra.mxu0 0.0
    %3033 = vmatprep.subr.mxu0 0.0
    %3034 = vmatpush2.msra.mxu0 0.0
    %3035 = vmatprep.subr.mxu0 0.0
    %3036 = vmatpush2.msra.mxu0 0.0
    %3037 = vmatprep.subr.mxu0 0.0
    %3038 = vmatpush2.msra.mxu0 0.0
    %3039 = vmatprep.subr.mxu0 0.0
    %3040 = vmatpush2.msra.mxu0 0.0
    %3041 = vmatprep.subr.mxu0 0.0
    %3042 = vmatpush2.msra.mxu0 0.0
    %3043 = vmatprep.subr.mxu0 0.0
    %3044 = vmatpush2.msra.mxu0 0.0
    %3045 = vmatprep.subr.mxu0 0.0
    %3046 = vmatpush2.msra.mxu0 0.0
    %3047 = vmatprep.subr.mxu0 0.0
    %3048 = vmatpush2.msra.mxu0 0.0
    %3049 = vmatprep.subr.mxu0 0.0
    %3050 = vmatpush2.msra.mxu0 0.0
    %3051 = vmatprep.subr.mxu0 0.0
    %3052 = vmatpush2.msra.mxu0 0.0
    %3053 = vmatprep.subr.mxu0 0.0
    %3054 = vmatpush2.msra.mxu0 0.0
    %3055 = vmatprep.subr.mxu0 0.0
    %3056 = vmatpush2.msra.mxu0 0.0
    %3057 = vmatprep.subr.mxu0 0.0
    %3058 = vmatpush2.msra.mxu0 0.0
    %3059 = vmatprep.subr.mxu0 0.0
    %3060 = vmatpush2.msra.mxu0 0.0
    %3061 = vmatprep.subr.mxu0 0.0
    %3062 = vmatpush2.msra.mxu0 0.0
    %3063 = vmatprep.mubr.f32.mxu0 0.0
    %3064 = vmatmul.mubr.f32.gmra.mxu0 %v2972
    %v3065 = vpop.f32.mrf.mxu0
    %v3066 = vadd.f32 %v2997, %v3065
    %v3067 = vpop.f32.mrf.mxu0
    %3068 = vdwg.mxu0
    %3069 = vst [vmem:[#allocation10] sm:$0x3] %v3066
    // Predicated region
    $region58: #{gru_melodies_forward.1} parent=1 // pred_check
      _
    $region59: #{gru_melodies_forward.1} parent=1 // pred_check_branch
      %3071 = sbr.rel (0) target = $region61
    $region60: #{gru_melodies_forward.1} parent=1 // pred_region
      %s3073 = ssub.s32 32, 32
      %3074 = vsyncadd [#allocation4], %s3073
      %s3076 = sshll.u32 [#allocation10], 4
      %s3077 = int_to_ptr.vmem [resolvable:$true] %s3076
      %3079 = dma.vmem_to_hbm [thread:$0]  %s3077, 32, %s10, [#allocation4]
    $region61: #{gru_melodies_forward.1} parent=1 // pred_fallthru
      _
    // Predicated region
    $region62: #{gru_melodies_forward.1} parent=1 // pred_check
      _
    $region63: #{gru_melodies_forward.1} parent=1 // pred_check_branch
      %3081 = sbr.rel (0) target = $region65
    $region64: #{gru_melodies_forward.1} parent=1 // pred_region
      %s3083 = ssub.s32 64, 64
      %3084 = vsyncadd [#allocation12], %s3083
      %s3085 = sshll.u32 [#allocation11], 4
      %s3086 = int_to_ptr.vmem [resolvable:$true] %s3085
      %3091 = dma.vmem_to_hbm [thread:$0]  %s3086, 64, %s11, [#allocation12], 32, 32, 2
    $region65: #{gru_melodies_forward.1} parent=1 // pred_fallthru
      _
    // Predicated region
    $region66: #{gru_melodies_forward.1} parent=1 // pred_check
      _
    $region67: #{gru_melodies_forward.1} parent=1 // pred_check_branch
      %3093 = sbr.rel (0) target = $region69
    $region68: #{gru_melodies_forward.1} parent=1 // pred_region
      %3094 = dma.done [#allocation4], 32
    $region69: #{gru_melodies_forward.1} parent=1 // pred_fallthru
      _
    // Predicated region
    $region70: #{gru_melodies_forward.1} parent=1 // pred_check
      _
    $region71: #{gru_melodies_forward.1} parent=1 // pred_check_branch
      %3096 = sbr.rel (0) target = $region73
    $region72: #{gru_melodies_forward.1} parent=1 // pred_region
      %3097 = dma.done [#allocation12], 64
    $region73: #{gru_melodies_forward.1} parent=1 // pred_fallthru
      _
    %3098 = vsyncpa [#allocation3], 1
    %3099 = vsyncpa [#allocation6], 1
    %3100 = vsyncpa [#allocation9], 1
    %3101 = vsyncpa [#allocation4], 1
    %3102 = vsyncpa [#allocation12], 1

</llo_original>
